<compile_context>
chip_gen: v7x
topology: tpu7x:2x2x1
jax: 0.10.0
libtpu: 0.0.40
codegen_flags: <defaults>
</compile_context>

<pallas_src>
import jax
import jax.numpy as jnp
import numpy as np
from jax import lax
from jax.experimental import pallas as pl
from jax.experimental.pallas import tpu as pltpu


# ----------------------------------------------------------------------------
# Pallas kernel: 2-layer LSTM recurrence + final Linear head
# ----------------------------------------------------------------------------
def lstm_kernel(len_ref, emb_ref,
                wih0_ref, whh0_ref, b0_ref,
                w1_ref, b1_ref,
                wfc_ref, bfc_ref,
                out_ref,
                xg_ref):
    Bb, Hp = len_ref.shape
    TB, _E = emb_ref.shape
    T = TB // Bb

    # ---- hoisted loads: weights / biases / lengths read once per grid step
    whh0 = whh0_ref[...]          # (Hp, 4Hp)   bf16
    w1 = w1_ref[...]              # (2Hp, 4Hp)  bf16  ([wih1; whh1] fused)
    b1 = b1_ref[...]              # (1, 4Hp)    f32
    lens = len_ref[...]           # (Bb, Hp)    int32 (lane-dense lengths)

    # ---- hoisted layer-0 input projection as ONE flattened GEMM with b0
    # folded in: (T*Bb, E) @ (E, 4Hp) + b0 -> VMEM scratch.  This is off the
    # serial chain; the recurrence only carries the h @ W matmuls.
    xg_ref[...] = (jnp.dot(emb_ref[...], wih0_ref[...],
                           preferred_element_type=jnp.float32)
                   + b0_ref[...])

    def apply_gates(g, c):
        # PyTorch gate order: i, f, g, o — each slice is a full 128-lane block.
        i = jax.nn.sigmoid(g[:, 0 * Hp:1 * Hp])
        f = jax.nn.sigmoid(g[:, 1 * Hp:2 * Hp])
        n = jnp.tanh(g[:, 2 * Hp:3 * Hp])
        o = jax.nn.sigmoid(g[:, 3 * Hp:4 * Hp])
        c_new = f * c + i * n
        h_new = o * jnp.tanh(c_new)
        return h_new, c_new

    def step(t, carry):
        h0, c0, h1, c1 = carry
        m = t < lens                                           # (Bb, Hp) bool

        # layer 0: precomputed input projection (+bias) + recurrent matmul
        row = pl.multiple_of(t * Bb, Bb)
        g0 = (xg_ref[pl.ds(row, Bb), :]
              + jnp.dot(h0.astype(whh0.dtype), whh0,
                        preferred_element_type=jnp.float32))
        h0n, c0n = apply_gates(g0, c0)
        h0 = jnp.where(m, h0n, h0)
        c0 = jnp.where(m, c0n, c0)

        # layer 1: single fused matmul on concat([h0_t, h1_{t-1}])
        # (inter-layer dropout is identity at inference)
        x1 = jnp.concatenate([h0, h1], axis=1).astype(w1.dtype)   # one cast
        g1 = b1 + jnp.dot(x1, w1, preferred_element_type=jnp.float32)
        h1n, c1n = apply_gates(g1, c1)
        h1 = jnp.where(m, h1n, h1)
        c1 = jnp.where(m, c1n, c1)
        return h0, c0, h1, c1

    zeros = jnp.zeros((Bb, Hp), jnp.float32)
    _, _, h1, _ = lax.fori_loop(0, T, step, (zeros, zeros, zeros, zeros),
                                unroll=True)

    # fc head on the last layer's final hidden state (lane-dense padded output)
    out_ref[...] = (jnp.dot(h1.astype(wfc_ref.dtype), wfc_ref[...],
                            preferred_element_type=jnp.float32)
                    + bfc_ref[...])


# ----------------------------------------------------------------------------
# Wrapper: embedding gather + padding/layout glue in plain JAX,
# recurrence + matmuls in the Pallas kernel (hot path).
# ----------------------------------------------------------------------------
def token_level_lstm_forward(ids, lengths, params):
    emb_table = params["embedding"]          # (V+1, E), row V is the zero pad row
    B, T = ids.shape
    E = emb_table.shape[1]
    H = params["whh0"].shape[0]
    C = params["bfc"].shape[-1]
    V = emb_table.shape[0] - 1               # padding index

    Hp = ((H + 127) // 128) * 128            # lane-aligned hidden dim
    Cp = ((C + 127) // 128) * 128            # lane-dense padded class dim
    Bpad = ((max(B, 8) + 7) // 8) * 8        # sublane-aligned batch
    Bb = Bpad                                # single batch tile at toy size

    bf16 = jnp.bfloat16

    # ---- batch padding (padded rows: padding-idx tokens, length 0)
    ids_p = jnp.full((Bpad, T), V, jnp.int32).at[:B].set(ids.astype(jnp.int32))
    lens_p = jnp.zeros((Bpad,), jnp.int32).at[:B].set(lengths.astype(jnp.int32))

    # TODO(synk): nn.Dropout is identity in eval mode; no stochastic dropout.
    x = jnp.take(emb_table, ids_p, axis=0)                     # (Bpad, T, E)
    # time-major, flattened to (T*Bpad, E) so the kernel's hoisted projection
    # is a single 2D GEMM with no in-kernel reshape.
    emb_flat = jnp.transpose(x, (1, 0, 2)).reshape(T * Bpad, E).astype(bf16)

    # lane-dense lengths tile
    lens_hp = jnp.broadcast_to(lens_p[:, None], (Bpad, Hp)).astype(jnp.int32)

    # ---- pad weights: each gate block goes into its own Hp-wide slot,
    # hidden-input rows zero-padded to Hp (zero rows/cols keep padded hidden
    # lanes exactly zero -> numerics unchanged).
    def pad_gate_cols(w):
        rows = w.shape[0]
        out = jnp.zeros((rows, 4 * Hp), w.dtype)
        for k in range(4):
            out = out.at[:, k * Hp:k * Hp + H].set(w[:, k * H:(k + 1) * H])
        return out

    def pad_hidden_rows(w):
        out = jnp.zeros((Hp, w.shape[1]), w.dtype)
        return out.at[:H].set(w)

    wih0 = pad_gate_cols(params["wih0"]).astype(bf16)                    # (E, 4Hp)
    whh0 = pad_hidden_rows(pad_gate_cols(params["whh0"])).astype(bf16)   # (Hp, 4Hp)
    b0 = pad_gate_cols(params["b0"]).astype(jnp.float32)                 # (1, 4Hp)
    wih1 = pad_hidden_rows(pad_gate_cols(params["wih1"]))
    whh1 = pad_hidden_rows(pad_gate_cols(params["whh1"]))
    w1 = jnp.concatenate([wih1, whh1], axis=0).astype(bf16)              # (2Hp, 4Hp)
    b1 = pad_gate_cols(params["b1"]).astype(jnp.float32)                 # (1, 4Hp)
    wfc = jnp.zeros((Hp, Cp), bf16).at[:H, :C].set(params["wfc"].astype(bf16))
    bfc = jnp.zeros((1, Cp), jnp.float32).at[:, :C].set(params["bfc"])

    grid = (Bpad // Bb,)   # == 1 at toy size

    in_specs = [
        pl.BlockSpec((Bb, Hp), lambda b: (b, 0)),              # lengths (lane-dense)
        pl.BlockSpec((T * Bb, E), lambda b: (0, 0)),           # flattened embeddings
        pl.BlockSpec((E, 4 * Hp), lambda b: (0, 0)),           # W_ih layer 0
        pl.BlockSpec((Hp, 4 * Hp), lambda b: (0, 0)),          # W_hh layer 0
        pl.BlockSpec((1, 4 * Hp), lambda b: (0, 0)),           # bias  layer 0
        pl.BlockSpec((2 * Hp, 4 * Hp), lambda b: (0, 0)),      # fused [W_ih1; W_hh1]
        pl.BlockSpec((1, 4 * Hp), lambda b: (0, 0)),           # bias  layer 1
        pl.BlockSpec((Hp, Cp), lambda b: (0, 0)),              # fc weight (padded)
        pl.BlockSpec((1, Cp), lambda b: (0, 0)),               # fc bias (padded)
    ]

    out_p = pl.pallas_call(
        lstm_kernel,
        grid=grid,
        in_specs=in_specs,
        out_specs=pl.BlockSpec((Bb, Cp), lambda b: (b, 0)),
        out_shape=jax.ShapeDtypeStruct((Bpad, Cp), jnp.float32),
        scratch_shapes=[pltpu.VMEM((T * Bb, 4 * Hp), jnp.float32)],  # hoisted x@Wih0+b0
        compiler_params=pltpu.CompilerParams(
            dimension_semantics=("parallel",),
            vmem_limit_bytes=32 * 1024 * 1024),
    )(lens_hp, emb_flat, wih0, whh0, b0, w1, b1, wfc, bfc)

    return out_p[:B, :C]


# ----------------------------------------------------------------------------
# Pure-JAX reference (same math, same bf16 matmul operands) for sanity check.
# ----------------------------------------------------------------------------
def reference_forward(ids, lengths, params):
    bf16 = jnp.bfloat16
    emb = jnp.take(params["embedding"], ids, axis=0).astype(bf16)   # (B, T, E)
    B, T, E = emb.shape
    H = params["whh0"].shape[0]

    wih0 = params["wih0"].astype(bf16); whh0 = params["whh0"].astype(bf16)
    wih1 = params["wih1"].astype(bf16); whh1 = params["whh1"].astype(bf16)
    wfc = params["wfc"].astype(bf16)
    b0, b1, bfc = params["b0"], params["b1"], params["bfc"]

    def gates(g, c):
        i = jax.nn.sigmoid(g[:, 0 * H:1 * H])
        f = jax.nn.sigmoid(g[:, 1 * H:2 * H])
        n = jnp.tanh(g[:, 2 * H:3 * H])
        o = jax.nn.sigmoid(g[:, 3 * H:4 * H])
        cn = f * c + i * n
        return o * jnp.tanh(cn), cn

    h0 = jnp.zeros((B, H), jnp.float32); c0 = jnp.zeros((B, H), jnp.float32)
    h1 = jnp.zeros((B, H), jnp.float32); c1 = jnp.zeros((B, H), jnp.float32)
    for t in range(T):
        m = (t < lengths)[:, None]
        g0 = (jnp.dot(emb[:, t], wih0, preferred_element_type=jnp.float32)
              + jnp.dot(h0.astype(bf16), whh0, preferred_element_type=jnp.float32)
              + b0)
        h0n, c0n = gates(g0, c0)
        h0 = jnp.where(m, h0n, h0); c0 = jnp.where(m, c0n, c0)
        g1 = (jnp.dot(h0.astype(bf16), wih1, preferred_element_type=jnp.float32)
              + jnp.dot(h1.astype(bf16), whh1, preferred_element_type=jnp.float32)
              + b1)
        h1n, c1n = gates(g1, c1)
        h1 = jnp.where(m, h1n, h1); c1 = jnp.where(m, c1n, c1)
    return jnp.dot(h1.astype(bf16), wfc, preferred_element_type=jnp.float32) + bfc


# ----------------------------------------------------------------------------
# Deterministic parameter construction
# ----------------------------------------------------------------------------
def make_params(key, vocab_size, embedding_dim, hidden_dim, num_class):
    keys = jax.random.split(key, 9)
    s = 0.1
    emb = s * jax.random.normal(keys[0], (vocab_size + 1, embedding_dim), jnp.float32)
    emb = emb.at[vocab_size].set(0.0)   # padding_idx row is zero
    return {
        "embedding": emb,
        "wih0": s * jax.random.normal(keys[1], (embedding_dim, 4 * hidden_dim), jnp.float32),
        "whh0": s * jax.random.normal(keys[2], (hidden_dim, 4 * hidden_dim), jnp.float32),
        "b0":   s * jax.random.normal(keys[3], (1, 4 * hidden_dim), jnp.float32),
        "wih1": s * jax.random.normal(keys[4], (hidden_dim, 4 * hidden_dim), jnp.float32),
        "whh1": s * jax.random.normal(keys[5], (hidden_dim, 4 * hidden_dim), jnp.float32),
        "b1":   s * jax.random.normal(keys[6], (1, 4 * hidden_dim), jnp.float32),
        "wfc":  s * jax.random.normal(keys[7], (hidden_dim, num_class), jnp.float32),
        "bfc":  s * jax.random.normal(keys[8], (1, num_class), jnp.float32),
    }


if __name__ == "__main__":
    vocab_size, embedding_dim, hidden_dim, num_class = 50, 32, 32, 5
    B, T = 2, 8

    key = jax.random.PRNGKey(0)
    k_param, k_ids = jax.random.split(key)

    params = make_params(k_param, vocab_size, embedding_dim, hidden_dim, num_class)

    ids = jax.random.randint(k_ids, (B, T), 0, vocab_size, dtype=jnp.int32)
    lengths = jnp.array([T, 5], dtype=jnp.int32)
    # pad positions beyond each sequence's length with the padding index
    pad_mask = jnp.arange(T)[None, :] >= lengths[:, None]
    ids = jnp.where(pad_mask, vocab_size, ids)

    logits = token_level_lstm_forward(ids, lengths, params)
    logits = jax.block_until_ready(logits)

    ref = reference_forward(ids, lengths, params)
    np.testing.assert_allclose(np.asarray(logits), np.asarray(ref),
                               rtol=2e-3, atol=2e-3)
    assert logits.shape == (B, num_class)

    print("KERNEL_OK")
</pallas_src>

<mosaic_0001>
module attributes {stable_mosaic.version = 11 : i64} {
  func.func @lstm_kernel(%arg0: i32, %arg1: memref<8x128xi32, #tpu.memory_space<vmem>>, %arg2: memref<64x32xbf16, #tpu.memory_space<vmem>>, %arg3: memref<32x512xbf16, #tpu.memory_space<vmem>>, %arg4: memref<128x512xbf16, #tpu.memory_space<vmem>>, %arg5: memref<1x512xf32, #tpu.memory_space<vmem>>, %arg6: memref<256x512xbf16, #tpu.memory_space<vmem>>, %arg7: memref<1x512xf32, #tpu.memory_space<vmem>>, %arg8: memref<128x128xbf16, #tpu.memory_space<vmem>>, %arg9: memref<1x128xf32, #tpu.memory_space<vmem>>, %arg10: memref<8x128xf32, #tpu.memory_space<vmem>>, %arg11: memref<64x512xf32, #tpu.memory_space<vmem>>) attributes {dimension_semantics = [#tpu.dimension_semantics<parallel>], iteration_bounds = array<i64: 1>, scalar_prefetch = 0 : i64, scratch_operands = 1 : i64, tpu.core_type = #tpu.core_type<tc>, window_params = [{transform_indices = @transform_0, window_bounds = array<i64: 8, 128>}, {pipeline_mode = #tpu.pipeline_mode<synchronous>, transform_indices = @transform_1, window_bounds = array<i64: 64, 32>}, {pipeline_mode = #tpu.pipeline_mode<synchronous>, transform_indices = @transform_2, window_bounds = array<i64: 32, 512>}, {pipeline_mode = #tpu.pipeline_mode<synchronous>, transform_indices = @transform_3, window_bounds = array<i64: 128, 512>}, {pipeline_mode = #tpu.pipeline_mode<synchronous>, transform_indices = @transform_4, window_bounds = array<i64: 1, 512>}, {pipeline_mode = #tpu.pipeline_mode<synchronous>, transform_indices = @transform_5, window_bounds = array<i64: 256, 512>}, {pipeline_mode = #tpu.pipeline_mode<synchronous>, transform_indices = @transform_6, window_bounds = array<i64: 1, 512>}, {pipeline_mode = #tpu.pipeline_mode<synchronous>, transform_indices = @transform_7, window_bounds = array<i64: 128, 128>}, {pipeline_mode = #tpu.pipeline_mode<synchronous>, transform_indices = @transform_8, window_bounds = array<i64: 1, 128>}, {transform_indices = @transform_9, window_bounds = array<i64: 8, 128>}]} {
    %c0 = arith.constant 0 : index
    %c0_0 = arith.constant 0 : index
    %0 = vector.load %arg4[%c0, %c0_0] : memref<128x512xbf16, #tpu.memory_space<vmem>>, vector<128x512xbf16>
    %c0_1 = arith.constant 0 : index
    %c0_2 = arith.constant 0 : index
    %1 = vector.load %arg6[%c0_1, %c0_2] : memref<256x512xbf16, #tpu.memory_space<vmem>>, vector<256x512xbf16>
    %c0_3 = arith.constant 0 : index
    %c0_4 = arith.constant 0 : index
    %2 = vector.load %arg7[%c0_3, %c0_4] : memref<1x512xf32, #tpu.memory_space<vmem>>, vector<1x512xf32>
    %c0_5 = arith.constant 0 : index
    %c0_6 = arith.constant 0 : index
    %3 = vector.load %arg1[%c0_5, %c0_6] : memref<8x128xi32, #tpu.memory_space<vmem>>, vector<8x128xi32>
    %c0_7 = arith.constant 0 : index
    %c0_8 = arith.constant 0 : index
    %4 = vector.load %arg2[%c0_7, %c0_8] : memref<64x32xbf16, #tpu.memory_space<vmem>>, vector<64x32xbf16>
    %c0_9 = arith.constant 0 : index
    %c0_10 = arith.constant 0 : index
    %5 = vector.load %arg3[%c0_9, %c0_10] : memref<32x512xbf16, #tpu.memory_space<vmem>>, vector<32x512xbf16>
    %cst = arith.constant dense<0.000000e+00> : vector<64x512xf32>
    %6 = tpu.matmul %4, %5, %cst {dimension_numbers = #tpu.dot_dimension_numbers<[1], [0], [0], [1], [0, 0, 1, 1], [], []>} : vector<64x32xbf16>, vector<32x512xbf16>, vector<64x512xf32> -> vector<64x512xf32>
    %c0_11 = arith.constant 0 : index
    %c0_12 = arith.constant 0 : index
    %7 = vector.load %arg5[%c0_11, %c0_12] : memref<1x512xf32, #tpu.memory_space<vmem>>, vector<1x512xf32>
    %8 = vector.broadcast %7 : vector<1x512xf32> to vector<64x512xf32>
    %9 = arith.addf %6, %8 : vector<64x512xf32>
    %c0_13 = arith.constant 0 : index
    %c0_14 = arith.constant 0 : index
    %10 = vector.load %arg11[%c0_13, %c0_14] : memref<64x512xf32, #tpu.memory_space<vmem>>, vector<64x512xf32>
    tpu.vector_store %arg11[%c0_13, %c0_14], %9 {strides = array<i32>} : memref<64x512xf32, #tpu.memory_space<vmem>>, vector<64x512xf32>,
    %cst_15 = arith.constant 0.000000e+00 : f32
    %11 = vector.broadcast %cst_15 : f32 to vector<8x128xf32>
    %c0_i32 = arith.constant 0 : i32
    %12 = vector.broadcast %c0_i32 : i32 to vector<8x128xi32>
    %13 = arith.cmpi slt, %12, %3 : vector<8x128xi32>
    %c8_i32 = arith.constant 8 : i32
    %14 = arith.muli %c0_i32, %c8_i32 : i32
    %15 = tpu.assume_multiple %14, 8 : i32
    %16 = arith.index_cast %15 : i32 to index
    %c0_16 = arith.constant 0 : index
    %17 = vector.load %arg11[%16, %c0_16] : memref<64x512xf32, #tpu.memory_space<vmem>>, vector<8x512xf32>
    %18 = arith.truncf %11 : vector<8x128xf32> to vector<8x128xbf16>
    %cst_17 = arith.constant dense<0.000000e+00> : vector<8x512xf32>
    %19 = tpu.matmul %18, %0, %cst_17 {dimension_numbers = #tpu.dot_dimension_numbers<[1], [0], [0], [1], [0, 0, 1, 1], [], []>} : vector<8x128xbf16>, vector<128x512xbf16>, vector<8x512xf32> -> vector<8x512xf32>
    %20 = arith.addf %17, %19 : vector<8x512xf32>
    %21 = vector.extract_strided_slice %20 {offsets = [0, 0], sizes = [8, 128], strides = [1, 1]} : vector<8x512xf32> to vector<8x128xf32>
    %22 = arith.negf %21 : vector<8x128xf32>
    %23 = math.exp %22 : vector<8x128xf32>
    %cst_18 = arith.constant 1.000000e+00 : f32
    %24 = vector.broadcast %cst_18 : f32 to vector<8x128xf32>
    %25 = arith.addf %24, %23 : vector<8x128xf32>
    %26 = arith.divf %24, %25 : vector<8x128xf32>
    %27 = vector.extract_strided_slice %20 {offsets = [0, 128], sizes = [8, 128], strides = [1, 1]} : vector<8x512xf32> to vector<8x128xf32>
    %28 = arith.negf %27 : vector<8x128xf32>
    %29 = math.exp %28 : vector<8x128xf32>
    %cst_19 = arith.constant 1.000000e+00 : f32
    %30 = vector.broadcast %cst_19 : f32 to vector<8x128xf32>
    %31 = arith.addf %30, %29 : vector<8x128xf32>
    %32 = arith.divf %30, %31 : vector<8x128xf32>
    %33 = vector.extract_strided_slice %20 {offsets = [0, 256], sizes = [8, 128], strides = [1, 1]} : vector<8x512xf32> to vector<8x128xf32>
    %34 = math.tanh %33 : vector<8x128xf32>
    %35 = vector.extract_strided_slice %20 {offsets = [0, 384], sizes = [8, 128], strides = [1, 1]} : vector<8x512xf32> to vector<8x128xf32>
    %36 = arith.negf %35 : vector<8x128xf32>
    %37 = math.exp %36 : vector<8x128xf32>
    %cst_20 = arith.constant 1.000000e+00 : f32
    %38 = vector.broadcast %cst_20 : f32 to vector<8x128xf32>
    %39 = arith.addf %38, %37 : vector<8x128xf32>
    %40 = arith.divf %38, %39 : vector<8x128xf32>
    %41 = arith.mulf %32, %11 : vector<8x128xf32>
    %42 = arith.mulf %26, %34 : vector<8x128xf32>
    %43 = arith.addf %41, %42 : vector<8x128xf32>
    %44 = math.tanh %43 : vector<8x128xf32>
    %45 = arith.mulf %40, %44 : vector<8x128xf32>
    %46 = arith.select %13, %45, %11 : vector<8x128xi1>, vector<8x128xf32>
    %47 = arith.select %13, %43, %11 : vector<8x128xi1>, vector<8x128xf32>
    %48 = tpu.concatenate %46, %11 in 1 : vector<8x128xf32>, vector<8x128xf32> -> vector<8x256xf32>
    %49 = arith.truncf %48 : vector<8x256xf32> to vector<8x256xbf16>
    %cst_21 = arith.constant dense<0.000000e+00> : vector<8x512xf32>
    %50 = tpu.matmul %49, %1, %cst_21 {dimension_numbers = #tpu.dot_dimension_numbers<[1], [0], [0], [1], [0, 0, 1, 1], [], []>} : vector<8x256xbf16>, vector<256x512xbf16>, vector<8x512xf32> -> vector<8x512xf32>
    %51 = vector.broadcast %2 : vector<1x512xf32> to vector<8x512xf32>
    %52 = arith.addf %51, %50 : vector<8x512xf32>
    %53 = vector.extract_strided_slice %52 {offsets = [0, 0], sizes = [8, 128], strides = [1, 1]} : vector<8x512xf32> to vector<8x128xf32>
    %54 = arith.negf %53 : vector<8x128xf32>
    %55 = math.exp %54 : vector<8x128xf32>
    %cst_22 = arith.constant 1.000000e+00 : f32
    %56 = vector.broadcast %cst_22 : f32 to vector<8x128xf32>
    %57 = arith.addf %56, %55 : vector<8x128xf32>
    %58 = arith.divf %56, %57 : vector<8x128xf32>
    %59 = vector.extract_strided_slice %52 {offsets = [0, 128], sizes = [8, 128], strides = [1, 1]} : vector<8x512xf32> to vector<8x128xf32>
    %60 = arith.negf %59 : vector<8x128xf32>
    %61 = math.exp %60 : vector<8x128xf32>
    %cst_23 = arith.constant 1.000000e+00 : f32
    %62 = vector.broadcast %cst_23 : f32 to vector<8x128xf32>
    %63 = arith.addf %62, %61 : vector<8x128xf32>
    %64 = arith.divf %62, %63 : vector<8x128xf32>
    %65 = vector.extract_strided_slice %52 {offsets = [0, 256], sizes = [8, 128], strides = [1, 1]} : vector<8x512xf32> to vector<8x128xf32>
    %66 = math.tanh %65 : vector<8x128xf32>
    %67 = vector.extract_strided_slice %52 {offsets = [0, 384], sizes = [8, 128], strides = [1, 1]} : vector<8x512xf32> to vector<8x128xf32>
    %68 = arith.negf %67 : vector<8x128xf32>
    %69 = math.exp %68 : vector<8x128xf32>
    %cst_24 = arith.constant 1.000000e+00 : f32
    %70 = vector.broadcast %cst_24 : f32 to vector<8x128xf32>
    %71 = arith.addf %70, %69 : vector<8x128xf32>
    %72 = arith.divf %70, %71 : vector<8x128xf32>
    %73 = arith.mulf %64, %11 : vector<8x128xf32>
    %74 = arith.mulf %58, %66 : vector<8x128xf32>
    %75 = arith.addf %73, %74 : vector<8x128xf32>
    %76 = math.tanh %75 : vector<8x128xf32>
    %77 = arith.mulf %72, %76 : vector<8x128xf32>
    %78 = arith.select %13, %77, %11 : vector<8x128xi1>, vector<8x128xf32>
    %79 = arith.select %13, %75, %11 : vector<8x128xi1>, vector<8x128xf32>
    %c1_i32 = arith.constant 1 : i32
    %80 = vector.broadcast %c1_i32 : i32 to vector<8x128xi32>
    %81 = arith.cmpi slt, %80, %3 : vector<8x128xi32>
    %c8_i32_25 = arith.constant 8 : i32
    %82 = arith.muli %c1_i32, %c8_i32_25 : i32
    %83 = tpu.assume_multiple %82, 8 : i32
    %84 = arith.index_cast %83 : i32 to index
    %c0_26 = arith.constant 0 : index
    %85 = vector.load %arg11[%84, %c0_26] : memref<64x512xf32, #tpu.memory_space<vmem>>, vector<8x512xf32>
    %86 = arith.truncf %46 : vector<8x128xf32> to vector<8x128xbf16>
    %cst_27 = arith.constant dense<0.000000e+00> : vector<8x512xf32>
    %87 = tpu.matmul %86, %0, %cst_27 {dimension_numbers = #tpu.dot_dimension_numbers<[1], [0], [0], [1], [0, 0, 1, 1], [], []>} : vector<8x128xbf16>, vector<128x512xbf16>, vector<8x512xf32> -> vector<8x512xf32>
    %88 = arith.addf %85, %87 : vector<8x512xf32>
    %89 = vector.extract_strided_slice %88 {offsets = [0, 0], sizes = [8, 128], strides = [1, 1]} : vector<8x512xf32> to vector<8x128xf32>
    %90 = arith.negf %89 : vector<8x128xf32>
    %91 = math.exp %90 : vector<8x128xf32>
    %cst_28 = arith.constant 1.000000e+00 : f32
    %92 = vector.broadcast %cst_28 : f32 to vector<8x128xf32>
    %93 = arith.addf %92, %91 : vector<8x128xf32>
    %94 = arith.divf %92, %93 : vector<8x128xf32>
    %95 = vector.extract_strided_slice %88 {offsets = [0, 128], sizes = [8, 128], strides = [1, 1]} : vector<8x512xf32> to vector<8x128xf32>
    %96 = arith.negf %95 : vector<8x128xf32>
    %97 = math.exp %96 : vector<8x128xf32>
    %cst_29 = arith.constant 1.000000e+00 : f32
    %98 = vector.broadcast %cst_29 : f32 to vector<8x128xf32>
    %99 = arith.addf %98, %97 : vector<8x128xf32>
    %100 = arith.divf %98, %99 : vector<8x128xf32>
    %101 = vector.extract_strided_slice %88 {offsets = [0, 256], sizes = [8, 128], strides = [1, 1]} : vector<8x512xf32> to vector<8x128xf32>
    %102 = math.tanh %101 : vector<8x128xf32>
    %103 = vector.extract_strided_slice %88 {offsets = [0, 384], sizes = [8, 128], strides = [1, 1]} : vector<8x512xf32> to vector<8x128xf32>
    %104 = arith.negf %103 : vector<8x128xf32>
    %105 = math.exp %104 : vector<8x128xf32>
    %cst_30 = arith.constant 1.000000e+00 : f32
    %106 = vector.broadcast %cst_30 : f32 to vector<8x128xf32>
    %107 = arith.addf %106, %105 : vector<8x128xf32>
    %108 = arith.divf %106, %107 : vector<8x128xf32>
    %109 = arith.mulf %100, %47 : vector<8x128xf32>
    %110 = arith.mulf %94, %102 : vector<8x128xf32>
    %111 = arith.addf %109, %110 : vector<8x128xf32>
    %112 = math.tanh %111 : vector<8x128xf32>
    %113 = arith.mulf %108, %112 : vector<8x128xf32>
    %114 = arith.select %81, %113, %46 : vector<8x128xi1>, vector<8x128xf32>
    %115 = arith.select %81, %111, %47 : vector<8x128xi1>, vector<8x128xf32>
    %116 = tpu.concatenate %114, %78 in 1 : vector<8x128xf32>, vector<8x128xf32> -> vector<8x256xf32>
    %117 = arith.truncf %116 : vector<8x256xf32> to vector<8x256xbf16>
    %cst_31 = arith.constant dense<0.000000e+00> : vector<8x512xf32>
    %118 = tpu.matmul %117, %1, %cst_31 {dimension_numbers = #tpu.dot_dimension_numbers<[1], [0], [0], [1], [0, 0, 1, 1], [], []>} : vector<8x256xbf16>, vector<256x512xbf16>, vector<8x512xf32> -> vector<8x512xf32>
    %119 = vector.broadcast %2 : vector<1x512xf32> to vector<8x512xf32>
    %120 = arith.addf %119, %118 : vector<8x512xf32>
    %121 = vector.extract_strided_slice %120 {offsets = [0, 0], sizes = [8, 128], strides = [1, 1]} : vector<8x512xf32> to vector<8x128xf32>
    %122 = arith.negf %121 : vector<8x128xf32>
    %123 = math.exp %122 : vector<8x128xf32>
    %cst_32 = arith.constant 1.000000e+00 : f32
    %124 = vector.broadcast %cst_32 : f32 to vector<8x128xf32>
    %125 = arith.addf %124, %123 : vector<8x128xf32>
    %126 = arith.divf %124, %125 : vector<8x128xf32>
    %127 = vector.extract_strided_slice %120 {offsets = [0, 128], sizes = [8, 128], strides = [1, 1]} : vector<8x512xf32> to vector<8x128xf32>
    %128 = arith.negf %127 : vector<8x128xf32>
    %129 = math.exp %128 : vector<8x128xf32>
    %cst_33 = arith.constant 1.000000e+00 : f32
    %130 = vector.broadcast %cst_33 : f32 to vector<8x128xf32>
    %131 = arith.addf %130, %129 : vector<8x128xf32>
    %132 = arith.divf %130, %131 : vector<8x128xf32>
    %133 = vector.extract_strided_slice %120 {offsets = [0, 256], sizes = [8, 128], strides = [1, 1]} : vector<8x512xf32> to vector<8x128xf32>
    %134 = math.tanh %133 : vector<8x128xf32>
    %135 = vector.extract_strided_slice %120 {offsets = [0, 384], sizes = [8, 128], strides = [1, 1]} : vector<8x512xf32> to vector<8x128xf32>
    %136 = arith.negf %135 : vector<8x128xf32>
    %137 = math.exp %136 : vector<8x128xf32>
    %cst_34 = arith.constant 1.000000e+00 : f32
    %138 = vector.broadcast %cst_34 : f32 to vector<8x128xf32>
    %139 = arith.addf %138, %137 : vector<8x128xf32>
    %140 = arith.divf %138, %139 : vector<8x128xf32>
    %141 = arith.mulf %132, %79 : vector<8x128xf32>
    %142 = arith.mulf %126, %134 : vector<8x128xf32>
    %143 = arith.addf %141, %142 : vector<8x128xf32>
    %144 = math.tanh %143 : vector<8x128xf32>
    %145 = arith.mulf %140, %144 : vector<8x128xf32>
    %146 = arith.select %81, %145, %78 : vector<8x128xi1>, vector<8x128xf32>
    %147 = arith.select %81, %143, %79 : vector<8x128xi1>, vector<8x128xf32>
    %c2_i32 = arith.constant 2 : i32
    %148 = vector.broadcast %c2_i32 : i32 to vector<8x128xi32>
    %149 = arith.cmpi slt, %148, %3 : vector<8x128xi32>
    %c8_i32_35 = arith.constant 8 : i32
    %150 = arith.muli %c2_i32, %c8_i32_35 : i32
    %151 = tpu.assume_multiple %150, 8 : i32
    %152 = arith.index_cast %151 : i32 to index
    %c0_36 = arith.constant 0 : index
    %153 = vector.load %arg11[%152, %c0_36] : memref<64x512xf32, #tpu.memory_space<vmem>>, vector<8x512xf32>
    %154 = arith.truncf %114 : vector<8x128xf32> to vector<8x128xbf16>
    %cst_37 = arith.constant dense<0.000000e+00> : vector<8x512xf32>
    %155 = tpu.matmul %154, %0, %cst_37 {dimension_numbers = #tpu.dot_dimension_numbers<[1], [0], [0], [1], [0, 0, 1, 1], [], []>} : vector<8x128xbf16>, vector<128x512xbf16>, vector<8x512xf32> -> vector<8x512xf32>
    %156 = arith.addf %153, %155 : vector<8x512xf32>
    %157 = vector.extract_strided_slice %156 {offsets = [0, 0], sizes = [8, 128], strides = [1, 1]} : vector<8x512xf32> to vector<8x128xf32>
    %158 = arith.negf %157 : vector<8x128xf32>
    %159 = math.exp %158 : vector<8x128xf32>
    %cst_38 = arith.constant 1.000000e+00 : f32
    %160 = vector.broadcast %cst_38 : f32 to vector<8x128xf32>
    %161 = arith.addf %160, %159 : vector<8x128xf32>
    %162 = arith.divf %160, %161 : vector<8x128xf32>
    %163 = vector.extract_strided_slice %156 {offsets = [0, 128], sizes = [8, 128], strides = [1, 1]} : vector<8x512xf32> to vector<8x128xf32>
    %164 = arith.negf %163 : vector<8x128xf32>
    %165 = math.exp %164 : vector<8x128xf32>
    %cst_39 = arith.constant 1.000000e+00 : f32
    %166 = vector.broadcast %cst_39 : f32 to vector<8x128xf32>
    %167 = arith.addf %166, %165 : vector<8x128xf32>
    %168 = arith.divf %166, %167 : vector<8x128xf32>
    %169 = vector.extract_strided_slice %156 {offsets = [0, 256], sizes = [8, 128], strides = [1, 1]} : vector<8x512xf32> to vector<8x128xf32>
    %170 = math.tanh %169 : vector<8x128xf32>
    %171 = vector.extract_strided_slice %156 {offsets = [0, 384], sizes = [8, 128], strides = [1, 1]} : vector<8x512xf32> to vector<8x128xf32>
    %172 = arith.negf %171 : vector<8x128xf32>
    %173 = math.exp %172 : vector<8x128xf32>
    %cst_40 = arith.constant 1.000000e+00 : f32
    %174 = vector.broadcast %cst_40 : f32 to vector<8x128xf32>
    %175 = arith.addf %174, %173 : vector<8x128xf32>
    %176 = arith.divf %174, %175 : vector<8x128xf32>
    %177 = arith.mulf %168, %115 : vector<8x128xf32>
    %178 = arith.mulf %162, %170 : vector<8x128xf32>
    %179 = arith.addf %177, %178 : vector<8x128xf32>
    %180 = math.tanh %179 : vector<8x128xf32>
    %181 = arith.mulf %176, %180 : vector<8x128xf32>
    %182 = arith.select %149, %181, %114 : vector<8x128xi1>, vector<8x128xf32>
    %183 = arith.select %149, %179, %115 : vector<8x128xi1>, vector<8x128xf32>
    %184 = tpu.concatenate %182, %146 in 1 : vector<8x128xf32>, vector<8x128xf32> -> vector<8x256xf32>
    %185 = arith.truncf %184 : vector<8x256xf32> to vector<8x256xbf16>
    %cst_41 = arith.constant dense<0.000000e+00> : vector<8x512xf32>
    %186 = tpu.matmul %185, %1, %cst_41 {dimension_numbers = #tpu.dot_dimension_numbers<[1], [0], [0], [1], [0, 0, 1, 1], [], []>} : vector<8x256xbf16>, vector<256x512xbf16>, vector<8x512xf32> -> vector<8x512xf32>
    %187 = vector.broadcast %2 : vector<1x512xf32> to vector<8x512xf32>
    %188 = arith.addf %187, %186 : vector<8x512xf32>
    %189 = vector.extract_strided_slice %188 {offsets = [0, 0], sizes = [8, 128], strides = [1, 1]} : vector<8x512xf32> to vector<8x128xf32>
    %190 = arith.negf %189 : vector<8x128xf32>
    %191 = math.exp %190 : vector<8x128xf32>
    %cst_42 = arith.constant 1.000000e+00 : f32
    %192 = vector.broadcast %cst_42 : f32 to vector<8x128xf32>
    %193 = arith.addf %192, %191 : vector<8x128xf32>
    %194 = arith.divf %192, %193 : vector<8x128xf32>
    %195 = vector.extract_strided_slice %188 {offsets = [0, 128], sizes = [8, 128], strides = [1, 1]} : vector<8x512xf32> to vector<8x128xf32>
    %196 = arith.negf %195 : vector<8x128xf32>
    %197 = math.exp %196 : vector<8x128xf32>
    %cst_43 = arith.constant 1.000000e+00 : f32
    %198 = vector.broadcast %cst_43 : f32 to vector<8x128xf32>
    %199 = arith.addf %198, %197 : vector<8x128xf32>
    %200 = arith.divf %198, %199 : vector<8x128xf32>
    %201 = vector.extract_strided_slice %188 {offsets = [0, 256], sizes = [8, 128], strides = [1, 1]} : vector<8x512xf32> to vector<8x128xf32>
    %202 = math.tanh %201 : vector<8x128xf32>
    %203 = vector.extract_strided_slice %188 {offsets = [0, 384], sizes = [8, 128], strides = [1, 1]} : vector<8x512xf32> to vector<8x128xf32>
    %204 = arith.negf %203 : vector<8x128xf32>
    %205 = math.exp %204 : vector<8x128xf32>
    %cst_44 = arith.constant 1.000000e+00 : f32
    %206 = vector.broadcast %cst_44 : f32 to vector<8x128xf32>
    %207 = arith.addf %206, %205 : vector<8x128xf32>
    %208 = arith.divf %206, %207 : vector<8x128xf32>
    %209 = arith.mulf %200, %147 : vector<8x128xf32>
    %210 = arith.mulf %194, %202 : vector<8x128xf32>
    %211 = arith.addf %209, %210 : vector<8x128xf32>
    %212 = math.tanh %211 : vector<8x128xf32>
    %213 = arith.mulf %208, %212 : vector<8x128xf32>
    %214 = arith.select %149, %213, %146 : vector<8x128xi1>, vector<8x128xf32>
    %215 = arith.select %149, %211, %147 : vector<8x128xi1>, vector<8x128xf32>
    %c3_i32 = arith.constant 3 : i32
    %216 = vector.broadcast %c3_i32 : i32 to vector<8x128xi32>
    %217 = arith.cmpi slt, %216, %3 : vector<8x128xi32>
    %c8_i32_45 = arith.constant 8 : i32
    %218 = arith.muli %c3_i32, %c8_i32_45 : i32
    %219 = tpu.assume_multiple %218, 8 : i32
    %220 = arith.index_cast %219 : i32 to index
    %c0_46 = arith.constant 0 : index
    %221 = vector.load %arg11[%220, %c0_46] : memref<64x512xf32, #tpu.memory_space<vmem>>, vector<8x512xf32>
    %222 = arith.truncf %182 : vector<8x128xf32> to vector<8x128xbf16>
    %cst_47 = arith.constant dense<0.000000e+00> : vector<8x512xf32>
    %223 = tpu.matmul %222, %0, %cst_47 {dimension_numbers = #tpu.dot_dimension_numbers<[1], [0], [0], [1], [0, 0, 1, 1], [], []>} : vector<8x128xbf16>, vector<128x512xbf16>, vector<8x512xf32> -> vector<8x512xf32>
    %224 = arith.addf %221, %223 : vector<8x512xf32>
    %225 = vector.extract_strided_slice %224 {offsets = [0, 0], sizes = [8, 128], strides = [1, 1]} : vector<8x512xf32> to vector<8x128xf32>
    %226 = arith.negf %225 : vector<8x128xf32>
    %227 = math.exp %226 : vector<8x128xf32>
    %cst_48 = arith.constant 1.000000e+00 : f32
    %228 = vector.broadcast %cst_48 : f32 to vector<8x128xf32>
    %229 = arith.addf %228, %227 : vector<8x128xf32>
    %230 = arith.divf %228, %229 : vector<8x128xf32>
    %231 = vector.extract_strided_slice %224 {offsets = [0, 128], sizes = [8, 128], strides = [1, 1]} : vector<8x512xf32> to vector<8x128xf32>
    %232 = arith.negf %231 : vector<8x128xf32>
    %233 = math.exp %232 : vector<8x128xf32>
    %cst_49 = arith.constant 1.000000e+00 : f32
    %234 = vector.broadcast %cst_49 : f32 to vector<8x128xf32>
    %235 = arith.addf %234, %233 : vector<8x128xf32>
    %236 = arith.divf %234, %235 : vector<8x128xf32>
    %237 = vector.extract_strided_slice %224 {offsets = [0, 256], sizes = [8, 128], strides = [1, 1]} : vector<8x512xf32> to vector<8x128xf32>
    %238 = math.tanh %237 : vector<8x128xf32>
    %239 = vector.extract_strided_slice %224 {offsets = [0, 384], sizes = [8, 128], strides = [1, 1]} : vector<8x512xf32> to vector<8x128xf32>
    %240 = arith.negf %239 : vector<8x128xf32>
    %241 = math.exp %240 : vector<8x128xf32>
    %cst_50 = arith.constant 1.000000e+00 : f32
    %242 = vector.broadcast %cst_50 : f32 to vector<8x128xf32>
    %243 = arith.addf %242, %241 : vector<8x128xf32>
    %244 = arith.divf %242, %243 : vector<8x128xf32>
    %245 = arith.mulf %236, %183 : vector<8x128xf32>
    %246 = arith.mulf %230, %238 : vector<8x128xf32>
    %247 = arith.addf %245, %246 : vector<8x128xf32>
    %248 = math.tanh %247 : vector<8x128xf32>
    %249 = arith.mulf %244, %248 : vector<8x128xf32>
    %250 = arith.select %217, %249, %182 : vector<8x128xi1>, vector<8x128xf32>
    %251 = arith.select %217, %247, %183 : vector<8x128xi1>, vector<8x128xf32>
    %252 = tpu.concatenate %250, %214 in 1 : vector<8x128xf32>, vector<8x128xf32> -> vector<8x256xf32>
    %253 = arith.truncf %252 : vector<8x256xf32> to vector<8x256xbf16>
    %cst_51 = arith.constant dense<0.000000e+00> : vector<8x512xf32>
    %254 = tpu.matmul %253, %1, %cst_51 {dimension_numbers = #tpu.dot_dimension_numbers<[1], [0], [0], [1], [0, 0, 1, 1], [], []>} : vector<8x256xbf16>, vector<256x512xbf16>, vector<8x512xf32> -> vector<8x512xf32>
    %255 = vector.broadcast %2 : vector<1x512xf32> to vector<8x512xf32>
    %256 = arith.addf %255, %254 : vector<8x512xf32>
    %257 = vector.extract_strided_slice %256 {offsets = [0, 0], sizes = [8, 128], strides = [1, 1]} : vector<8x512xf32> to vector<8x128xf32>
    %258 = arith.negf %257 : vector<8x128xf32>
    %259 = math.exp %258 : vector<8x128xf32>
    %cst_52 = arith.constant 1.000000e+00 : f32
    %260 = vector.broadcast %cst_52 : f32 to vector<8x128xf32>
    %261 = arith.addf %260, %259 : vector<8x128xf32>
    %262 = arith.divf %260, %261 : vector<8x128xf32>
    %263 = vector.extract_strided_slice %256 {offsets = [0, 128], sizes = [8, 128], strides = [1, 1]} : vector<8x512xf32> to vector<8x128xf32>
    %264 = arith.negf %263 : vector<8x128xf32>
    %265 = math.exp %264 : vector<8x128xf32>
    %cst_53 = arith.constant 1.000000e+00 : f32
    %266 = vector.broadcast %cst_53 : f32 to vector<8x128xf32>
    %267 = arith.addf %266, %265 : vector<8x128xf32>
    %268 = arith.divf %266, %267 : vector<8x128xf32>
    %269 = vector.extract_strided_slice %256 {offsets = [0, 256], sizes = [8, 128], strides = [1, 1]} : vector<8x512xf32> to vector<8x128xf32>
    %270 = math.tanh %269 : vector<8x128xf32>
    %271 = vector.extract_strided_slice %256 {offsets = [0, 384], sizes = [8, 128], strides = [1, 1]} : vector<8x512xf32> to vector<8x128xf32>
    %272 = arith.negf %271 : vector<8x128xf32>
    %273 = math.exp %272 : vector<8x128xf32>
    %cst_54 = arith.constant 1.000000e+00 : f32
    %274 = vector.broadcast %cst_54 : f32 to vector<8x128xf32>
    %275 = arith.addf %274, %273 : vector<8x128xf32>
    %276 = arith.divf %274, %275 : vector<8x128xf32>
    %277 = arith.mulf %268, %215 : vector<8x128xf32>
    %278 = arith.mulf %262, %270 : vector<8x128xf32>
    %279 = arith.addf %277, %278 : vector<8x128xf32>
    %280 = math.tanh %279 : vector<8x128xf32>
    %281 = arith.mulf %276, %280 : vector<8x128xf32>
    %282 = arith.select %217, %281, %214 : vector<8x128xi1>, vector<8x128xf32>
    %283 = arith.select %217, %279, %215 : vector<8x128xi1>, vector<8x128xf32>
    %c4_i32 = arith.constant 4 : i32
    %284 = vector.broadcast %c4_i32 : i32 to vector<8x128xi32>
    %285 = arith.cmpi slt, %284, %3 : vector<8x128xi32>
    %c8_i32_55 = arith.constant 8 : i32
    %286 = arith.muli %c4_i32, %c8_i32_55 : i32
    %287 = tpu.assume_multiple %286, 8 : i32
    %288 = arith.index_cast %287 : i32 to index
    %c0_56 = arith.constant 0 : index
    %289 = vector.load %arg11[%288, %c0_56] : memref<64x512xf32, #tpu.memory_space<vmem>>, vector<8x512xf32>
    %290 = arith.truncf %250 : vector<8x128xf32> to vector<8x128xbf16>
    %cst_57 = arith.constant dense<0.000000e+00> : vector<8x512xf32>
    %291 = tpu.matmul %290, %0, %cst_57 {dimension_numbers = #tpu.dot_dimension_numbers<[1], [0], [0], [1], [0, 0, 1, 1], [], []>} : vector<8x128xbf16>, vector<128x512xbf16>, vector<8x512xf32> -> vector<8x512xf32>
    %292 = arith.addf %289, %291 : vector<8x512xf32>
    %293 = vector.extract_strided_slice %292 {offsets = [0, 0], sizes = [8, 128], strides = [1, 1]} : vector<8x512xf32> to vector<8x128xf32>
    %294 = arith.negf %293 : vector<8x128xf32>
    %295 = math.exp %294 : vector<8x128xf32>
    %cst_58 = arith.constant 1.000000e+00 : f32
    %296 = vector.broadcast %cst_58 : f32 to vector<8x128xf32>
    %297 = arith.addf %296, %295 : vector<8x128xf32>
    %298 = arith.divf %296, %297 : vector<8x128xf32>
    %299 = vector.extract_strided_slice %292 {offsets = [0, 128], sizes = [8, 128], strides = [1, 1]} : vector<8x512xf32> to vector<8x128xf32>
    %300 = arith.negf %299 : vector<8x128xf32>
    %301 = math.exp %300 : vector<8x128xf32>
    %cst_59 = arith.constant 1.000000e+00 : f32
    %302 = vector.broadcast %cst_59 : f32 to vector<8x128xf32>
    %303 = arith.addf %302, %301 : vector<8x128xf32>
    %304 = arith.divf %302, %303 : vector<8x128xf32>
    %305 = vector.extract_strided_slice %292 {offsets = [0, 256], sizes = [8, 128], strides = [1, 1]} : vector<8x512xf32> to vector<8x128xf32>
    %306 = math.tanh %305 : vector<8x128xf32>
    %307 = vector.extract_strided_slice %292 {offsets = [0, 384], sizes = [8, 128], strides = [1, 1]} : vector<8x512xf32> to vector<8x128xf32>
    %308 = arith.negf %307 : vector<8x128xf32>
    %309 = math.exp %308 : vector<8x128xf32>
    %cst_60 = arith.constant 1.000000e+00 : f32
    %310 = vector.broadcast %cst_60 : f32 to vector<8x128xf32>
    %311 = arith.addf %310, %309 : vector<8x128xf32>
    %312 = arith.divf %310, %311 : vector<8x128xf32>
    %313 = arith.mulf %304, %251 : vector<8x128xf32>
    %314 = arith.mulf %298, %306 : vector<8x128xf32>
    %315 = arith.addf %313, %314 : vector<8x128xf32>
    %316 = math.tanh %315 : vector<8x128xf32>
    %317 = arith.mulf %312, %316 : vector<8x128xf32>
    %318 = arith.select %285, %317, %250 : vector<8x128xi1>, vector<8x128xf32>
    %319 = arith.select %285, %315, %251 : vector<8x128xi1>, vector<8x128xf32>
    %320 = tpu.concatenate %318, %282 in 1 : vector<8x128xf32>, vector<8x128xf32> -> vector<8x256xf32>
    %321 = arith.truncf %320 : vector<8x256xf32> to vector<8x256xbf16>
    %cst_61 = arith.constant dense<0.000000e+00> : vector<8x512xf32>
    %322 = tpu.matmul %321, %1, %cst_61 {dimension_numbers = #tpu.dot_dimension_numbers<[1], [0], [0], [1], [0, 0, 1, 1], [], []>} : vector<8x256xbf16>, vector<256x512xbf16>, vector<8x512xf32> -> vector<8x512xf32>
    %323 = vector.broadcast %2 : vector<1x512xf32> to vector<8x512xf32>
    %324 = arith.addf %323, %322 : vector<8x512xf32>
    %325 = vector.extract_strided_slice %324 {offsets = [0, 0], sizes = [8, 128], strides = [1, 1]} : vector<8x512xf32> to vector<8x128xf32>
    %326 = arith.negf %325 : vector<8x128xf32>
    %327 = math.exp %326 : vector<8x128xf32>
    %cst_62 = arith.constant 1.000000e+00 : f32
    %328 = vector.broadcast %cst_62 : f32 to vector<8x128xf32>
    %329 = arith.addf %328, %327 : vector<8x128xf32>
    %330 = arith.divf %328, %329 : vector<8x128xf32>
    %331 = vector.extract_strided_slice %324 {offsets = [0, 128], sizes = [8, 128], strides = [1, 1]} : vector<8x512xf32> to vector<8x128xf32>
    %332 = arith.negf %331 : vector<8x128xf32>
    %333 = math.exp %332 : vector<8x128xf32>
    %cst_63 = arith.constant 1.000000e+00 : f32
    %334 = vector.broadcast %cst_63 : f32 to vector<8x128xf32>
    %335 = arith.addf %334, %333 : vector<8x128xf32>
    %336 = arith.divf %334, %335 : vector<8x128xf32>
    %337 = vector.extract_strided_slice %324 {offsets = [0, 256], sizes = [8, 128], strides = [1, 1]} : vector<8x512xf32> to vector<8x128xf32>
    %338 = math.tanh %337 : vector<8x128xf32>
    %339 = vector.extract_strided_slice %324 {offsets = [0, 384], sizes = [8, 128], strides = [1, 1]} : vector<8x512xf32> to vector<8x128xf32>
    %340 = arith.negf %339 : vector<8x128xf32>
    %341 = math.exp %340 : vector<8x128xf32>
    %cst_64 = arith.constant 1.000000e+00 : f32
    %342 = vector.broadcast %cst_64 : f32 to vector<8x128xf32>
    %343 = arith.addf %342, %341 : vector<8x128xf32>
    %344 = arith.divf %342, %343 : vector<8x128xf32>
    %345 = arith.mulf %336, %283 : vector<8x128xf32>
    %346 = arith.mulf %330, %338 : vector<8x128xf32>
    %347 = arith.addf %345, %346 : vector<8x128xf32>
    %348 = math.tanh %347 : vector<8x128xf32>
    %349 = arith.mulf %344, %348 : vector<8x128xf32>
    %350 = arith.select %285, %349, %282 : vector<8x128xi1>, vector<8x128xf32>
    %351 = arith.select %285, %347, %283 : vector<8x128xi1>, vector<8x128xf32>
    %c5_i32 = arith.constant 5 : i32
    %352 = vector.broadcast %c5_i32 : i32 to vector<8x128xi32>
    %353 = arith.cmpi slt, %352, %3 : vector<8x128xi32>
    %c8_i32_65 = arith.constant 8 : i32
    %354 = arith.muli %c5_i32, %c8_i32_65 : i32
    %355 = tpu.assume_multiple %354, 8 : i32
    %356 = arith.index_cast %355 : i32 to index
    %c0_66 = arith.constant 0 : index
    %357 = vector.load %arg11[%356, %c0_66] : memref<64x512xf32, #tpu.memory_space<vmem>>, vector<8x512xf32>
    %358 = arith.truncf %318 : vector<8x128xf32> to vector<8x128xbf16>
    %cst_67 = arith.constant dense<0.000000e+00> : vector<8x512xf32>
    %359 = tpu.matmul %358, %0, %cst_67 {dimension_numbers = #tpu.dot_dimension_numbers<[1], [0], [0], [1], [0, 0, 1, 1], [], []>} : vector<8x128xbf16>, vector<128x512xbf16>, vector<8x512xf32> -> vector<8x512xf32>
    %360 = arith.addf %357, %359 : vector<8x512xf32>
    %361 = vector.extract_strided_slice %360 {offsets = [0, 0], sizes = [8, 128], strides = [1, 1]} : vector<8x512xf32> to vector<8x128xf32>
    %362 = arith.negf %361 : vector<8x128xf32>
    %363 = math.exp %362 : vector<8x128xf32>
    %cst_68 = arith.constant 1.000000e+00 : f32
    %364 = vector.broadcast %cst_68 : f32 to vector<8x128xf32>
    %365 = arith.addf %364, %363 : vector<8x128xf32>
    %366 = arith.divf %364, %365 : vector<8x128xf32>
    %367 = vector.extract_strided_slice %360 {offsets = [0, 128], sizes = [8, 128], strides = [1, 1]} : vector<8x512xf32> to vector<8x128xf32>
    %368 = arith.negf %367 : vector<8x128xf32>
    %369 = math.exp %368 : vector<8x128xf32>
    %cst_69 = arith.constant 1.000000e+00 : f32
    %370 = vector.broadcast %cst_69 : f32 to vector<8x128xf32>
    %371 = arith.addf %370, %369 : vector<8x128xf32>
    %372 = arith.divf %370, %371 : vector<8x128xf32>
    %373 = vector.extract_strided_slice %360 {offsets = [0, 256], sizes = [8, 128], strides = [1, 1]} : vector<8x512xf32> to vector<8x128xf32>
    %374 = math.tanh %373 : vector<8x128xf32>
    %375 = vector.extract_strided_slice %360 {offsets = [0, 384], sizes = [8, 128], strides = [1, 1]} : vector<8x512xf32> to vector<8x128xf32>
    %376 = arith.negf %375 : vector<8x128xf32>
    %377 = math.exp %376 : vector<8x128xf32>
    %cst_70 = arith.constant 1.000000e+00 : f32
    %378 = vector.broadcast %cst_70 : f32 to vector<8x128xf32>
    %379 = arith.addf %378, %377 : vector<8x128xf32>
    %380 = arith.divf %378, %379 : vector<8x128xf32>
    %381 = arith.mulf %372, %319 : vector<8x128xf32>
    %382 = arith.mulf %366, %374 : vector<8x128xf32>
    %383 = arith.addf %381, %382 : vector<8x128xf32>
    %384 = math.tanh %383 : vector<8x128xf32>
    %385 = arith.mulf %380, %384 : vector<8x128xf32>
    %386 = arith.select %353, %385, %318 : vector<8x128xi1>, vector<8x128xf32>
    %387 = arith.select %353, %383, %319 : vector<8x128xi1>, vector<8x128xf32>
    %388 = tpu.concatenate %386, %350 in 1 : vector<8x128xf32>, vector<8x128xf32> -> vector<8x256xf32>
    %389 = arith.truncf %388 : vector<8x256xf32> to vector<8x256xbf16>
    %cst_71 = arith.constant dense<0.000000e+00> : vector<8x512xf32>
    %390 = tpu.matmul %389, %1, %cst_71 {dimension_numbers = #tpu.dot_dimension_numbers<[1], [0], [0], [1], [0, 0, 1, 1], [], []>} : vector<8x256xbf16>, vector<256x512xbf16>, vector<8x512xf32> -> vector<8x512xf32>
    %391 = vector.broadcast %2 : vector<1x512xf32> to vector<8x512xf32>
    %392 = arith.addf %391, %390 : vector<8x512xf32>
    %393 = vector.extract_strided_slice %392 {offsets = [0, 0], sizes = [8, 128], strides = [1, 1]} : vector<8x512xf32> to vector<8x128xf32>
    %394 = arith.negf %393 : vector<8x128xf32>
    %395 = math.exp %394 : vector<8x128xf32>
    %cst_72 = arith.constant 1.000000e+00 : f32
    %396 = vector.broadcast %cst_72 : f32 to vector<8x128xf32>
    %397 = arith.addf %396, %395 : vector<8x128xf32>
    %398 = arith.divf %396, %397 : vector<8x128xf32>
    %399 = vector.extract_strided_slice %392 {offsets = [0, 128], sizes = [8, 128], strides = [1, 1]} : vector<8x512xf32> to vector<8x128xf32>
    %400 = arith.negf %399 : vector<8x128xf32>
    %401 = math.exp %400 : vector<8x128xf32>
    %cst_73 = arith.constant 1.000000e+00 : f32
    %402 = vector.broadcast %cst_73 : f32 to vector<8x128xf32>
    %403 = arith.addf %402, %401 : vector<8x128xf32>
    %404 = arith.divf %402, %403 : vector<8x128xf32>
    %405 = vector.extract_strided_slice %392 {offsets = [0, 256], sizes = [8, 128], strides = [1, 1]} : vector<8x512xf32> to vector<8x128xf32>
    %406 = math.tanh %405 : vector<8x128xf32>
    %407 = vector.extract_strided_slice %392 {offsets = [0, 384], sizes = [8, 128], strides = [1, 1]} : vector<8x512xf32> to vector<8x128xf32>
    %408 = arith.negf %407 : vector<8x128xf32>
    %409 = math.exp %408 : vector<8x128xf32>
    %cst_74 = arith.constant 1.000000e+00 : f32
    %410 = vector.broadcast %cst_74 : f32 to vector<8x128xf32>
    %411 = arith.addf %410, %409 : vector<8x128xf32>
    %412 = arith.divf %410, %411 : vector<8x128xf32>
    %413 = arith.mulf %404, %351 : vector<8x128xf32>
    %414 = arith.mulf %398, %406 : vector<8x128xf32>
    %415 = arith.addf %413, %414 : vector<8x128xf32>
    %416 = math.tanh %415 : vector<8x128xf32>
    %417 = arith.mulf %412, %416 : vector<8x128xf32>
    %418 = arith.select %353, %417, %350 : vector<8x128xi1>, vector<8x128xf32>
    %419 = arith.select %353, %415, %351 : vector<8x128xi1>, vector<8x128xf32>
    %c6_i32 = arith.constant 6 : i32
    %420 = vector.broadcast %c6_i32 : i32 to vector<8x128xi32>
    %421 = arith.cmpi slt, %420, %3 : vector<8x128xi32>
    %c8_i32_75 = arith.constant 8 : i32
    %422 = arith.muli %c6_i32, %c8_i32_75 : i32
    %423 = tpu.assume_multiple %422, 8 : i32
    %424 = arith.index_cast %423 : i32 to index
    %c0_76 = arith.constant 0 : index
    %425 = vector.load %arg11[%424, %c0_76] : memref<64x512xf32, #tpu.memory_space<vmem>>, vector<8x512xf32>
    %426 = arith.truncf %386 : vector<8x128xf32> to vector<8x128xbf16>
    %cst_77 = arith.constant dense<0.000000e+00> : vector<8x512xf32>
    %427 = tpu.matmul %426, %0, %cst_77 {dimension_numbers = #tpu.dot_dimension_numbers<[1], [0], [0], [1], [0, 0, 1, 1], [], []>} : vector<8x128xbf16>, vector<128x512xbf16>, vector<8x512xf32> -> vector<8x512xf32>
    %428 = arith.addf %425, %427 : vector<8x512xf32>
    %429 = vector.extract_strided_slice %428 {offsets = [0, 0], sizes = [8, 128], strides = [1, 1]} : vector<8x512xf32> to vector<8x128xf32>
    %430 = arith.negf %429 : vector<8x128xf32>
    %431 = math.exp %430 : vector<8x128xf32>
    %cst_78 = arith.constant 1.000000e+00 : f32
    %432 = vector.broadcast %cst_78 : f32 to vector<8x128xf32>
    %433 = arith.addf %432, %431 : vector<8x128xf32>
    %434 = arith.divf %432, %433 : vector<8x128xf32>
    %435 = vector.extract_strided_slice %428 {offsets = [0, 128], sizes = [8, 128], strides = [1, 1]} : vector<8x512xf32> to vector<8x128xf32>
    %436 = arith.negf %435 : vector<8x128xf32>
    %437 = math.exp %436 : vector<8x128xf32>
    %cst_79 = arith.constant 1.000000e+00 : f32
    %438 = vector.broadcast %cst_79 : f32 to vector<8x128xf32>
    %439 = arith.addf %438, %437 : vector<8x128xf32>
    %440 = arith.divf %438, %439 : vector<8x128xf32>
    %441 = vector.extract_strided_slice %428 {offsets = [0, 256], sizes = [8, 128], strides = [1, 1]} : vector<8x512xf32> to vector<8x128xf32>
    %442 = math.tanh %441 : vector<8x128xf32>
    %443 = vector.extract_strided_slice %428 {offsets = [0, 384], sizes = [8, 128], strides = [1, 1]} : vector<8x512xf32> to vector<8x128xf32>
    %444 = arith.negf %443 : vector<8x128xf32>
    %445 = math.exp %444 : vector<8x128xf32>
    %cst_80 = arith.constant 1.000000e+00 : f32
    %446 = vector.broadcast %cst_80 : f32 to vector<8x128xf32>
    %447 = arith.addf %446, %445 : vector<8x128xf32>
    %448 = arith.divf %446, %447 : vector<8x128xf32>
    %449 = arith.mulf %440, %387 : vector<8x128xf32>
    %450 = arith.mulf %434, %442 : vector<8x128xf32>
    %451 = arith.addf %449, %450 : vector<8x128xf32>
    %452 = math.tanh %451 : vector<8x128xf32>
    %453 = arith.mulf %448, %452 : vector<8x128xf32>
    %454 = arith.select %421, %453, %386 : vector<8x128xi1>, vector<8x128xf32>
    %455 = arith.select %421, %451, %387 : vector<8x128xi1>, vector<8x128xf32>
    %456 = tpu.concatenate %454, %418 in 1 : vector<8x128xf32>, vector<8x128xf32> -> vector<8x256xf32>
    %457 = arith.truncf %456 : vector<8x256xf32> to vector<8x256xbf16>
    %cst_81 = arith.constant dense<0.000000e+00> : vector<8x512xf32>
    %458 = tpu.matmul %457, %1, %cst_81 {dimension_numbers = #tpu.dot_dimension_numbers<[1], [0], [0], [1], [0, 0, 1, 1], [], []>} : vector<8x256xbf16>, vector<256x512xbf16>, vector<8x512xf32> -> vector<8x512xf32>
    %459 = vector.broadcast %2 : vector<1x512xf32> to vector<8x512xf32>
    %460 = arith.addf %459, %458 : vector<8x512xf32>
    %461 = vector.extract_strided_slice %460 {offsets = [0, 0], sizes = [8, 128], strides = [1, 1]} : vector<8x512xf32> to vector<8x128xf32>
    %462 = arith.negf %461 : vector<8x128xf32>
    %463 = math.exp %462 : vector<8x128xf32>
    %cst_82 = arith.constant 1.000000e+00 : f32
    %464 = vector.broadcast %cst_82 : f32 to vector<8x128xf32>
    %465 = arith.addf %464, %463 : vector<8x128xf32>
    %466 = arith.divf %464, %465 : vector<8x128xf32>
    %467 = vector.extract_strided_slice %460 {offsets = [0, 128], sizes = [8, 128], strides = [1, 1]} : vector<8x512xf32> to vector<8x128xf32>
    %468 = arith.negf %467 : vector<8x128xf32>
    %469 = math.exp %468 : vector<8x128xf32>
    %cst_83 = arith.constant 1.000000e+00 : f32
    %470 = vector.broadcast %cst_83 : f32 to vector<8x128xf32>
    %471 = arith.addf %470, %469 : vector<8x128xf32>
    %472 = arith.divf %470, %471 : vector<8x128xf32>
    %473 = vector.extract_strided_slice %460 {offsets = [0, 256], sizes = [8, 128], strides = [1, 1]} : vector<8x512xf32> to vector<8x128xf32>
    %474 = math.tanh %473 : vector<8x128xf32>
    %475 = vector.extract_strided_slice %460 {offsets = [0, 384], sizes = [8, 128], strides = [1, 1]} : vector<8x512xf32> to vector<8x128xf32>
    %476 = arith.negf %475 : vector<8x128xf32>
    %477 = math.exp %476 : vector<8x128xf32>
    %cst_84 = arith.constant 1.000000e+00 : f32
    %478 = vector.broadcast %cst_84 : f32 to vector<8x128xf32>
    %479 = arith.addf %478, %477 : vector<8x128xf32>
    %480 = arith.divf %478, %479 : vector<8x128xf32>
    %481 = arith.mulf %472, %419 : vector<8x128xf32>
    %482 = arith.mulf %466, %474 : vector<8x128xf32>
    %483 = arith.addf %481, %482 : vector<8x128xf32>
    %484 = math.tanh %483 : vector<8x128xf32>
    %485 = arith.mulf %480, %484 : vector<8x128xf32>
    %486 = arith.select %421, %485, %418 : vector<8x128xi1>, vector<8x128xf32>
    %487 = arith.select %421, %483, %419 : vector<8x128xi1>, vector<8x128xf32>
    %c7_i32 = arith.constant 7 : i32
    %488 = vector.broadcast %c7_i32 : i32 to vector<8x128xi32>
    %489 = arith.cmpi slt, %488, %3 : vector<8x128xi32>
    %c8_i32_85 = arith.constant 8 : i32
    %490 = arith.muli %c7_i32, %c8_i32_85 : i32
    %491 = tpu.assume_multiple %490, 8 : i32
    %492 = arith.index_cast %491 : i32 to index
    %c0_86 = arith.constant 0 : index
    %493 = vector.load %arg11[%492, %c0_86] : memref<64x512xf32, #tpu.memory_space<vmem>>, vector<8x512xf32>
    %494 = arith.truncf %454 : vector<8x128xf32> to vector<8x128xbf16>
    %cst_87 = arith.constant dense<0.000000e+00> : vector<8x512xf32>
    %495 = tpu.matmul %494, %0, %cst_87 {dimension_numbers = #tpu.dot_dimension_numbers<[1], [0], [0], [1], [0, 0, 1, 1], [], []>} : vector<8x128xbf16>, vector<128x512xbf16>, vector<8x512xf32> -> vector<8x512xf32>
    %496 = arith.addf %493, %495 : vector<8x512xf32>
    %497 = vector.extract_strided_slice %496 {offsets = [0, 0], sizes = [8, 128], strides = [1, 1]} : vector<8x512xf32> to vector<8x128xf32>
    %498 = arith.negf %497 : vector<8x128xf32>
    %499 = math.exp %498 : vector<8x128xf32>
    %cst_88 = arith.constant 1.000000e+00 : f32
    %500 = vector.broadcast %cst_88 : f32 to vector<8x128xf32>
    %501 = arith.addf %500, %499 : vector<8x128xf32>
    %502 = arith.divf %500, %501 : vector<8x128xf32>
    %503 = vector.extract_strided_slice %496 {offsets = [0, 128], sizes = [8, 128], strides = [1, 1]} : vector<8x512xf32> to vector<8x128xf32>
    %504 = arith.negf %503 : vector<8x128xf32>
    %505 = math.exp %504 : vector<8x128xf32>
    %cst_89 = arith.constant 1.000000e+00 : f32
    %506 = vector.broadcast %cst_89 : f32 to vector<8x128xf32>
    %507 = arith.addf %506, %505 : vector<8x128xf32>
    %508 = arith.divf %506, %507 : vector<8x128xf32>
    %509 = vector.extract_strided_slice %496 {offsets = [0, 256], sizes = [8, 128], strides = [1, 1]} : vector<8x512xf32> to vector<8x128xf32>
    %510 = math.tanh %509 : vector<8x128xf32>
    %511 = vector.extract_strided_slice %496 {offsets = [0, 384], sizes = [8, 128], strides = [1, 1]} : vector<8x512xf32> to vector<8x128xf32>
    %512 = arith.negf %511 : vector<8x128xf32>
    %513 = math.exp %512 : vector<8x128xf32>
    %cst_90 = arith.constant 1.000000e+00 : f32
    %514 = vector.broadcast %cst_90 : f32 to vector<8x128xf32>
    %515 = arith.addf %514, %513 : vector<8x128xf32>
    %516 = arith.divf %514, %515 : vector<8x128xf32>
    %517 = arith.mulf %508, %455 : vector<8x128xf32>
    %518 = arith.mulf %502, %510 : vector<8x128xf32>
    %519 = arith.addf %517, %518 : vector<8x128xf32>
    %520 = math.tanh %519 : vector<8x128xf32>
    %521 = arith.mulf %516, %520 : vector<8x128xf32>
    %522 = arith.select %489, %521, %454 : vector<8x128xi1>, vector<8x128xf32>
    %523 = arith.select %489, %519, %455 : vector<8x128xi1>, vector<8x128xf32>
    %524 = tpu.concatenate %522, %486 in 1 : vector<8x128xf32>, vector<8x128xf32> -> vector<8x256xf32>
    %525 = arith.truncf %524 : vector<8x256xf32> to vector<8x256xbf16>
    %cst_91 = arith.constant dense<0.000000e+00> : vector<8x512xf32>
    %526 = tpu.matmul %525, %1, %cst_91 {dimension_numbers = #tpu.dot_dimension_numbers<[1], [0], [0], [1], [0, 0, 1, 1], [], []>} : vector<8x256xbf16>, vector<256x512xbf16>, vector<8x512xf32> -> vector<8x512xf32>
    %527 = vector.broadcast %2 : vector<1x512xf32> to vector<8x512xf32>
    %528 = arith.addf %527, %526 : vector<8x512xf32>
    %529 = vector.extract_strided_slice %528 {offsets = [0, 0], sizes = [8, 128], strides = [1, 1]} : vector<8x512xf32> to vector<8x128xf32>
    %530 = arith.negf %529 : vector<8x128xf32>
    %531 = math.exp %530 : vector<8x128xf32>
    %cst_92 = arith.constant 1.000000e+00 : f32
    %532 = vector.broadcast %cst_92 : f32 to vector<8x128xf32>
    %533 = arith.addf %532, %531 : vector<8x128xf32>
    %534 = arith.divf %532, %533 : vector<8x128xf32>
    %535 = vector.extract_strided_slice %528 {offsets = [0, 128], sizes = [8, 128], strides = [1, 1]} : vector<8x512xf32> to vector<8x128xf32>
    %536 = arith.negf %535 : vector<8x128xf32>
    %537 = math.exp %536 : vector<8x128xf32>
    %cst_93 = arith.constant 1.000000e+00 : f32
    %538 = vector.broadcast %cst_93 : f32 to vector<8x128xf32>
    %539 = arith.addf %538, %537 : vector<8x128xf32>
    %540 = arith.divf %538, %539 : vector<8x128xf32>
    %541 = vector.extract_strided_slice %528 {offsets = [0, 256], sizes = [8, 128], strides = [1, 1]} : vector<8x512xf32> to vector<8x128xf32>
    %542 = math.tanh %541 : vector<8x128xf32>
    %543 = vector.extract_strided_slice %528 {offsets = [0, 384], sizes = [8, 128], strides = [1, 1]} : vector<8x512xf32> to vector<8x128xf32>
    %544 = arith.negf %543 : vector<8x128xf32>
    %545 = math.exp %544 : vector<8x128xf32>
    %cst_94 = arith.constant 1.000000e+00 : f32
    %546 = vector.broadcast %cst_94 : f32 to vector<8x128xf32>
    %547 = arith.addf %546, %545 : vector<8x128xf32>
    %548 = arith.divf %546, %547 : vector<8x128xf32>
    %549 = arith.mulf %540, %487 : vector<8x128xf32>
    %550 = arith.mulf %534, %542 : vector<8x128xf32>
    %551 = arith.addf %549, %550 : vector<8x128xf32>
    %552 = math.tanh %551 : vector<8x128xf32>
    %553 = arith.mulf %548, %552 : vector<8x128xf32>
    %554 = arith.select %489, %553, %486 : vector<8x128xi1>, vector<8x128xf32>
    %555 = arith.select %489, %551, %487 : vector<8x128xi1>, vector<8x128xf32>
    %c8_i32_95 = arith.constant 8 : i32
    %556 = arith.truncf %554 : vector<8x128xf32> to vector<8x128xbf16>
    %c0_96 = arith.constant 0 : index
    %c0_97 = arith.constant 0 : index
    %557 = vector.load %arg8[%c0_96, %c0_97] : memref<128x128xbf16, #tpu.memory_space<vmem>>, vector<128x128xbf16>
    %cst_98 = arith.constant dense<0.000000e+00> : vector<8x128xf32>
    %558 = tpu.matmul %556, %557, %cst_98 {dimension_numbers = #tpu.dot_dimension_numbers<[1], [0], [0], [1], [0, 0, 1, 1], [], []>} : vector<8x128xbf16>, vector<128x128xbf16>, vector<8x128xf32> -> vector<8x128xf32>
    %c0_99 = arith.constant 0 : index
    %c0_100 = arith.constant 0 : index
    %559 = vector.load %arg9[%c0_99, %c0_100] : memref<1x128xf32, #tpu.memory_space<vmem>>, vector<1x128xf32>
    %560 = vector.broadcast %559 : vector<1x128xf32> to vector<8x128xf32>
    %561 = arith.addf %558, %560 : vector<8x128xf32>
    %c0_101 = arith.constant 0 : index
    %c0_102 = arith.constant 0 : index
    %562 = vector.load %arg10[%c0_101, %c0_102] : memref<8x128xf32, #tpu.memory_space<vmem>>, vector<8x128xf32>
    tpu.vector_store %arg10[%c0_101, %c0_102], %561 {strides = array<i32>} : memref<8x128xf32, #tpu.memory_space<vmem>>, vector<8x128xf32>,
    return
  }
  func.func @transform_0(%arg0: i32) -> (i32, i32) {
    %c0_i32 = arith.constant 0 : i32
    %c0_i32_0 = arith.constant 0 : i32
    return %arg0, %c0_i32 : i32, i32
  }
  func.func @transform_1(%arg0: i32) -> (i32, i32) {
    %c0_i32 = arith.constant 0 : i32
    %c0_i32_0 = arith.constant 0 : i32
    %c0_i32_1 = arith.constant 0 : i32
    return %c0_i32, %c0_i32_0 : i32, i32
  }
  func.func @transform_2(%arg0: i32) -> (i32, i32) {
    %c0_i32 = arith.constant 0 : i32
    %c0_i32_0 = arith.constant 0 : i32
    %c0_i32_1 = arith.constant 0 : i32
    return %c0_i32, %c0_i32_0 : i32, i32
  }
  func.func @transform_3(%arg0: i32) -> (i32, i32) {
    %c0_i32 = arith.constant 0 : i32
    %c0_i32_0 = arith.constant 0 : i32
    %c0_i32_1 = arith.constant 0 : i32
    return %c0_i32, %c0_i32_0 : i32, i32
  }
  func.func @transform_4(%arg0: i32) -> (i32, i32) {
    %c0_i32 = arith.constant 0 : i32
    %c0_i32_0 = arith.constant 0 : i32
    %c0_i32_1 = arith.constant 0 : i32
    return %c0_i32, %c0_i32_0 : i32, i32
  }
  func.func @transform_5(%arg0: i32) -> (i32, i32) {
    %c0_i32 = arith.constant 0 : i32
    %c0_i32_0 = arith.constant 0 : i32
    %c0_i32_1 = arith.constant 0 : i32
    return %c0_i32, %c0_i32_0 : i32, i32
  }
  func.func @transform_6(%arg0: i32) -> (i32, i32) {
    %c0_i32 = arith.constant 0 : i32
    %c0_i32_0 = arith.constant 0 : i32
    %c0_i32_1 = arith.constant 0 : i32
    return %c0_i32, %c0_i32_0 : i32, i32
  }
  func.func @transform_7(%arg0: i32) -> (i32, i32) {
    %c0_i32 = arith.constant 0 : i32
    %c0_i32_0 = arith.constant 0 : i32
    %c0_i32_1 = arith.constant 0 : i32
    return %c0_i32, %c0_i32_0 : i32, i32
  }
  func.func @transform_8(%arg0: i32) -> (i32, i32) {
    %c0_i32 = arith.constant 0 : i32
    %c0_i32_0 = arith.constant 0 : i32
    %c0_i32_1 = arith.constant 0 : i32
    return %c0_i32, %c0_i32_0 : i32, i32
  }
  func.func @transform_9(%arg0: i32) -> (i32, i32) {
    %c0_i32 = arith.constant 0 : i32
    %c0_i32_0 = arith.constant 0 : i32
    return %arg0, %c0_i32 : i32, i32
  }
}

</mosaic_0001>

<llo_original>
// kernel: tpu_custom_call.1
$region0: #{tpu_custom_call.1}
  #allocation0 [shape = 'u32[]', space=smem, size = 0x4, offset = 0x4, fixed_abs, tag = 'smem constant byte address 0x4 - core index']
  #allocation1 [shape = 'u32[144,128]{1,0:T(1,128)}', space=vmem, size = 0x12000, scoped, tag = 'internal scratch']
  #allocation2 [shape = 'f32[64,512]{1,0:T(8,128)}', space=vmem, size = 0x20000, scoped, tag = 'scratch operand']
  %s0 = inlined_call_operand.vmem [shape: s32[8,128], index: 0, kind: input, shape index: {}]
  %s1 = inlined_call_operand.vmem [shape: bf16[64,32], index: 1, kind: input, shape index: {}]
  %s2 = inlined_call_operand.hbm [shape: bf16[32,512], index: 2, kind: input, shape index: {}]
  %s3 = inlined_call_operand.hbm [shape: bf16[128,512], index: 3, kind: input, shape index: {}]
  %s4 = inlined_call_operand.hbm [shape: f32[1,512], index: 4, kind: input, shape index: {}]
  %s5 = inlined_call_operand.hbm [shape: bf16[256,512], index: 5, kind: input, shape index: {}]
  %s6 = inlined_call_operand.hbm [shape: f32[1,512], index: 6, kind: input, shape index: {}]
  %s7 = inlined_call_operand.vmem [shape: bf16[128,128], index: 7, kind: input, shape index: {}]
  %s8 = inlined_call_operand.vmem [shape: f32[1,128], index: 8, kind: input, shape index: {}]
  %s9 = inlined_call_operand.hbm [shape: f32[8,128], index: 9, kind: output, shape index: {}]
  %s10 = sld [smem:[#allocation0]]
  $region66: #{tpu_custom_call.1} parent=0
    _
  %s12 = ssub.s32 1, %s10
  %s13 = scalar_select 0, %s12, %s10
  $region1: #{tpu_custom_call.1} parent=0
    #allocation3 [shape = 'u8[32768]{0}', space=vmem, size = 0x8000, scoped, tag = 'input window, operand 2, single buffered']
    #allocation4 [shape = 's32[1]{0}', space=sflag, size = 0x4, scoped, tag = 'scoped memory for tpu_custom_call.1']
    #allocation5 [shape = 's32[1]{0}', space=sflag, size = 0x4, scoped, tag = 'scoped memory for tpu_custom_call.1']
    #allocation6 [shape = 'u8[131072]{0}', space=vmem, size = 0x20000, scoped, tag = 'input window, operand 3, single buffered']
    #allocation7 [shape = 's32[1]{0}', space=sflag, size = 0x4, scoped, tag = 'scoped memory for tpu_custom_call.1']
    #allocation8 [shape = 'u8[2048]{0}', space=vmem, size = 0x800, scoped, tag = 'input window, operand 4, single buffered']
    #allocation9 [shape = 'u8[262144]{0}', space=vmem, size = 0x40000, scoped, tag = 'input window, operand 5, single buffered']
    #allocation10 [shape = 's32[1]{0}', space=sflag, size = 0x4, scoped, tag = 'scoped memory for tpu_custom_call.1']
    #allocation11 [shape = 'u8[2048]{0}', space=vmem, size = 0x800, scoped, tag = 'input window, operand 6, single buffered']
    #allocation12 [shape = 'u8[4096]{0}', space=vmem, size = 0x1000, scoped, tag = 'output window, operand 0, single buffered']
    %14 = vsyncpa [#allocation4], 0
    %15 = vsyncpa [#allocation7], 0
    %16 = vsyncpa [#allocation10], 0
    %17 = vsyncpa [#allocation5], 0
    // Predicated region
    $region2: #{tpu_custom_call.1} parent=1 // pred_check
      _
    $region3: #{tpu_custom_call.1} parent=1 // pred_check_branch
      %19 = sbr.rel (0) target = $region5
    $region4: #{tpu_custom_call.1} parent=1 // pred_region
      _
    $region5: #{tpu_custom_call.1} parent=1 // pred_fallthru
      _
    // Predicated region
    $region6: #{tpu_custom_call.1} parent=1 // pred_check
      _
    $region7: #{tpu_custom_call.1} parent=1 // pred_check_branch
      %21 = sbr.rel (0) target = $region9
    $region8: #{tpu_custom_call.1} parent=1 // pred_region
      _
    $region9: #{tpu_custom_call.1} parent=1 // pred_fallthru
      _
    // Predicated region
    $region10: #{tpu_custom_call.1} parent=1 // pred_check
      _
    $region11: #{tpu_custom_call.1} parent=1 // pred_check_branch
      %23 = sbr.rel (0) target = $region13
    $region12: #{tpu_custom_call.1} parent=1 // pred_region
      %s25 = ssub.s32 1024, 1024
      %26 = vsyncadd [#allocation4], %s25
      %s27 = sshll.u32 [#allocation3], 4
      %s28 = int_to_ptr.vmem [resolvable:$true] %s27
      %33 = dma.hbm_to_vmem [thread:$0]  %s2, 1024, %s28, [#allocation4], 256, 256, 16
    $region13: #{tpu_custom_call.1} parent=1 // pred_fallthru
      _
    // Predicated region
    $region14: #{tpu_custom_call.1} parent=1 // pred_check
      _
    $region15: #{tpu_custom_call.1} parent=1 // pred_check_branch
      %35 = sbr.rel (0) target = $region17
    $region16: #{tpu_custom_call.1} parent=1 // pred_region
      %s37 = ssub.s32 4096, 4096
      %38 = vsyncadd [#allocation7], %s37
      %s39 = sshll.u32 [#allocation6], 4
      %s40 = int_to_ptr.vmem [resolvable:$true] %s39
      %45 = dma.hbm_to_vmem [thread:$0]  %s3, 4096, %s40, [#allocation7], 256, 256, 16
    $region17: #{tpu_custom_call.1} parent=1 // pred_fallthru
      _
    // Predicated region
    $region18: #{tpu_custom_call.1} parent=1 // pred_check
      _
    $region19: #{tpu_custom_call.1} parent=1 // pred_check_branch
      %47 = sbr.rel (0) target = $region21
    $region20: #{tpu_custom_call.1} parent=1 // pred_region
      %s49 = ssub.s32 64, 64
      %50 = vsyncadd [#allocation7], %s49
      %s52 = sshll.u32 [#allocation8], 4
      %s53 = int_to_ptr.vmem [resolvable:$true] %s52
      %55 = dma.hbm_to_vmem [thread:$0]  %s4, 64, %s53, [#allocation7]
    $region21: #{tpu_custom_call.1} parent=1 // pred_fallthru
      _
    // Predicated region
    $region22: #{tpu_custom_call.1} parent=1 // pred_check
      _
    $region23: #{tpu_custom_call.1} parent=1 // pred_check_branch
      %57 = sbr.rel (0) target = $region25
    $region24: #{tpu_custom_call.1} parent=1 // pred_region
      %s59 = ssub.s32 8192, 8192
      %60 = vsyncadd [#allocation10], %s59
      %s61 = sshll.u32 [#allocation9], 4
      %s62 = int_to_ptr.vmem [resolvable:$true] %s61
      %67 = dma.hbm_to_vmem [thread:$0]  %s5, 8192, %s62, [#allocation10], 256, 256, 16
    $region25: #{tpu_custom_call.1} parent=1 // pred_fallthru
      _
    // Predicated region
    $region26: #{tpu_custom_call.1} parent=1 // pred_check
      _
    $region27: #{tpu_custom_call.1} parent=1 // pred_check_branch
      %69 = sbr.rel (0) target = $region29
    $region28: #{tpu_custom_call.1} parent=1 // pred_region
      %s71 = ssub.s32 64, 64
      %72 = vsyncadd [#allocation10], %s71
      %s74 = sshll.u32 [#allocation11], 4
      %s75 = int_to_ptr.vmem [resolvable:$true] %s74
      %77 = dma.hbm_to_vmem [thread:$0]  %s6, 64, %s75, [#allocation10]
    $region29: #{tpu_custom_call.1} parent=1 // pred_fallthru
      _
    // Predicated region
    $region30: #{tpu_custom_call.1} parent=1 // pred_check
      _
    $region31: #{tpu_custom_call.1} parent=1 // pred_check_branch
      %79 = sbr.rel (0) target = $region33
    $region32: #{tpu_custom_call.1} parent=1 // pred_region
      _
    $region33: #{tpu_custom_call.1} parent=1 // pred_fallthru
      _
    // Predicated region
    $region34: #{tpu_custom_call.1} parent=1 // pred_check
      _
    $region35: #{tpu_custom_call.1} parent=1 // pred_check_branch
      %81 = sbr.rel (0) target = $region37
    $region36: #{tpu_custom_call.1} parent=1 // pred_region
      _
    $region37: #{tpu_custom_call.1} parent=1 // pred_fallthru
      _
    // Predicated region
    $region38: #{tpu_custom_call.1} parent=1 // pred_check
      _
    $region39: #{tpu_custom_call.1} parent=1 // pred_check_branch
      %83 = sbr.rel (0) target = $region41
    $region40: #{tpu_custom_call.1} parent=1 // pred_region
      %84 = dma.done [#allocation4], 1024
    $region41: #{tpu_custom_call.1} parent=1 // pred_fallthru
      _
    // Predicated region
    $region42: #{tpu_custom_call.1} parent=1 // pred_check
      _
    $region43: #{tpu_custom_call.1} parent=1 // pred_check_branch
      %86 = sbr.rel (0) target = $region45
    $region44: #{tpu_custom_call.1} parent=1 // pred_region
      %87 = dma.done [#allocation7], 4096
    $region45: #{tpu_custom_call.1} parent=1 // pred_fallthru
      _
    // Predicated region
    $region46: #{tpu_custom_call.1} parent=1 // pred_check
      _
    $region47: #{tpu_custom_call.1} parent=1 // pred_check_branch
      %89 = sbr.rel (0) target = $region49
    $region48: #{tpu_custom_call.1} parent=1 // pred_region
      %90 = dma.done [#allocation7], 64
    $region49: #{tpu_custom_call.1} parent=1 // pred_fallthru
      _
    // Predicated region
    $region50: #{tpu_custom_call.1} parent=1 // pred_check
      _
    $region51: #{tpu_custom_call.1} parent=1 // pred_check_branch
      %92 = sbr.rel (0) target = $region53
    $region52: #{tpu_custom_call.1} parent=1 // pred_region
      %93 = dma.done [#allocation10], 8192
    $region53: #{tpu_custom_call.1} parent=1 // pred_fallthru
      _
    // Predicated region
    $region54: #{tpu_custom_call.1} parent=1 // pred_check
      _
    $region55: #{tpu_custom_call.1} parent=1 // pred_check_branch
      %95 = sbr.rel (0) target = $region57
    $region56: #{tpu_custom_call.1} parent=1 // pred_region
      %96 = dma.done [#allocation10], 64
    $region57: #{tpu_custom_call.1} parent=1 // pred_fallthru
      _
    %v98 = vld [vmem:[#allocation6] sm:$0xff]
    %v99 = vld [vmem:[#allocation6 + $0x8] sm:$0xff]
    %v100 = vld [vmem:[#allocation6 + $0x10] sm:$0xff]
    %v101 = vld [vmem:[#allocation6 + $0x18] sm:$0xff]
    %v102 = vld [vmem:[#allocation6 + $0x20] sm:$0xff]
    %v103 = vld [vmem:[#allocation6 + $0x28] sm:$0xff]
    %v104 = vld [vmem:[#allocation6 + $0x30] sm:$0xff]
    %v105 = vld [vmem:[#allocation6 + $0x38] sm:$0xff]
    %v106 = vld [vmem:[#allocation6 + $0x40] sm:$0xff]
    %v107 = vld [vmem:[#allocation6 + $0x48] sm:$0xff]
    %v108 = vld [vmem:[#allocation6 + $0x50] sm:$0xff]
    %v109 = vld [vmem:[#allocation6 + $0x58] sm:$0xff]
    %v110 = vld [vmem:[#allocation6 + $0x60] sm:$0xff]
    %v111 = vld [vmem:[#allocation6 + $0x68] sm:$0xff]
    %v112 = vld [vmem:[#allocation6 + $0x70] sm:$0xff]
    %v113 = vld [vmem:[#allocation6 + $0x78] sm:$0xff]
    %v114 = vld [vmem:[#allocation6 + $0x80] sm:$0xff]
    %v115 = vld [vmem:[#allocation6 + $0x88] sm:$0xff]
    %v116 = vld [vmem:[#allocation6 + $0x90] sm:$0xff]
    %v117 = vld [vmem:[#allocation6 + $0x98] sm:$0xff]
    %v118 = vld [vmem:[#allocation6 + $0xa0] sm:$0xff]
    %v119 = vld [vmem:[#allocation6 + $0xa8] sm:$0xff]
    %v120 = vld [vmem:[#allocation6 + $0xb0] sm:$0xff]
    %v121 = vld [vmem:[#allocation6 + $0xb8] sm:$0xff]
    %v122 = vld [vmem:[#allocation6 + $0xc0] sm:$0xff]
    %v123 = vld [vmem:[#allocation6 + $0xc8] sm:$0xff]
    %v124 = vld [vmem:[#allocation6 + $0xd0] sm:$0xff]
    %v125 = vld [vmem:[#allocation6 + $0xd8] sm:$0xff]
    %v126 = vld [vmem:[#allocation6 + $0xe0] sm:$0xff]
    %v127 = vld [vmem:[#allocation6 + $0xe8] sm:$0xff]
    %v128 = vld [vmem:[#allocation6 + $0xf0] sm:$0xff]
    %v129 = vld [vmem:[#allocation6 + $0xf8] sm:$0xff]
    %v130 = vld [vmem:[#allocation9] sm:$0xff]
    %v131 = vld [vmem:[#allocation9 + $0x8] sm:$0xff]
    %v132 = vld [vmem:[#allocation9 + $0x10] sm:$0xff]
    %v133 = vld [vmem:[#allocation9 + $0x18] sm:$0xff]
    %v134 = vld [vmem:[#allocation9 + $0x20] sm:$0xff]
    %v135 = vld [vmem:[#allocation9 + $0x28] sm:$0xff]
    %v136 = vld [vmem:[#allocation9 + $0x30] sm:$0xff]
    %v137 = vld [vmem:[#allocation9 + $0x38] sm:$0xff]
    %v138 = vld [vmem:[#allocation9 + $0x40] sm:$0xff]
    %v139 = vld [vmem:[#allocation9 + $0x48] sm:$0xff]
    %v140 = vld [vmem:[#allocation9 + $0x50] sm:$0xff]
    %v141 = vld [vmem:[#allocation9 + $0x58] sm:$0xff]
    %v142 = vld [vmem:[#allocation9 + $0x60] sm:$0xff]
    %v143 = vld [vmem:[#allocation9 + $0x68] sm:$0xff]
    %v144 = vld [vmem:[#allocation9 + $0x70] sm:$0xff]
    %v145 = vld [vmem:[#allocation9 + $0x78] sm:$0xff]
    %v146 = vld [vmem:[#allocation9 + $0x80] sm:$0xff]
    %v147 = vld [vmem:[#allocation9 + $0x88] sm:$0xff]
    %v148 = vld [vmem:[#allocation9 + $0x90] sm:$0xff]
    %v149 = vld [vmem:[#allocation9 + $0x98] sm:$0xff]
    %v150 = vld [vmem:[#allocation9 + $0xa0] sm:$0xff]
    %v151 = vld [vmem:[#allocation9 + $0xa8] sm:$0xff]
    %v152 = vld [vmem:[#allocation9 + $0xb0] sm:$0xff]
    %v153 = vld [vmem:[#allocation9 + $0xb8] sm:$0xff]
    %v154 = vld [vmem:[#allocation9 + $0xc0] sm:$0xff]
    %v155 = vld [vmem:[#allocation9 + $0xc8] sm:$0xff]
    %v156 = vld [vmem:[#allocation9 + $0xd0] sm:$0xff]
    %v157 = vld [vmem:[#allocation9 + $0xd8] sm:$0xff]
    %v158 = vld [vmem:[#allocation9 + $0xe0] sm:$0xff]
    %v159 = vld [vmem:[#allocation9 + $0xe8] sm:$0xff]
    %v160 = vld [vmem:[#allocation9 + $0xf0] sm:$0xff]
    %v161 = vld [vmem:[#allocation9 + $0xf8] sm:$0xff]
    %v162 = vld [vmem:[#allocation9 + $0x100] sm:$0xff]
    %v163 = vld [vmem:[#allocation9 + $0x108] sm:$0xff]
    %v164 = vld [vmem:[#allocation9 + $0x110] sm:$0xff]
    %v165 = vld [vmem:[#allocation9 + $0x118] sm:$0xff]
    %v166 = vld [vmem:[#allocation9 + $0x120] sm:$0xff]
    %v167 = vld [vmem:[#allocation9 + $0x128] sm:$0xff]
    %v168 = vld [vmem:[#allocation9 + $0x130] sm:$0xff]
    %v169 = vld [vmem:[#allocation9 + $0x138] sm:$0xff]
    %v170 = vld [vmem:[#allocation9 + $0x140] sm:$0xff]
    %v171 = vld [vmem:[#allocation9 + $0x148] sm:$0xff]
    %v172 = vld [vmem:[#allocation9 + $0x150] sm:$0xff]
    %v173 = vld [vmem:[#allocation9 + $0x158] sm:$0xff]
    %v174 = vld [vmem:[#allocation9 + $0x160] sm:$0xff]
    %v175 = vld [vmem:[#allocation9 + $0x168] sm:$0xff]
    %v176 = vld [vmem:[#allocation9 + $0x170] sm:$0xff]
    %v177 = vld [vmem:[#allocation9 + $0x178] sm:$0xff]
    %v178 = vld [vmem:[#allocation9 + $0x180] sm:$0xff]
    %v179 = vld [vmem:[#allocation9 + $0x188] sm:$0xff]
    %v180 = vld [vmem:[#allocation9 + $0x190] sm:$0xff]
    %v181 = vld [vmem:[#allocation9 + $0x198] sm:$0xff]
    %v182 = vld [vmem:[#allocation9 + $0x1a0] sm:$0xff]
    %v183 = vld [vmem:[#allocation9 + $0x1a8] sm:$0xff]
    %v184 = vld [vmem:[#allocation9 + $0x1b0] sm:$0xff]
    %v185 = vld [vmem:[#allocation9 + $0x1b8] sm:$0xff]
    %v186 = vld [vmem:[#allocation9 + $0x1c0] sm:$0xff]
    %v187 = vld [vmem:[#allocation9 + $0x1c8] sm:$0xff]
    %v188 = vld [vmem:[#allocation9 + $0x1d0] sm:$0xff]
    %v189 = vld [vmem:[#allocation9 + $0x1d8] sm:$0xff]
    %v190 = vld [vmem:[#allocation9 + $0x1e0] sm:$0xff]
    %v191 = vld [vmem:[#allocation9 + $0x1e8] sm:$0xff]
    %v192 = vld [vmem:[#allocation9 + $0x1f0] sm:$0xff]
    %v193 = vld [vmem:[#allocation9 + $0x1f8] sm:$0xff]
    %v194 = vld [vmem:[#allocation11] sm:$0xf]
    %v195 = vld [vmem:[%s0] sm:$0xff]
    %v196 = vld [vmem:[%s1] sm:$0xf]
    %v197 = vld [vmem:[%s1 + $0x4] sm:$0xf]
    %v198 = vld [vmem:[%s1 + $0x8] sm:$0xf]
    %v199 = vld [vmem:[%s1 + $0xc] sm:$0xf]
    %v200 = vld [vmem:[%s1 + $0x10] sm:$0xf]
    %v201 = vld [vmem:[%s1 + $0x14] sm:$0xf]
    %v202 = vld [vmem:[%s1 + $0x18] sm:$0xf]
    %v203 = vld [vmem:[%s1 + $0x1c] sm:$0xf]
    %v204 = vld [vmem:[#allocation3] sm:$0xff]
    %v205 = vld [vmem:[#allocation3 + $0x8] sm:$0xff]
    %v206 = vld [vmem:[#allocation3 + $0x10] sm:$0xff]
    %v207 = vld [vmem:[#allocation3 + $0x18] sm:$0xff]
    %v208 = vld [vmem:[#allocation3 + $0x20] sm:$0xff]
    %v209 = vld [vmem:[#allocation3 + $0x28] sm:$0xff]
    %v210 = vld [vmem:[#allocation3 + $0x30] sm:$0xff]
    %v211 = vld [vmem:[#allocation3 + $0x38] sm:$0xff]
    %v212 = vld [vmem:[#allocation8] sm:$0xf]
    %v214 = vlaneseq
    %v215 = vshrl.u32 %v214, 7
    %v216 = vsub.s32 0, %v215
    %v217 = vrot.slane %v212, %v216
    %v218 = vlaneseq
    %v219 = vshrl.u32 %v218, 7
    %v220 = vsub.s32 1, %v219
    %v221 = vrot.slane %v212, %v220
    %v222 = vlaneseq
    %v223 = vshrl.u32 %v222, 7
    %v224 = vsub.s32 2, %v223
    %v225 = vrot.slane %v212, %v224
    %v226 = vlaneseq
    %v227 = vshrl.u32 %v226, 7
    %v228 = vsub.s32 3, %v227
    %v229 = vrot.slane %v212, %v228
    %v242 = vunpack.c.l.b16 %v196
    %v243 = vunpack.c.l.b16 %v197
    %v244 = vunpack.c.l.b16 %v198
    %v245 = vunpack.c.l.b16 %v199
    %v246 = vunpack.c.l.b16 %v200
    %v247 = vunpack.c.l.b16 %v201
    %v248 = vunpack.c.l.b16 %v202
    %v249 = vunpack.c.l.b16 %v203
    %v250 = vpack.c.b16 %v243, %v242
    %v251 = vpack.c.b16 %v245, %v244
    %v252 = vpack.c.b16 %v247, %v246
    %v253 = vpack.c.b16 %v249, %v248
    %v262 = vunpack.c.l.b16 %v204
    %v263 = vunpack.c.h.b16 %v204
    %v264 = vunpack.c.l.b16 %v205
    %v265 = vunpack.c.h.b16 %v205
    %v266 = vunpack.c.l.b16 %v206
    %v267 = vunpack.c.h.b16 %v206
    %v268 = vunpack.c.l.b16 %v207
    %v269 = vunpack.c.h.b16 %v207
    %v270 = vunpack.c.l.b16 %v208
    %v271 = vunpack.c.h.b16 %v208
    %v272 = vunpack.c.l.b16 %v209
    %v273 = vunpack.c.h.b16 %v209
    %v274 = vunpack.c.l.b16 %v210
    %v275 = vunpack.c.h.b16 %v210
    %v276 = vunpack.c.l.b16 %v211
    %v277 = vunpack.c.h.b16 %v211
    %v278 = vpack.c.b16 %v266, %v262
    %v279 = vpack.c.b16 %v267, %v263
    %v280 = vpack.c.b16 %v268, %v264
    %v281 = vpack.c.b16 %v269, %v265
    %v282 = vpack.c.b16 %v274, %v270
    %v283 = vpack.c.b16 %v275, %v271
    %v284 = vpack.c.b16 %v276, %v272
    %v285 = vpack.c.b16 %v277, %v273
    %vm294 = vcmask 261120
    %v296 = vsel %vm294, %v250, 0
    %v299 = vsel %vm294, %v251, 0
    %v302 = vsel %vm294, %v252, 0
    %v305 = vsel %vm294, %v253, 0
    %307 = vmatprep.subr.bf16.mxu0 %v279
    %308 = vmatpush1.bf16.msra.mxu0 %v278
    %309 = vmatprep.subr.bf16.mxu0 %v283
    %310 = vmatpush1.bf16.msra.mxu0 %v282
    %311 = vmatprep.subr.bf16.mxu0 0
    %312 = vmatpush1.bf16.msra.mxu0 0
    %313 = vmatprep.subr.bf16.mxu0 0
    %314 = vmatpush1.bf16.msra.mxu0 0
    %315 = vmatprep.subr.bf16.mxu0 0
    %316 = vmatpush1.bf16.msra.mxu0 0
    %317 = vmatprep.subr.bf16.mxu0 0
    %318 = vmatpush1.bf16.msra.mxu0 0
    %319 = vmatprep.subr.bf16.mxu0 0
    %320 = vmatpush1.bf16.msra.mxu0 0
    %321 = vmatprep.subr.bf16.mxu0 0
    %322 = vmatpush1.bf16.msra.mxu0 0
    %323 = vmatprep.subr.bf16.mxu0 0
    %324 = vmatpush1.bf16.msra.mxu0 0
    %325 = vmatprep.subr.bf16.mxu0 0
    %326 = vmatpush1.bf16.msra.mxu0 0
    %327 = vmatprep.subr.bf16.mxu0 0
    %328 = vmatpush1.bf16.msra.mxu0 0
    %329 = vmatprep.subr.bf16.mxu0 0
    %330 = vmatpush1.bf16.msra.mxu0 0
    %331 = vmatprep.subr.bf16.mxu0 0
    %332 = vmatpush1.bf16.msra.mxu0 0
    %333 = vmatprep.subr.bf16.mxu0 0
    %334 = vmatpush1.bf16.msra.mxu0 0
    %335 = vmatprep.subr.bf16.mxu0 0
    %336 = vmatpush1.bf16.msra.mxu0 0
    %337 = vmatprep.subr.bf16.mxu0 0
    %338 = vmatpush1.bf16.msra.mxu0 0
    %339 = vmatprep.mubr.bf16.mxu0 0
    %340 = vmatmul.mubr.bf16.gmra.mrb[0].mxu0 %v296
    %v341 = vpop.f32.mrb[0].mxu0
    %v342 = vadd.f32 %v217, %v341
    %v343 = vpop.f32.mrb[0].mxu0
    %v344 = vadd.f32 %v221, %v343
    %v345 = vpop.f32.mrb[0].mxu0
    %v346 = vadd.f32 %v217, %v345
    %v347 = vpop.f32.mrb[0].mxu0
    %v348 = vadd.f32 %v221, %v347
    %349 = vmatprep.mubr.bf16.mxu0 0
    %350 = vmatmul.mubr.bf16.gmra.mrb[0].mxu0 %v299
    %v351 = vpop.f32.mrb[0].mxu0
    %v352 = vadd.f32 %v217, %v351
    %v353 = vpop.f32.mrb[0].mxu0
    %v354 = vadd.f32 %v221, %v353
    %v355 = vpop.f32.mrb[0].mxu0
    %v356 = vadd.f32 %v217, %v355
    %v357 = vpop.f32.mrb[0].mxu0
    %v358 = vadd.f32 %v221, %v357
    %359 = vmatprep.mubr.bf16.mxu0 0
    %360 = vmatmul.mubr.bf16.gmra.mrb[0].mxu0 %v302
    %v361 = vpop.f32.mrb[0].mxu0
    %v362 = vadd.f32 %v217, %v361
    %v363 = vpop.f32.mrb[0].mxu0
    %v364 = vadd.f32 %v221, %v363
    %v365 = vpop.f32.mrb[0].mxu0
    %v366 = vadd.f32 %v217, %v365
    %v367 = vpop.f32.mrb[0].mxu0
    %v368 = vadd.f32 %v221, %v367
    %369 = vmatprep.mubr.bf16.mxu0 0
    %370 = vmatmul.mubr.bf16.gmra.mrb[0].mxu0 %v305
    %v371 = vpop.f32.mrb[0].mxu0
    %v372 = vadd.f32 %v217, %v371
    %v373 = vpop.f32.mrb[0].mxu0
    %v374 = vadd.f32 %v221, %v373
    %v375 = vpop.f32.mrb[0].mxu0
    %v376 = vadd.f32 %v217, %v375
    %v377 = vpop.f32.mrb[0].mxu0
    %v378 = vadd.f32 %v221, %v377
    %379 = vdwg.mxu0
    %380 = vmatprep.subr.bf16.mxu0 %v281
    %381 = vmatpush1.bf16.msra.mxu0 %v280
    %382 = vmatprep.subr.bf16.mxu0 %v285
    %383 = vmatpush1.bf16.msra.mxu0 %v284
    %384 = vmatprep.subr.bf16.mxu0 0
    %385 = vmatpush1.bf16.msra.mxu0 0
    %386 = vmatprep.subr.bf16.mxu0 0
    %387 = vmatpush1.bf16.msra.mxu0 0
    %388 = vmatprep.subr.bf16.mxu0 0
    %389 = vmatpush1.bf16.msra.mxu0 0
    %390 = vmatprep.subr.bf16.mxu0 0
    %391 = vmatpush1.bf16.msra.mxu0 0
    %392 = vmatprep.subr.bf16.mxu0 0
    %393 = vmatpush1.bf16.msra.mxu0 0
    %394 = vmatprep.subr.bf16.mxu0 0
    %395 = vmatpush1.bf16.msra.mxu0 0
    %396 = vmatprep.subr.bf16.mxu0 0
    %397 = vmatpush1.bf16.msra.mxu0 0
    %398 = vmatprep.subr.bf16.mxu0 0
    %399 = vmatpush1.bf16.msra.mxu0 0
    %400 = vmatprep.subr.bf16.mxu0 0
    %401 = vmatpush1.bf16.msra.mxu0 0
    %402 = vmatprep.subr.bf16.mxu0 0
    %403 = vmatpush1.bf16.msra.mxu0 0
    %404 = vmatprep.subr.bf16.mxu0 0
    %405 = vmatpush1.bf16.msra.mxu0 0
    %406 = vmatprep.subr.bf16.mxu0 0
    %407 = vmatpush1.bf16.msra.mxu0 0
    %408 = vmatprep.subr.bf16.mxu0 0
    %409 = vmatpush1.bf16.msra.mxu0 0
    %410 = vmatprep.subr.bf16.mxu0 0
    %411 = vmatpush1.bf16.msra.mxu0 0
    %412 = vmatprep.mubr.bf16.mxu0 0
    %413 = vmatmul.mubr.bf16.gmra.mrb[0].mxu0 %v296
    %v414 = vpop.f32.mrb[0].mxu0
    %v415 = vadd.f32 %v225, %v414
    %v416 = vpop.f32.mrb[0].mxu0
    %v417 = vadd.f32 %v229, %v416
    %v418 = vpop.f32.mrb[0].mxu0
    %v419 = vadd.f32 %v225, %v418
    %v420 = vpop.f32.mrb[0].mxu0
    %v421 = vadd.f32 %v229, %v420
    %422 = vmatprep.mubr.bf16.mxu0 0
    %423 = vmatmul.mubr.bf16.gmra.mrb[0].mxu0 %v299
    %v424 = vpop.f32.mrb[0].mxu0
    %v425 = vadd.f32 %v225, %v424
    %v426 = vpop.f32.mrb[0].mxu0
    %v427 = vadd.f32 %v229, %v426
    %v428 = vpop.f32.mrb[0].mxu0
    %v429 = vadd.f32 %v225, %v428
    %v430 = vpop.f32.mrb[0].mxu0
    %v431 = vadd.f32 %v229, %v430
    %432 = vmatprep.mubr.bf16.mxu0 0
    %433 = vmatmul.mubr.bf16.gmra.mrb[0].mxu0 %v302
    %v434 = vpop.f32.mrb[0].mxu0
    %v435 = vadd.f32 %v225, %v434
    %v436 = vpop.f32.mrb[0].mxu0
    %v437 = vadd.f32 %v229, %v436
    %v438 = vpop.f32.mrb[0].mxu0
    %v439 = vadd.f32 %v225, %v438
    %v440 = vpop.f32.mrb[0].mxu0
    %v441 = vadd.f32 %v229, %v440
    %442 = vmatprep.mubr.bf16.mxu0 0
    %443 = vmatmul.mubr.bf16.gmra.mrb[0].mxu0 %v305
    %v444 = vpop.f32.mrb[0].mxu0
    %v445 = vadd.f32 %v225, %v444
    %v446 = vpop.f32.mrb[0].mxu0
    %v447 = vadd.f32 %v229, %v446
    %v448 = vpop.f32.mrb[0].mxu0
    %v449 = vadd.f32 %v225, %v448
    %v450 = vpop.f32.mrb[0].mxu0
    %v451 = vadd.f32 %v229, %v450
    %452 = vdwg.mxu0
    %453 = vst [vmem:[#allocation2] sm:$0xff] %v342
    %454 = vst [vmem:[#allocation2 + $0x8] sm:$0xff] %v344
    %455 = vst [vmem:[#allocation2 + $0x10] sm:$0xff] %v415
    %456 = vst [vmem:[#allocation2 + $0x18] sm:$0xff] %v417
    %457 = vst [vmem:[#allocation2 + $0x20] sm:$0xff] %v346
    %458 = vst [vmem:[#allocation2 + $0x28] sm:$0xff] %v348
    %459 = vst [vmem:[#allocation2 + $0x30] sm:$0xff] %v419
    %460 = vst [vmem:[#allocation2 + $0x38] sm:$0xff] %v421
    %461 = vst [vmem:[#allocation2 + $0x40] sm:$0xff] %v352
    %462 = vst [vmem:[#allocation2 + $0x48] sm:$0xff] %v354
    %463 = vst [vmem:[#allocation2 + $0x50] sm:$0xff] %v425
    %464 = vst [vmem:[#allocation2 + $0x58] sm:$0xff] %v427
    %465 = vst [vmem:[#allocation2 + $0x60] sm:$0xff] %v356
    %466 = vst [vmem:[#allocation2 + $0x68] sm:$0xff] %v358
    %467 = vst [vmem:[#allocation2 + $0x70] sm:$0xff] %v429
    %468 = vst [vmem:[#allocation2 + $0x78] sm:$0xff] %v431
    %469 = vst [vmem:[#allocation2 + $0x80] sm:$0xff] %v362
    %470 = vst [vmem:[#allocation2 + $0x88] sm:$0xff] %v364
    %471 = vst [vmem:[#allocation2 + $0x90] sm:$0xff] %v435
    %472 = vst [vmem:[#allocation2 + $0x98] sm:$0xff] %v437
    %473 = vst [vmem:[#allocation2 + $0xa0] sm:$0xff] %v366
    %474 = vst [vmem:[#allocation2 + $0xa8] sm:$0xff] %v368
    %475 = vst [vmem:[#allocation2 + $0xb0] sm:$0xff] %v439
    %476 = vst [vmem:[#allocation2 + $0xb8] sm:$0xff] %v441
    %477 = vst [vmem:[#allocation2 + $0xc0] sm:$0xff] %v372
    %478 = vst [vmem:[#allocation2 + $0xc8] sm:$0xff] %v374
    %479 = vst [vmem:[#allocation2 + $0xd0] sm:$0xff] %v445
    %480 = vst [vmem:[#allocation2 + $0xd8] sm:$0xff] %v447
    %481 = vst [vmem:[#allocation2 + $0xe0] sm:$0xff] %v376
    %482 = vst [vmem:[#allocation2 + $0xe8] sm:$0xff] %v378
    %483 = vst [vmem:[#allocation2 + $0xf0] sm:$0xff] %v449
    %484 = vst [vmem:[#allocation2 + $0xf8] sm:$0xff] %v451
    %vm485 = vcmp.gt.s32.totalorder %v195, 0
    %s486 = smul.u32 0, 4
    %s487 = smul.addr %s486, 8
    %s488 = scalar_lea.vmem [#allocation2], %s487
    %v489 = vld [vmem:[%s488] sm:$0xff]
    %v490 = vld [vmem:[%s488 + $0x8] sm:$0xff]
    %v491 = vld [vmem:[%s488 + $0x10] sm:$0xff]
    %v492 = vld [vmem:[%s488 + $0x18] sm:$0xff]
    %v525 = vunpack.c.l.b16 %v98
    %v526 = vunpack.c.h.b16 %v98
    %v527 = vunpack.c.l.b16 %v99
    %v528 = vunpack.c.h.b16 %v99
    %v529 = vunpack.c.l.b16 %v100
    %v530 = vunpack.c.h.b16 %v100
    %v531 = vunpack.c.l.b16 %v101
    %v532 = vunpack.c.h.b16 %v101
    %v533 = vunpack.c.l.b16 %v102
    %v534 = vunpack.c.h.b16 %v102
    %v535 = vunpack.c.l.b16 %v103
    %v536 = vunpack.c.h.b16 %v103
    %v537 = vunpack.c.l.b16 %v104
    %v538 = vunpack.c.h.b16 %v104
    %v539 = vunpack.c.l.b16 %v105
    %v540 = vunpack.c.h.b16 %v105
    %v541 = vunpack.c.l.b16 %v106
    %v542 = vunpack.c.h.b16 %v106
    %v543 = vunpack.c.l.b16 %v107
    %v544 = vunpack.c.h.b16 %v107
    %v545 = vunpack.c.l.b16 %v108
    %v546 = vunpack.c.h.b16 %v108
    %v547 = vunpack.c.l.b16 %v109
    %v548 = vunpack.c.h.b16 %v109
    %v549 = vunpack.c.l.b16 %v110
    %v550 = vunpack.c.h.b16 %v110
    %v551 = vunpack.c.l.b16 %v111
    %v552 = vunpack.c.h.b16 %v111
    %v553 = vunpack.c.l.b16 %v112
    %v554 = vunpack.c.h.b16 %v112
    %v555 = vunpack.c.l.b16 %v113
    %v556 = vunpack.c.h.b16 %v113
    %v557 = vunpack.c.l.b16 %v114
    %v558 = vunpack.c.h.b16 %v114
    %v559 = vunpack.c.l.b16 %v115
    %v560 = vunpack.c.h.b16 %v115
    %v561 = vunpack.c.l.b16 %v116
    %v562 = vunpack.c.h.b16 %v116
    %v563 = vunpack.c.l.b16 %v117
    %v564 = vunpack.c.h.b16 %v117
    %v565 = vunpack.c.l.b16 %v118
    %v566 = vunpack.c.h.b16 %v118
    %v567 = vunpack.c.l.b16 %v119
    %v568 = vunpack.c.h.b16 %v119
    %v569 = vunpack.c.l.b16 %v120
    %v570 = vunpack.c.h.b16 %v120
    %v571 = vunpack.c.l.b16 %v121
    %v572 = vunpack.c.h.b16 %v121
    %v573 = vunpack.c.l.b16 %v122
    %v574 = vunpack.c.h.b16 %v122
    %v575 = vunpack.c.l.b16 %v123
    %v576 = vunpack.c.h.b16 %v123
    %v577 = vunpack.c.l.b16 %v124
    %v578 = vunpack.c.h.b16 %v124
    %v579 = vunpack.c.l.b16 %v125
    %v580 = vunpack.c.h.b16 %v125
    %v581 = vunpack.c.l.b16 %v126
    %v582 = vunpack.c.h.b16 %v126
    %v583 = vunpack.c.l.b16 %v127
    %v584 = vunpack.c.h.b16 %v127
    %v585 = vunpack.c.l.b16 %v128
    %v586 = vunpack.c.h.b16 %v128
    %v587 = vunpack.c.l.b16 %v129
    %v588 = vunpack.c.h.b16 %v129
    %v589 = vpack.c.b16 %v529, %v525
    %v590 = vpack.c.b16 %v530, %v526
    %v591 = vpack.c.b16 %v531, %v527
    %v592 = vpack.c.b16 %v532, %v528
    %v593 = vpack.c.b16 %v537, %v533
    %v594 = vpack.c.b16 %v538, %v534
    %v595 = vpack.c.b16 %v539, %v535
    %v596 = vpack.c.b16 %v540, %v536
    %v597 = vpack.c.b16 %v545, %v541
    %v598 = vpack.c.b16 %v546, %v542
    %v599 = vpack.c.b16 %v547, %v543
    %v600 = vpack.c.b16 %v548, %v544
    %v601 = vpack.c.b16 %v553, %v549
    %v602 = vpack.c.b16 %v554, %v550
    %v603 = vpack.c.b16 %v555, %v551
    %v604 = vpack.c.b16 %v556, %v552
    %v605 = vpack.c.b16 %v561, %v557
    %v606 = vpack.c.b16 %v562, %v558
    %v607 = vpack.c.b16 %v563, %v559
    %v608 = vpack.c.b16 %v564, %v560
    %v609 = vpack.c.b16 %v569, %v565
    %v610 = vpack.c.b16 %v570, %v566
    %v611 = vpack.c.b16 %v571, %v567
    %v612 = vpack.c.b16 %v572, %v568
    %v613 = vpack.c.b16 %v577, %v573
    %v614 = vpack.c.b16 %v578, %v574
    %v615 = vpack.c.b16 %v579, %v575
    %v616 = vpack.c.b16 %v580, %v576
    %v617 = vpack.c.b16 %v585, %v581
    %v618 = vpack.c.b16 %v586, %v582
    %v619 = vpack.c.b16 %v587, %v583
    %v620 = vpack.c.b16 %v588, %v584
    %653 = vmatprep.subr.bf16.mxu0 %v590
    %654 = vmatpush1.bf16.msra.mxu0 %v589
    %655 = vmatprep.subr.bf16.mxu0 %v594
    %656 = vmatpush1.bf16.msra.mxu0 %v593
    %657 = vmatprep.subr.bf16.mxu0 %v598
    %658 = vmatpush1.bf16.msra.mxu0 %v597
    %659 = vmatprep.subr.bf16.mxu0 %v602
    %660 = vmatpush1.bf16.msra.mxu0 %v601
    %661 = vmatprep.subr.bf16.mxu0 %v606
    %662 = vmatpush1.bf16.msra.mxu0 %v605
    %663 = vmatprep.subr.bf16.mxu0 %v610
    %664 = vmatpush1.bf16.msra.mxu0 %v609
    %665 = vmatprep.subr.bf16.mxu0 %v614
    %666 = vmatpush1.bf16.msra.mxu0 %v613
    %667 = vmatprep.subr.bf16.mxu0 %v618
    %668 = vmatpush1.bf16.msra.mxu0 %v617
    %669 = vmatprep.subr.bf16.mxu0 0
    %670 = vmatpush1.bf16.msra.mxu0 0
    %671 = vmatprep.subr.bf16.mxu0 0
    %672 = vmatpush1.bf16.msra.mxu0 0
    %673 = vmatprep.subr.bf16.mxu0 0
    %674 = vmatpush1.bf16.msra.mxu0 0
    %675 = vmatprep.subr.bf16.mxu0 0
    %676 = vmatpush1.bf16.msra.mxu0 0
    %677 = vmatprep.subr.bf16.mxu0 0
    %678 = vmatpush1.bf16.msra.mxu0 0
    %679 = vmatprep.subr.bf16.mxu0 0
    %680 = vmatpush1.bf16.msra.mxu0 0
    %681 = vmatprep.subr.bf16.mxu0 0
    %682 = vmatpush1.bf16.msra.mxu0 0
    %683 = vmatprep.subr.bf16.mxu0 0
    %684 = vmatpush1.bf16.msra.mxu0 0
    %685 = vmatprep.mubr.bf16.mxu0 0
    %686 = vmatmul.mubr.bf16.gmra.mrb[0].mxu0 0
    %v687 = vpop.f32.mrb[0].mxu0
    %v688 = vadd.f32 0.0, %v687
    %v689 = vpop.f32.mrb[0].mxu0
    %v690 = vadd.f32 0.0, %v689
    %v691 = vpop.f32.mrb[0].mxu0
    %v692 = vpop.f32.mrb[0].mxu0
    %693 = vdwg.mxu0
    %694 = vmatprep.subr.bf16.mxu0 %v592
    %695 = vmatpush1.bf16.msra.mxu0 %v591
    %696 = vmatprep.subr.bf16.mxu0 %v596
    %697 = vmatpush1.bf16.msra.mxu0 %v595
    %698 = vmatprep.subr.bf16.mxu0 %v600
    %699 = vmatpush1.bf16.msra.mxu0 %v599
    %700 = vmatprep.subr.bf16.mxu0 %v604
    %701 = vmatpush1.bf16.msra.mxu0 %v603
    %702 = vmatprep.subr.bf16.mxu0 %v608
    %703 = vmatpush1.bf16.msra.mxu0 %v607
    %704 = vmatprep.subr.bf16.mxu0 %v612
    %705 = vmatpush1.bf16.msra.mxu0 %v611
    %706 = vmatprep.subr.bf16.mxu0 %v616
    %707 = vmatpush1.bf16.msra.mxu0 %v615
    %708 = vmatprep.subr.bf16.mxu0 %v620
    %709 = vmatpush1.bf16.msra.mxu0 %v619
    %710 = vmatprep.subr.bf16.mxu0 0
    %711 = vmatpush1.bf16.msra.mxu0 0
    %712 = vmatprep.subr.bf16.mxu0 0
    %713 = vmatpush1.bf16.msra.mxu0 0
    %714 = vmatprep.subr.bf16.mxu0 0
    %715 = vmatpush1.bf16.msra.mxu0 0
    %716 = vmatprep.subr.bf16.mxu0 0
    %717 = vmatpush1.bf16.msra.mxu0 0
    %718 = vmatprep.subr.bf16.mxu0 0
    %719 = vmatpush1.bf16.msra.mxu0 0
    %720 = vmatprep.subr.bf16.mxu0 0
    %721 = vmatpush1.bf16.msra.mxu0 0
    %722 = vmatprep.subr.bf16.mxu0 0
    %723 = vmatpush1.bf16.msra.mxu0 0
    %724 = vmatprep.subr.bf16.mxu0 0
    %725 = vmatpush1.bf16.msra.mxu0 0
    %726 = vmatprep.mubr.bf16.mxu0 0
    %727 = vmatmul.mubr.bf16.gmra.mrb[0].mxu0 0
    %v728 = vpop.f32.mrb[0].mxu0
    %v729 = vadd.f32 0.0, %v728
    %v730 = vpop.f32.mrb[0].mxu0
    %v731 = vadd.f32 0.0, %v730
    %v732 = vpop.f32.mrb[0].mxu0
    %v733 = vpop.f32.mrb[0].mxu0
    %734 = vdwg.mxu0
    %v735 = vadd.f32 %v489, %v688
    %v736 = vadd.f32 %v490, %v690
    %v737 = vadd.f32 %v491, %v729
    %v738 = vadd.f32 %v492, %v731
    %v739 = vxor.u32 %v735, 2147483648
    %v740 = vmul.f32 %v739, 1.442695
    %v741 = vpow.pop %v740
    %v742 = vadd.f32 %v741, 1.0
    %v743 = vrcp.pop %v742
    %v744 = vmul.f32 1.0, %v743
    %v745 = vxor.u32 %v736, 2147483648
    %v746 = vmul.f32 %v745, 1.442695
    %v747 = vpow.pop %v746
    %v748 = vadd.f32 %v747, 1.0
    %v749 = vrcp.pop %v748
    %v750 = vmul.f32 1.0, %v749
    %v751 = vtanh.pop %v737
    %v752 = vxor.u32 %v738, 2147483648
    %v753 = vmul.f32 %v752, 1.442695
    %v754 = vpow.pop %v753
    %v755 = vadd.f32 %v754, 1.0
    %v756 = vrcp.pop %v755
    %v757 = vmul.f32 1.0, %v756
    %v758 = vmul.f32 %v750, 0.0
    %v759 = vmul.f32 %v744, %v751
    %v760 = vadd.f32 %v758, %v759
    %v761 = vtanh.pop %v760
    %v762 = vmul.f32 %v757, %v761
    %v763 = vsel %vm485, %v762, 0.0
    %v764 = vsel %vm485, %v760, 0.0
    %v765 = vpack.c.bf16 %v763, %v763
    %v766 = vpack.c.bf16 0.0, 0.0
    %v831 = vunpack.c.l.b16 %v130
    %v832 = vunpack.c.h.b16 %v130
    %v833 = vunpack.c.l.b16 %v131
    %v834 = vunpack.c.h.b16 %v131
    %v835 = vunpack.c.l.b16 %v132
    %v836 = vunpack.c.h.b16 %v132
    %v837 = vunpack.c.l.b16 %v133
    %v838 = vunpack.c.h.b16 %v133
    %v839 = vunpack.c.l.b16 %v134
    %v840 = vunpack.c.h.b16 %v134
    %v841 = vunpack.c.l.b16 %v135
    %v842 = vunpack.c.h.b16 %v135
    %v843 = vunpack.c.l.b16 %v136
    %v844 = vunpack.c.h.b16 %v136
    %v845 = vunpack.c.l.b16 %v137
    %v846 = vunpack.c.h.b16 %v137
    %v847 = vunpack.c.l.b16 %v138
    %v848 = vunpack.c.h.b16 %v138
    %v849 = vunpack.c.l.b16 %v139
    %v850 = vunpack.c.h.b16 %v139
    %v851 = vunpack.c.l.b16 %v140
    %v852 = vunpack.c.h.b16 %v140
    %v853 = vunpack.c.l.b16 %v141
    %v854 = vunpack.c.h.b16 %v141
    %v855 = vunpack.c.l.b16 %v142
    %v856 = vunpack.c.h.b16 %v142
    %v857 = vunpack.c.l.b16 %v143
    %v858 = vunpack.c.h.b16 %v143
    %v859 = vunpack.c.l.b16 %v144
    %v860 = vunpack.c.h.b16 %v144
    %v861 = vunpack.c.l.b16 %v145
    %v862 = vunpack.c.h.b16 %v145
    %v863 = vunpack.c.l.b16 %v146
    %v864 = vunpack.c.h.b16 %v146
    %v865 = vunpack.c.l.b16 %v147
    %v866 = vunpack.c.h.b16 %v147
    %v867 = vunpack.c.l.b16 %v148
    %v868 = vunpack.c.h.b16 %v148
    %v869 = vunpack.c.l.b16 %v149
    %v870 = vunpack.c.h.b16 %v149
    %v871 = vunpack.c.l.b16 %v150
    %v872 = vunpack.c.h.b16 %v150
    %v873 = vunpack.c.l.b16 %v151
    %v874 = vunpack.c.h.b16 %v151
    %v875 = vunpack.c.l.b16 %v152
    %v876 = vunpack.c.h.b16 %v152
    %v877 = vunpack.c.l.b16 %v153
    %v878 = vunpack.c.h.b16 %v153
    %v879 = vunpack.c.l.b16 %v154
    %v880 = vunpack.c.h.b16 %v154
    %v881 = vunpack.c.l.b16 %v155
    %v882 = vunpack.c.h.b16 %v155
    %v883 = vunpack.c.l.b16 %v156
    %v884 = vunpack.c.h.b16 %v156
    %v885 = vunpack.c.l.b16 %v157
    %v886 = vunpack.c.h.b16 %v157
    %v887 = vunpack.c.l.b16 %v158
    %v888 = vunpack.c.h.b16 %v158
    %v889 = vunpack.c.l.b16 %v159
    %v890 = vunpack.c.h.b16 %v159
    %v891 = vunpack.c.l.b16 %v160
    %v892 = vunpack.c.h.b16 %v160
    %v893 = vunpack.c.l.b16 %v161
    %v894 = vunpack.c.h.b16 %v161
    %v895 = vunpack.c.l.b16 %v162
    %v896 = vunpack.c.h.b16 %v162
    %v897 = vunpack.c.l.b16 %v163
    %v898 = vunpack.c.h.b16 %v163
    %v899 = vunpack.c.l.b16 %v164
    %v900 = vunpack.c.h.b16 %v164
    %v901 = vunpack.c.l.b16 %v165
    %v902 = vunpack.c.h.b16 %v165
    %v903 = vunpack.c.l.b16 %v166
    %v904 = vunpack.c.h.b16 %v166
    %v905 = vunpack.c.l.b16 %v167
    %v906 = vunpack.c.h.b16 %v167
    %v907 = vunpack.c.l.b16 %v168
    %v908 = vunpack.c.h.b16 %v168
    %v909 = vunpack.c.l.b16 %v169
    %v910 = vunpack.c.h.b16 %v169
    %v911 = vunpack.c.l.b16 %v170
    %v912 = vunpack.c.h.b16 %v170
    %v913 = vunpack.c.l.b16 %v171
    %v914 = vunpack.c.h.b16 %v171
    %v915 = vunpack.c.l.b16 %v172
    %v916 = vunpack.c.h.b16 %v172
    %v917 = vunpack.c.l.b16 %v173
    %v918 = vunpack.c.h.b16 %v173
    %v919 = vunpack.c.l.b16 %v174
    %v920 = vunpack.c.h.b16 %v174
    %v921 = vunpack.c.l.b16 %v175
    %v922 = vunpack.c.h.b16 %v175
    %v923 = vunpack.c.l.b16 %v176
    %v924 = vunpack.c.h.b16 %v176
    %v925 = vunpack.c.l.b16 %v177
    %v926 = vunpack.c.h.b16 %v177
    %v927 = vunpack.c.l.b16 %v178
    %v928 = vunpack.c.h.b16 %v178
    %v929 = vunpack.c.l.b16 %v179
    %v930 = vunpack.c.h.b16 %v179
    %v931 = vunpack.c.l.b16 %v180
    %v932 = vunpack.c.h.b16 %v180
    %v933 = vunpack.c.l.b16 %v181
    %v934 = vunpack.c.h.b16 %v181
    %v935 = vunpack.c.l.b16 %v182
    %v936 = vunpack.c.h.b16 %v182
    %v937 = vunpack.c.l.b16 %v183
    %v938 = vunpack.c.h.b16 %v183
    %v939 = vunpack.c.l.b16 %v184
    %v940 = vunpack.c.h.b16 %v184
    %v941 = vunpack.c.l.b16 %v185
    %v942 = vunpack.c.h.b16 %v185
    %v943 = vunpack.c.l.b16 %v186
    %v944 = vunpack.c.h.b16 %v186
    %v945 = vunpack.c.l.b16 %v187
    %v946 = vunpack.c.h.b16 %v187
    %v947 = vunpack.c.l.b16 %v188
    %v948 = vunpack.c.h.b16 %v188
    %v949 = vunpack.c.l.b16 %v189
    %v950 = vunpack.c.h.b16 %v189
    %v951 = vunpack.c.l.b16 %v190
    %v952 = vunpack.c.h.b16 %v190
    %v953 = vunpack.c.l.b16 %v191
    %v954 = vunpack.c.h.b16 %v191
    %v955 = vunpack.c.l.b16 %v192
    %v956 = vunpack.c.h.b16 %v192
    %v957 = vunpack.c.l.b16 %v193
    %v958 = vunpack.c.h.b16 %v193
    %v959 = vpack.c.b16 %v835, %v831
    %v960 = vpack.c.b16 %v836, %v832
    %v961 = vpack.c.b16 %v837, %v833
    %v962 = vpack.c.b16 %v838, %v834
    %v963 = vpack.c.b16 %v843, %v839
    %v964 = vpack.c.b16 %v844, %v840
    %v965 = vpack.c.b16 %v845, %v841
    %v966 = vpack.c.b16 %v846, %v842
    %v967 = vpack.c.b16 %v851, %v847
    %v968 = vpack.c.b16 %v852, %v848
    %v969 = vpack.c.b16 %v853, %v849
    %v970 = vpack.c.b16 %v854, %v850
    %v971 = vpack.c.b16 %v859, %v855
    %v972 = vpack.c.b16 %v860, %v856
    %v973 = vpack.c.b16 %v861, %v857
    %v974 = vpack.c.b16 %v862, %v858
    %v975 = vpack.c.b16 %v867, %v863
    %v976 = vpack.c.b16 %v868, %v864
    %v977 = vpack.c.b16 %v869, %v865
    %v978 = vpack.c.b16 %v870, %v866
    %v979 = vpack.c.b16 %v875, %v871
    %v980 = vpack.c.b16 %v876, %v872
    %v981 = vpack.c.b16 %v877, %v873
    %v982 = vpack.c.b16 %v878, %v874
    %v983 = vpack.c.b16 %v883, %v879
    %v984 = vpack.c.b16 %v884, %v880
    %v985 = vpack.c.b16 %v885, %v881
    %v986 = vpack.c.b16 %v886, %v882
    %v987 = vpack.c.b16 %v891, %v887
    %v988 = vpack.c.b16 %v892, %v888
    %v989 = vpack.c.b16 %v893, %v889
    %v990 = vpack.c.b16 %v894, %v890
    %v991 = vpack.c.b16 %v899, %v895
    %v992 = vpack.c.b16 %v900, %v896
    %v993 = vpack.c.b16 %v901, %v897
    %v994 = vpack.c.b16 %v902, %v898
    %v995 = vpack.c.b16 %v907, %v903
    %v996 = vpack.c.b16 %v908, %v904
    %v997 = vpack.c.b16 %v909, %v905
    %v998 = vpack.c.b16 %v910, %v906
    %v999 = vpack.c.b16 %v915, %v911
    %v1000 = vpack.c.b16 %v916, %v912
    %v1001 = vpack.c.b16 %v917, %v913
    %v1002 = vpack.c.b16 %v918, %v914
    %v1003 = vpack.c.b16 %v923, %v919
    %v1004 = vpack.c.b16 %v924, %v920
    %v1005 = vpack.c.b16 %v925, %v921
    %v1006 = vpack.c.b16 %v926, %v922
    %v1007 = vpack.c.b16 %v931, %v927
    %v1008 = vpack.c.b16 %v932, %v928
    %v1009 = vpack.c.b16 %v933, %v929
    %v1010 = vpack.c.b16 %v934, %v930
    %v1011 = vpack.c.b16 %v939, %v935
    %v1012 = vpack.c.b16 %v940, %v936
    %v1013 = vpack.c.b16 %v941, %v937
    %v1014 = vpack.c.b16 %v942, %v938
    %v1015 = vpack.c.b16 %v947, %v943
    %v1016 = vpack.c.b16 %v948, %v944
    %v1017 = vpack.c.b16 %v949, %v945
    %v1018 = vpack.c.b16 %v950, %v946
    %v1019 = vpack.c.b16 %v955, %v951
    %v1020 = vpack.c.b16 %v956, %v952
    %v1021 = vpack.c.b16 %v957, %v953
    %v1022 = vpack.c.b16 %v958, %v954
    %1087 = vmatprep.subr.bf16.mxu0 %v960
    %1088 = vmatpush1.bf16.msra.mxu0 %v959
    %1089 = vmatprep.subr.bf16.mxu0 %v964
    %1090 = vmatpush1.bf16.msra.mxu0 %v963
    %1091 = vmatprep.subr.bf16.mxu0 %v968
    %1092 = vmatpush1.bf16.msra.mxu0 %v967
    %1093 = vmatprep.subr.bf16.mxu0 %v972
    %1094 = vmatpush1.bf16.msra.mxu0 %v971
    %1095 = vmatprep.subr.bf16.mxu0 %v976
    %1096 = vmatpush1.bf16.msra.mxu0 %v975
    %1097 = vmatprep.subr.bf16.mxu0 %v980
    %1098 = vmatpush1.bf16.msra.mxu0 %v979
    %1099 = vmatprep.subr.bf16.mxu0 %v984
    %1100 = vmatpush1.bf16.msra.mxu0 %v983
    %1101 = vmatprep.subr.bf16.mxu0 %v988
    %1102 = vmatpush1.bf16.msra.mxu0 %v987
    %1103 = vmatprep.subr.bf16.mxu0 %v992
    %1104 = vmatpush1.bf16.msra.mxu0 %v991
    %1105 = vmatprep.subr.bf16.mxu0 %v996
    %1106 = vmatpush1.bf16.msra.mxu0 %v995
    %1107 = vmatprep.subr.bf16.mxu0 %v1000
    %1108 = vmatpush1.bf16.msra.mxu0 %v999
    %1109 = vmatprep.subr.bf16.mxu0 %v1004
    %1110 = vmatpush1.bf16.msra.mxu0 %v1003
    %1111 = vmatprep.subr.bf16.mxu0 %v1008
    %1112 = vmatpush1.bf16.msra.mxu0 %v1007
    %1113 = vmatprep.subr.bf16.mxu0 %v1012
    %1114 = vmatpush1.bf16.msra.mxu0 %v1011
    %1115 = vmatprep.subr.bf16.mxu0 %v1016
    %1116 = vmatpush1.bf16.msra.mxu0 %v1015
    %1117 = vmatprep.subr.bf16.mxu0 %v1020
    %1118 = vmatpush1.bf16.msra.mxu0 %v1019
    %1119 = vmatprep.mubr.bf16.mxu0 %v766
    %1120 = vmatmul.mubr.bf16.gmra.mrb[0].mxu0 %v765
    %v1121 = vpop.f32.mrb[0].mxu0
    %v1122 = vadd.f32 0.0, %v1121
    %v1123 = vpop.f32.mrb[0].mxu0
    %v1124 = vadd.f32 0.0, %v1123
    %v1125 = vpop.f32.mrb[0].mxu0
    %v1126 = vpop.f32.mrb[0].mxu0
    %1127 = vdwg.mxu0
    %1128 = vmatprep.subr.bf16.mxu0 %v962
    %1129 = vmatpush1.bf16.msra.mxu0 %v961
    %1130 = vmatprep.subr.bf16.mxu0 %v966
    %1131 = vmatpush1.bf16.msra.mxu0 %v965
    %1132 = vmatprep.subr.bf16.mxu0 %v970
    %1133 = vmatpush1.bf16.msra.mxu0 %v969
    %1134 = vmatprep.subr.bf16.mxu0 %v974
    %1135 = vmatpush1.bf16.msra.mxu0 %v973
    %1136 = vmatprep.subr.bf16.mxu0 %v978
    %1137 = vmatpush1.bf16.msra.mxu0 %v977
    %1138 = vmatprep.subr.bf16.mxu0 %v982
    %1139 = vmatpush1.bf16.msra.mxu0 %v981
    %1140 = vmatprep.subr.bf16.mxu0 %v986
    %1141 = vmatpush1.bf16.msra.mxu0 %v985
    %1142 = vmatprep.subr.bf16.mxu0 %v990
    %1143 = vmatpush1.bf16.msra.mxu0 %v989
    %1144 = vmatprep.subr.bf16.mxu0 %v994
    %1145 = vmatpush1.bf16.msra.mxu0 %v993
    %1146 = vmatprep.subr.bf16.mxu0 %v998
    %1147 = vmatpush1.bf16.msra.mxu0 %v997
    %1148 = vmatprep.subr.bf16.mxu0 %v1002
    %1149 = vmatpush1.bf16.msra.mxu0 %v1001
    %1150 = vmatprep.subr.bf16.mxu0 %v1006
    %1151 = vmatpush1.bf16.msra.mxu0 %v1005
    %1152 = vmatprep.subr.bf16.mxu0 %v1010
    %1153 = vmatpush1.bf16.msra.mxu0 %v1009
    %1154 = vmatprep.subr.bf16.mxu0 %v1014
    %1155 = vmatpush1.bf16.msra.mxu0 %v1013
    %1156 = vmatprep.subr.bf16.mxu0 %v1018
    %1157 = vmatpush1.bf16.msra.mxu0 %v1017
    %1158 = vmatprep.subr.bf16.mxu0 %v1022
    %1159 = vmatpush1.bf16.msra.mxu0 %v1021
    %1160 = vmatprep.mubr.bf16.mxu0 %v766
    %1161 = vmatmul.mubr.bf16.gmra.mrb[0].mxu0 %v765
    %v1162 = vpop.f32.mrb[0].mxu0
    %v1163 = vadd.f32 0.0, %v1162
    %v1164 = vpop.f32.mrb[0].mxu0
    %v1165 = vadd.f32 0.0, %v1164
    %v1166 = vpop.f32.mrb[0].mxu0
    %v1167 = vpop.f32.mrb[0].mxu0
    %1168 = vdwg.mxu0
    %v1170 = vlaneseq
    %v1171 = vshrl.u32 %v1170, 7
    %v1172 = vsub.s32 0, %v1171
    %v1173 = vrot.slane %v194, %v1172
    %v1174 = vlaneseq
    %v1175 = vshrl.u32 %v1174, 7
    %v1176 = vsub.s32 1, %v1175
    %v1177 = vrot.slane %v194, %v1176
    %v1178 = vlaneseq
    %v1179 = vshrl.u32 %v1178, 7
    %v1180 = vsub.s32 2, %v1179
    %v1181 = vrot.slane %v194, %v1180
    %v1182 = vlaneseq
    %v1183 = vshrl.u32 %v1182, 7
    %v1184 = vsub.s32 3, %v1183
    %v1185 = vrot.slane %v194, %v1184
    %v1190 = vadd.f32 %v1173, %v1122
    %v1191 = vadd.f32 %v1177, %v1124
    %v1192 = vadd.f32 %v1181, %v1163
    %v1193 = vadd.f32 %v1185, %v1165
    %v1194 = vxor.u32 %v1190, 2147483648
    %v1195 = vmul.f32 %v1194, 1.442695
    %v1196 = vpow.pop %v1195
    %v1197 = vadd.f32 %v1196, 1.0
    %v1198 = vrcp.pop %v1197
    %v1199 = vmul.f32 1.0, %v1198
    %v1200 = vxor.u32 %v1191, 2147483648
    %v1201 = vmul.f32 %v1200, 1.442695
    %v1202 = vpow.pop %v1201
    %v1203 = vadd.f32 %v1202, 1.0
    %v1204 = vrcp.pop %v1203
    %v1205 = vmul.f32 1.0, %v1204
    %v1206 = vtanh.pop %v1192
    %v1207 = vxor.u32 %v1193, 2147483648
    %v1208 = vmul.f32 %v1207, 1.442695
    %v1209 = vpow.pop %v1208
    %v1210 = vadd.f32 %v1209, 1.0
    %v1211 = vrcp.pop %v1210
    %v1212 = vmul.f32 1.0, %v1211
    %v1213 = vmul.f32 %v1205, 0.0
    %v1214 = vmul.f32 %v1199, %v1206
    %v1215 = vadd.f32 %v1213, %v1214
    %v1216 = vtanh.pop %v1215
    %v1217 = vmul.f32 %v1212, %v1216
    %v1218 = vsel %vm485, %v1217, 0.0
    %v1219 = vsel %vm485, %v1215, 0.0
    %vm1220 = vcmp.gt.s32.totalorder %v195, 1
    %s1221 = smul.u32 1, 4
    %s1222 = smul.addr %s1221, 8
    %s1223 = scalar_lea.vmem [#allocation2], %s1222
    %v1224 = vld [vmem:[%s1223] sm:$0xff]
    %v1225 = vld [vmem:[%s1223 + $0x8] sm:$0xff]
    %v1226 = vld [vmem:[%s1223 + $0x10] sm:$0xff]
    %v1227 = vld [vmem:[%s1223 + $0x18] sm:$0xff]
    %1228 = vmatprep.subr.bf16.mxu0 %v590
    %1229 = vmatpush1.bf16.msra.mxu0 %v589
    %1230 = vmatprep.subr.bf16.mxu0 %v594
    %1231 = vmatpush1.bf16.msra.mxu0 %v593
    %1232 = vmatprep.subr.bf16.mxu0 %v598
    %1233 = vmatpush1.bf16.msra.mxu0 %v597
    %1234 = vmatprep.subr.bf16.mxu0 %v602
    %1235 = vmatpush1.bf16.msra.mxu0 %v601
    %1236 = vmatprep.subr.bf16.mxu0 %v606
    %1237 = vmatpush1.bf16.msra.mxu0 %v605
    %1238 = vmatprep.subr.bf16.mxu0 %v610
    %1239 = vmatpush1.bf16.msra.mxu0 %v609
    %1240 = vmatprep.subr.bf16.mxu0 %v614
    %1241 = vmatpush1.bf16.msra.mxu0 %v613
    %1242 = vmatprep.subr.bf16.mxu0 %v618
    %1243 = vmatpush1.bf16.msra.mxu0 %v617
    %1244 = vmatprep.subr.bf16.mxu0 0
    %1245 = vmatpush1.bf16.msra.mxu0 0
    %1246 = vmatprep.subr.bf16.mxu0 0
    %1247 = vmatpush1.bf16.msra.mxu0 0
    %1248 = vmatprep.subr.bf16.mxu0 0
    %1249 = vmatpush1.bf16.msra.mxu0 0
    %1250 = vmatprep.subr.bf16.mxu0 0
    %1251 = vmatpush1.bf16.msra.mxu0 0
    %1252 = vmatprep.subr.bf16.mxu0 0
    %1253 = vmatpush1.bf16.msra.mxu0 0
    %1254 = vmatprep.subr.bf16.mxu0 0
    %1255 = vmatpush1.bf16.msra.mxu0 0
    %1256 = vmatprep.subr.bf16.mxu0 0
    %1257 = vmatpush1.bf16.msra.mxu0 0
    %1258 = vmatprep.subr.bf16.mxu0 0
    %1259 = vmatpush1.bf16.msra.mxu0 0
    %1260 = vmatprep.mubr.bf16.mxu0 0
    %1261 = vmatmul.mubr.bf16.gmra.mrb[0].mxu0 %v765
    %v1262 = vpop.f32.mrb[0].mxu0
    %v1263 = vadd.f32 0.0, %v1262
    %v1264 = vpop.f32.mrb[0].mxu0
    %v1265 = vadd.f32 0.0, %v1264
    %v1266 = vpop.f32.mrb[0].mxu0
    %v1267 = vpop.f32.mrb[0].mxu0
    %1268 = vdwg.mxu0
    %1269 = vmatprep.subr.bf16.mxu0 %v592
    %1270 = vmatpush1.bf16.msra.mxu0 %v591
    %1271 = vmatprep.subr.bf16.mxu0 %v596
    %1272 = vmatpush1.bf16.msra.mxu0 %v595
    %1273 = vmatprep.subr.bf16.mxu0 %v600
    %1274 = vmatpush1.bf16.msra.mxu0 %v599
    %1275 = vmatprep.subr.bf16.mxu0 %v604
    %1276 = vmatpush1.bf16.msra.mxu0 %v603
    %1277 = vmatprep.subr.bf16.mxu0 %v608
    %1278 = vmatpush1.bf16.msra.mxu0 %v607
    %1279 = vmatprep.subr.bf16.mxu0 %v612
    %1280 = vmatpush1.bf16.msra.mxu0 %v611
    %1281 = vmatprep.subr.bf16.mxu0 %v616
    %1282 = vmatpush1.bf16.msra.mxu0 %v615
    %1283 = vmatprep.subr.bf16.mxu0 %v620
    %1284 = vmatpush1.bf16.msra.mxu0 %v619
    %1285 = vmatprep.subr.bf16.mxu0 0
    %1286 = vmatpush1.bf16.msra.mxu0 0
    %1287 = vmatprep.subr.bf16.mxu0 0
    %1288 = vmatpush1.bf16.msra.mxu0 0
    %1289 = vmatprep.subr.bf16.mxu0 0
    %1290 = vmatpush1.bf16.msra.mxu0 0
    %1291 = vmatprep.subr.bf16.mxu0 0
    %1292 = vmatpush1.bf16.msra.mxu0 0
    %1293 = vmatprep.subr.bf16.mxu0 0
    %1294 = vmatpush1.bf16.msra.mxu0 0
    %1295 = vmatprep.subr.bf16.mxu0 0
    %1296 = vmatpush1.bf16.msra.mxu0 0
    %1297 = vmatprep.subr.bf16.mxu0 0
    %1298 = vmatpush1.bf16.msra.mxu0 0
    %1299 = vmatprep.subr.bf16.mxu0 0
    %1300 = vmatpush1.bf16.msra.mxu0 0
    %1301 = vmatprep.mubr.bf16.mxu0 0
    %1302 = vmatmul.mubr.bf16.gmra.mrb[0].mxu0 %v765
    %v1303 = vpop.f32.mrb[0].mxu0
    %v1304 = vadd.f32 0.0, %v1303
    %v1305 = vpop.f32.mrb[0].mxu0
    %v1306 = vadd.f32 0.0, %v1305
    %v1307 = vpop.f32.mrb[0].mxu0
    %v1308 = vpop.f32.mrb[0].mxu0
    %1309 = vdwg.mxu0
    %v1310 = vadd.f32 %v1224, %v1263
    %v1311 = vadd.f32 %v1225, %v1265
    %v1312 = vadd.f32 %v1226, %v1304
    %v1313 = vadd.f32 %v1227, %v1306
    %v1314 = vxor.u32 %v1310, 2147483648
    %v1315 = vmul.f32 %v1314, 1.442695
    %v1316 = vpow.pop %v1315
    %v1317 = vadd.f32 %v1316, 1.0
    %v1318 = vrcp.pop %v1317
    %v1319 = vmul.f32 1.0, %v1318
    %v1320 = vxor.u32 %v1311, 2147483648
    %v1321 = vmul.f32 %v1320, 1.442695
    %v1322 = vpow.pop %v1321
    %v1323 = vadd.f32 %v1322, 1.0
    %v1324 = vrcp.pop %v1323
    %v1325 = vmul.f32 1.0, %v1324
    %v1326 = vtanh.pop %v1312
    %v1327 = vxor.u32 %v1313, 2147483648
    %v1328 = vmul.f32 %v1327, 1.442695
    %v1329 = vpow.pop %v1328
    %v1330 = vadd.f32 %v1329, 1.0
    %v1331 = vrcp.pop %v1330
    %v1332 = vmul.f32 1.0, %v1331
    %v1333 = vmul.f32 %v1325, %v764
    %v1334 = vmul.f32 %v1319, %v1326
    %v1335 = vadd.f32 %v1333, %v1334
    %v1336 = vtanh.pop %v1335
    %v1337 = vmul.f32 %v1332, %v1336
    %v1338 = vsel %vm1220, %v1337, %v763
    %v1339 = vsel %vm1220, %v1335, %v764
    %v1340 = vpack.c.bf16 %v1338, %v1338
    %v1341 = vpack.c.bf16 %v1218, %v1218
    %1342 = vmatprep.subr.bf16.mxu0 %v960
    %1343 = vmatpush1.bf16.msra.mxu0 %v959
    %1344 = vmatprep.subr.bf16.mxu0 %v964
    %1345 = vmatpush1.bf16.msra.mxu0 %v963
    %1346 = vmatprep.subr.bf16.mxu0 %v968
    %1347 = vmatpush1.bf16.msra.mxu0 %v967
    %1348 = vmatprep.subr.bf16.mxu0 %v972
    %1349 = vmatpush1.bf16.msra.mxu0 %v971
    %1350 = vmatprep.subr.bf16.mxu0 %v976
    %1351 = vmatpush1.bf16.msra.mxu0 %v975
    %1352 = vmatprep.subr.bf16.mxu0 %v980
    %1353 = vmatpush1.bf16.msra.mxu0 %v979
    %1354 = vmatprep.subr.bf16.mxu0 %v984
    %1355 = vmatpush1.bf16.msra.mxu0 %v983
    %1356 = vmatprep.subr.bf16.mxu0 %v988
    %1357 = vmatpush1.bf16.msra.mxu0 %v987
    %1358 = vmatprep.subr.bf16.mxu0 %v992
    %1359 = vmatpush1.bf16.msra.mxu0 %v991
    %1360 = vmatprep.subr.bf16.mxu0 %v996
    %1361 = vmatpush1.bf16.msra.mxu0 %v995
    %1362 = vmatprep.subr.bf16.mxu0 %v1000
    %1363 = vmatpush1.bf16.msra.mxu0 %v999
    %1364 = vmatprep.subr.bf16.mxu0 %v1004
    %1365 = vmatpush1.bf16.msra.mxu0 %v1003
    %1366 = vmatprep.subr.bf16.mxu0 %v1008
    %1367 = vmatpush1.bf16.msra.mxu0 %v1007
    %1368 = vmatprep.subr.bf16.mxu0 %v1012
    %1369 = vmatpush1.bf16.msra.mxu0 %v1011
    %1370 = vmatprep.subr.bf16.mxu0 %v1016
    %1371 = vmatpush1.bf16.msra.mxu0 %v1015
    %1372 = vmatprep.subr.bf16.mxu0 %v1020
    %1373 = vmatpush1.bf16.msra.mxu0 %v1019
    %1374 = vmatprep.mubr.bf16.mxu0 %v1341
    %1375 = vmatmul.mubr.bf16.gmra.mrb[0].mxu0 %v1340
    %v1376 = vpop.f32.mrb[0].mxu0
    %v1377 = vadd.f32 0.0, %v1376
    %v1378 = vpop.f32.mrb[0].mxu0
    %v1379 = vadd.f32 0.0, %v1378
    %v1380 = vpop.f32.mrb[0].mxu0
    %v1381 = vpop.f32.mrb[0].mxu0
    %1382 = vdwg.mxu0
    %1383 = vmatprep.subr.bf16.mxu0 %v962
    %1384 = vmatpush1.bf16.msra.mxu0 %v961
    %1385 = vmatprep.subr.bf16.mxu0 %v966
    %1386 = vmatpush1.bf16.msra.mxu0 %v965
    %1387 = vmatprep.subr.bf16.mxu0 %v970
    %1388 = vmatpush1.bf16.msra.mxu0 %v969
    %1389 = vmatprep.subr.bf16.mxu0 %v974
    %1390 = vmatpush1.bf16.msra.mxu0 %v973
    %1391 = vmatprep.subr.bf16.mxu0 %v978
    %1392 = vmatpush1.bf16.msra.mxu0 %v977
    %1393 = vmatprep.subr.bf16.mxu0 %v982
    %1394 = vmatpush1.bf16.msra.mxu0 %v981
    %1395 = vmatprep.subr.bf16.mxu0 %v986
    %1396 = vmatpush1.bf16.msra.mxu0 %v985
    %1397 = vmatprep.subr.bf16.mxu0 %v990
    %1398 = vmatpush1.bf16.msra.mxu0 %v989
    %1399 = vmatprep.subr.bf16.mxu0 %v994
    %1400 = vmatpush1.bf16.msra.mxu0 %v993
    %1401 = vmatprep.subr.bf16.mxu0 %v998
    %1402 = vmatpush1.bf16.msra.mxu0 %v997
    %1403 = vmatprep.subr.bf16.mxu0 %v1002
    %1404 = vmatpush1.bf16.msra.mxu0 %v1001
    %1405 = vmatprep.subr.bf16.mxu0 %v1006
    %1406 = vmatpush1.bf16.msra.mxu0 %v1005
    %1407 = vmatprep.subr.bf16.mxu0 %v1010
    %1408 = vmatpush1.bf16.msra.mxu0 %v1009
    %1409 = vmatprep.subr.bf16.mxu0 %v1014
    %1410 = vmatpush1.bf16.msra.mxu0 %v1013
    %1411 = vmatprep.subr.bf16.mxu0 %v1018
    %1412 = vmatpush1.bf16.msra.mxu0 %v1017
    %1413 = vmatprep.subr.bf16.mxu0 %v1022
    %1414 = vmatpush1.bf16.msra.mxu0 %v1021
    %1415 = vmatprep.mubr.bf16.mxu0 %v1341
    %1416 = vmatmul.mubr.bf16.gmra.mrb[0].mxu0 %v1340
    %v1417 = vpop.f32.mrb[0].mxu0
    %v1418 = vadd.f32 0.0, %v1417
    %v1419 = vpop.f32.mrb[0].mxu0
    %v1420 = vadd.f32 0.0, %v1419
    %v1421 = vpop.f32.mrb[0].mxu0
    %v1422 = vpop.f32.mrb[0].mxu0
    %1423 = vdwg.mxu0
    %v1424 = vadd.f32 %v1173, %v1377
    %v1425 = vadd.f32 %v1177, %v1379
    %v1426 = vadd.f32 %v1181, %v1418
    %v1427 = vadd.f32 %v1185, %v1420
    %v1428 = vxor.u32 %v1424, 2147483648
    %v1429 = vmul.f32 %v1428, 1.442695
    %v1430 = vpow.pop %v1429
    %v1431 = vadd.f32 %v1430, 1.0
    %v1432 = vrcp.pop %v1431
    %v1433 = vmul.f32 1.0, %v1432
    %v1434 = vxor.u32 %v1425, 2147483648
    %v1435 = vmul.f32 %v1434, 1.442695
    %v1436 = vpow.pop %v1435
    %v1437 = vadd.f32 %v1436, 1.0
    %v1438 = vrcp.pop %v1437
    %v1439 = vmul.f32 1.0, %v1438
    %v1440 = vtanh.pop %v1426
    %v1441 = vxor.u32 %v1427, 2147483648
    %v1442 = vmul.f32 %v1441, 1.442695
    %v1443 = vpow.pop %v1442
    %v1444 = vadd.f32 %v1443, 1.0
    %v1445 = vrcp.pop %v1444
    %v1446 = vmul.f32 1.0, %v1445
    %v1447 = vmul.f32 %v1439, %v1219
    %v1448 = vmul.f32 %v1433, %v1440
    %v1449 = vadd.f32 %v1447, %v1448
    %v1450 = vtanh.pop %v1449
    %v1451 = vmul.f32 %v1446, %v1450
    %v1452 = vsel %vm1220, %v1451, %v1218
    %v1453 = vsel %vm1220, %v1449, %v1219
    %vm1454 = vcmp.gt.s32.totalorder %v195, 2
    %s1455 = smul.u32 2, 4
    %s1456 = smul.addr %s1455, 8
    %s1457 = scalar_lea.vmem [#allocation2], %s1456
    %v1458 = vld [vmem:[%s1457] sm:$0xff]
    %v1459 = vld [vmem:[%s1457 + $0x8] sm:$0xff]
    %v1460 = vld [vmem:[%s1457 + $0x10] sm:$0xff]
    %v1461 = vld [vmem:[%s1457 + $0x18] sm:$0xff]
    %1462 = vmatprep.subr.bf16.mxu0 %v590
    %1463 = vmatpush1.bf16.msra.mxu0 %v589
    %1464 = vmatprep.subr.bf16.mxu0 %v594
    %1465 = vmatpush1.bf16.msra.mxu0 %v593
    %1466 = vmatprep.subr.bf16.mxu0 %v598
    %1467 = vmatpush1.bf16.msra.mxu0 %v597
    %1468 = vmatprep.subr.bf16.mxu0 %v602
    %1469 = vmatpush1.bf16.msra.mxu0 %v601
    %1470 = vmatprep.subr.bf16.mxu0 %v606
    %1471 = vmatpush1.bf16.msra.mxu0 %v605
    %1472 = vmatprep.subr.bf16.mxu0 %v610
    %1473 = vmatpush1.bf16.msra.mxu0 %v609
    %1474 = vmatprep.subr.bf16.mxu0 %v614
    %1475 = vmatpush1.bf16.msra.mxu0 %v613
    %1476 = vmatprep.subr.bf16.mxu0 %v618
    %1477 = vmatpush1.bf16.msra.mxu0 %v617
    %1478 = vmatprep.subr.bf16.mxu0 0
    %1479 = vmatpush1.bf16.msra.mxu0 0
    %1480 = vmatprep.subr.bf16.mxu0 0
    %1481 = vmatpush1.bf16.msra.mxu0 0
    %1482 = vmatprep.subr.bf16.mxu0 0
    %1483 = vmatpush1.bf16.msra.mxu0 0
    %1484 = vmatprep.subr.bf16.mxu0 0
    %1485 = vmatpush1.bf16.msra.mxu0 0
    %1486 = vmatprep.subr.bf16.mxu0 0
    %1487 = vmatpush1.bf16.msra.mxu0 0
    %1488 = vmatprep.subr.bf16.mxu0 0
    %1489 = vmatpush1.bf16.msra.mxu0 0
    %1490 = vmatprep.subr.bf16.mxu0 0
    %1491 = vmatpush1.bf16.msra.mxu0 0
    %1492 = vmatprep.subr.bf16.mxu0 0
    %1493 = vmatpush1.bf16.msra.mxu0 0
    %1494 = vmatprep.mubr.bf16.mxu0 0
    %1495 = vmatmul.mubr.bf16.gmra.mrb[0].mxu0 %v1340
    %v1496 = vpop.f32.mrb[0].mxu0
    %v1497 = vadd.f32 0.0, %v1496
    %v1498 = vpop.f32.mrb[0].mxu0
    %v1499 = vadd.f32 0.0, %v1498
    %v1500 = vpop.f32.mrb[0].mxu0
    %v1501 = vpop.f32.mrb[0].mxu0
    %1502 = vdwg.mxu0
    %1503 = vmatprep.subr.bf16.mxu0 %v592
    %1504 = vmatpush1.bf16.msra.mxu0 %v591
    %1505 = vmatprep.subr.bf16.mxu0 %v596
    %1506 = vmatpush1.bf16.msra.mxu0 %v595
    %1507 = vmatprep.subr.bf16.mxu0 %v600
    %1508 = vmatpush1.bf16.msra.mxu0 %v599
    %1509 = vmatprep.subr.bf16.mxu0 %v604
    %1510 = vmatpush1.bf16.msra.mxu0 %v603
    %1511 = vmatprep.subr.bf16.mxu0 %v608
    %1512 = vmatpush1.bf16.msra.mxu0 %v607
    %1513 = vmatprep.subr.bf16.mxu0 %v612
    %1514 = vmatpush1.bf16.msra.mxu0 %v611
    %1515 = vmatprep.subr.bf16.mxu0 %v616
    %1516 = vmatpush1.bf16.msra.mxu0 %v615
    %1517 = vmatprep.subr.bf16.mxu0 %v620
    %1518 = vmatpush1.bf16.msra.mxu0 %v619
    %1519 = vmatprep.subr.bf16.mxu0 0
    %1520 = vmatpush1.bf16.msra.mxu0 0
    %1521 = vmatprep.subr.bf16.mxu0 0
    %1522 = vmatpush1.bf16.msra.mxu0 0
    %1523 = vmatprep.subr.bf16.mxu0 0
    %1524 = vmatpush1.bf16.msra.mxu0 0
    %1525 = vmatprep.subr.bf16.mxu0 0
    %1526 = vmatpush1.bf16.msra.mxu0 0
    %1527 = vmatprep.subr.bf16.mxu0 0
    %1528 = vmatpush1.bf16.msra.mxu0 0
    %1529 = vmatprep.subr.bf16.mxu0 0
    %1530 = vmatpush1.bf16.msra.mxu0 0
    %1531 = vmatprep.subr.bf16.mxu0 0
    %1532 = vmatpush1.bf16.msra.mxu0 0
    %1533 = vmatprep.subr.bf16.mxu0 0
    %1534 = vmatpush1.bf16.msra.mxu0 0
    %1535 = vmatprep.mubr.bf16.mxu0 0
    %1536 = vmatmul.mubr.bf16.gmra.mrb[0].mxu0 %v1340
    %v1537 = vpop.f32.mrb[0].mxu0
    %v1538 = vadd.f32 0.0, %v1537
    %v1539 = vpop.f32.mrb[0].mxu0
    %v1540 = vadd.f32 0.0, %v1539
    %v1541 = vpop.f32.mrb[0].mxu0
    %v1542 = vpop.f32.mrb[0].mxu0
    %1543 = vdwg.mxu0
    %v1544 = vadd.f32 %v1458, %v1497
    %v1545 = vadd.f32 %v1459, %v1499
    %v1546 = vadd.f32 %v1460, %v1538
    %v1547 = vadd.f32 %v1461, %v1540
    %v1548 = vxor.u32 %v1544, 2147483648
    %v1549 = vmul.f32 %v1548, 1.442695
    %v1550 = vpow.pop %v1549
    %v1551 = vadd.f32 %v1550, 1.0
    %v1552 = vrcp.pop %v1551
    %v1553 = vmul.f32 1.0, %v1552
    %v1554 = vxor.u32 %v1545, 2147483648
    %v1555 = vmul.f32 %v1554, 1.442695
    %v1556 = vpow.pop %v1555
    %v1557 = vadd.f32 %v1556, 1.0
    %v1558 = vrcp.pop %v1557
    %v1559 = vmul.f32 1.0, %v1558
    %v1560 = vtanh.pop %v1546
    %v1561 = vxor.u32 %v1547, 2147483648
    %v1562 = vmul.f32 %v1561, 1.442695
    %v1563 = vpow.pop %v1562
    %v1564 = vadd.f32 %v1563, 1.0
    %v1565 = vrcp.pop %v1564
    %v1566 = vmul.f32 1.0, %v1565
    %v1567 = vmul.f32 %v1559, %v1339
    %v1568 = vmul.f32 %v1553, %v1560
    %v1569 = vadd.f32 %v1567, %v1568
    %v1570 = vtanh.pop %v1569
    %v1571 = vmul.f32 %v1566, %v1570
    %v1572 = vsel %vm1454, %v1571, %v1338
    %v1573 = vsel %vm1454, %v1569, %v1339
    %v1574 = vpack.c.bf16 %v1572, %v1572
    %v1575 = vpack.c.bf16 %v1452, %v1452
    %1576 = vmatprep.subr.bf16.mxu0 %v960
    %1577 = vmatpush1.bf16.msra.mxu0 %v959
    %1578 = vmatprep.subr.bf16.mxu0 %v964
    %1579 = vmatpush1.bf16.msra.mxu0 %v963
    %1580 = vmatprep.subr.bf16.mxu0 %v968
    %1581 = vmatpush1.bf16.msra.mxu0 %v967
    %1582 = vmatprep.subr.bf16.mxu0 %v972
    %1583 = vmatpush1.bf16.msra.mxu0 %v971
    %1584 = vmatprep.subr.bf16.mxu0 %v976
    %1585 = vmatpush1.bf16.msra.mxu0 %v975
    %1586 = vmatprep.subr.bf16.mxu0 %v980
    %1587 = vmatpush1.bf16.msra.mxu0 %v979
    %1588 = vmatprep.subr.bf16.mxu0 %v984
    %1589 = vmatpush1.bf16.msra.mxu0 %v983
    %1590 = vmatprep.subr.bf16.mxu0 %v988
    %1591 = vmatpush1.bf16.msra.mxu0 %v987
    %1592 = vmatprep.subr.bf16.mxu0 %v992
    %1593 = vmatpush1.bf16.msra.mxu0 %v991
    %1594 = vmatprep.subr.bf16.mxu0 %v996
    %1595 = vmatpush1.bf16.msra.mxu0 %v995
    %1596 = vmatprep.subr.bf16.mxu0 %v1000
    %1597 = vmatpush1.bf16.msra.mxu0 %v999
    %1598 = vmatprep.subr.bf16.mxu0 %v1004
    %1599 = vmatpush1.bf16.msra.mxu0 %v1003
    %1600 = vmatprep.subr.bf16.mxu0 %v1008
    %1601 = vmatpush1.bf16.msra.mxu0 %v1007
    %1602 = vmatprep.subr.bf16.mxu0 %v1012
    %1603 = vmatpush1.bf16.msra.mxu0 %v1011
    %1604 = vmatprep.subr.bf16.mxu0 %v1016
    %1605 = vmatpush1.bf16.msra.mxu0 %v1015
    %1606 = vmatprep.subr.bf16.mxu0 %v1020
    %1607 = vmatpush1.bf16.msra.mxu0 %v1019
    %1608 = vmatprep.mubr.bf16.mxu0 %v1575
    %1609 = vmatmul.mubr.bf16.gmra.mrb[0].mxu0 %v1574
    %v1610 = vpop.f32.mrb[0].mxu0
    %v1611 = vadd.f32 0.0, %v1610
    %v1612 = vpop.f32.mrb[0].mxu0
    %v1613 = vadd.f32 0.0, %v1612
    %v1614 = vpop.f32.mrb[0].mxu0
    %v1615 = vpop.f32.mrb[0].mxu0
    %1616 = vdwg.mxu0
    %1617 = vmatprep.subr.bf16.mxu0 %v962
    %1618 = vmatpush1.bf16.msra.mxu0 %v961
    %1619 = vmatprep.subr.bf16.mxu0 %v966
    %1620 = vmatpush1.bf16.msra.mxu0 %v965
    %1621 = vmatprep.subr.bf16.mxu0 %v970
    %1622 = vmatpush1.bf16.msra.mxu0 %v969
    %1623 = vmatprep.subr.bf16.mxu0 %v974
    %1624 = vmatpush1.bf16.msra.mxu0 %v973
    %1625 = vmatprep.subr.bf16.mxu0 %v978
    %1626 = vmatpush1.bf16.msra.mxu0 %v977
    %1627 = vmatprep.subr.bf16.mxu0 %v982
    %1628 = vmatpush1.bf16.msra.mxu0 %v981
    %1629 = vmatprep.subr.bf16.mxu0 %v986
    %1630 = vmatpush1.bf16.msra.mxu0 %v985
    %1631 = vmatprep.subr.bf16.mxu0 %v990
    %1632 = vmatpush1.bf16.msra.mxu0 %v989
    %1633 = vmatprep.subr.bf16.mxu0 %v994
    %1634 = vmatpush1.bf16.msra.mxu0 %v993
    %1635 = vmatprep.subr.bf16.mxu0 %v998
    %1636 = vmatpush1.bf16.msra.mxu0 %v997
    %1637 = vmatprep.subr.bf16.mxu0 %v1002
    %1638 = vmatpush1.bf16.msra.mxu0 %v1001
    %1639 = vmatprep.subr.bf16.mxu0 %v1006
    %1640 = vmatpush1.bf16.msra.mxu0 %v1005
    %1641 = vmatprep.subr.bf16.mxu0 %v1010
    %1642 = vmatpush1.bf16.msra.mxu0 %v1009
    %1643 = vmatprep.subr.bf16.mxu0 %v1014
    %1644 = vmatpush1.bf16.msra.mxu0 %v1013
    %1645 = vmatprep.subr.bf16.mxu0 %v1018
    %1646 = vmatpush1.bf16.msra.mxu0 %v1017
    %1647 = vmatprep.subr.bf16.mxu0 %v1022
    %1648 = vmatpush1.bf16.msra.mxu0 %v1021
    %1649 = vmatprep.mubr.bf16.mxu0 %v1575
    %1650 = vmatmul.mubr.bf16.gmra.mrb[0].mxu0 %v1574
    %v1651 = vpop.f32.mrb[0].mxu0
    %v1652 = vadd.f32 0.0, %v1651
    %v1653 = vpop.f32.mrb[0].mxu0
    %v1654 = vadd.f32 0.0, %v1653
    %v1655 = vpop.f32.mrb[0].mxu0
    %v1656 = vpop.f32.mrb[0].mxu0
    %1657 = vdwg.mxu0
    %v1658 = vadd.f32 %v1173, %v1611
    %v1659 = vadd.f32 %v1177, %v1613
    %v1660 = vadd.f32 %v1181, %v1652
    %v1661 = vadd.f32 %v1185, %v1654
    %v1662 = vxor.u32 %v1658, 2147483648
    %v1663 = vmul.f32 %v1662, 1.442695
    %v1664 = vpow.pop %v1663
    %v1665 = vadd.f32 %v1664, 1.0
    %v1666 = vrcp.pop %v1665
    %v1667 = vmul.f32 1.0, %v1666
    %v1668 = vxor.u32 %v1659, 2147483648
    %v1669 = vmul.f32 %v1668, 1.442695
    %v1670 = vpow.pop %v1669
    %v1671 = vadd.f32 %v1670, 1.0
    %v1672 = vrcp.pop %v1671
    %v1673 = vmul.f32 1.0, %v1672
    %v1674 = vtanh.pop %v1660
    %v1675 = vxor.u32 %v1661, 2147483648
    %v1676 = vmul.f32 %v1675, 1.442695
    %v1677 = vpow.pop %v1676
    %v1678 = vadd.f32 %v1677, 1.0
    %v1679 = vrcp.pop %v1678
    %v1680 = vmul.f32 1.0, %v1679
    %v1681 = vmul.f32 %v1673, %v1453
    %v1682 = vmul.f32 %v1667, %v1674
    %v1683 = vadd.f32 %v1681, %v1682
    %v1684 = vtanh.pop %v1683
    %v1685 = vmul.f32 %v1680, %v1684
    %v1686 = vsel %vm1454, %v1685, %v1452
    %v1687 = vsel %vm1454, %v1683, %v1453
    %vm1688 = vcmp.gt.s32.totalorder %v195, 3
    %s1689 = smul.u32 3, 4
    %s1690 = smul.addr %s1689, 8
    %s1691 = scalar_lea.vmem [#allocation2], %s1690
    %v1692 = vld [vmem:[%s1691] sm:$0xff]
    %v1693 = vld [vmem:[%s1691 + $0x8] sm:$0xff]
    %v1694 = vld [vmem:[%s1691 + $0x10] sm:$0xff]
    %v1695 = vld [vmem:[%s1691 + $0x18] sm:$0xff]
    %1696 = vmatprep.subr.bf16.mxu0 %v590
    %1697 = vmatpush1.bf16.msra.mxu0 %v589
    %1698 = vmatprep.subr.bf16.mxu0 %v594
    %1699 = vmatpush1.bf16.msra.mxu0 %v593
    %1700 = vmatprep.subr.bf16.mxu0 %v598
    %1701 = vmatpush1.bf16.msra.mxu0 %v597
    %1702 = vmatprep.subr.bf16.mxu0 %v602
    %1703 = vmatpush1.bf16.msra.mxu0 %v601
    %1704 = vmatprep.subr.bf16.mxu0 %v606
    %1705 = vmatpush1.bf16.msra.mxu0 %v605
    %1706 = vmatprep.subr.bf16.mxu0 %v610
    %1707 = vmatpush1.bf16.msra.mxu0 %v609
    %1708 = vmatprep.subr.bf16.mxu0 %v614
    %1709 = vmatpush1.bf16.msra.mxu0 %v613
    %1710 = vmatprep.subr.bf16.mxu0 %v618
    %1711 = vmatpush1.bf16.msra.mxu0 %v617
    %1712 = vmatprep.subr.bf16.mxu0 0
    %1713 = vmatpush1.bf16.msra.mxu0 0
    %1714 = vmatprep.subr.bf16.mxu0 0
    %1715 = vmatpush1.bf16.msra.mxu0 0
    %1716 = vmatprep.subr.bf16.mxu0 0
    %1717 = vmatpush1.bf16.msra.mxu0 0
    %1718 = vmatprep.subr.bf16.mxu0 0
    %1719 = vmatpush1.bf16.msra.mxu0 0
    %1720 = vmatprep.subr.bf16.mxu0 0
    %1721 = vmatpush1.bf16.msra.mxu0 0
    %1722 = vmatprep.subr.bf16.mxu0 0
    %1723 = vmatpush1.bf16.msra.mxu0 0
    %1724 = vmatprep.subr.bf16.mxu0 0
    %1725 = vmatpush1.bf16.msra.mxu0 0
    %1726 = vmatprep.subr.bf16.mxu0 0
    %1727 = vmatpush1.bf16.msra.mxu0 0
    %1728 = vmatprep.mubr.bf16.mxu0 0
    %1729 = vmatmul.mubr.bf16.gmra.mrb[0].mxu0 %v1574
    %v1730 = vpop.f32.mrb[0].mxu0
    %v1731 = vadd.f32 0.0, %v1730
    %v1732 = vpop.f32.mrb[0].mxu0
    %v1733 = vadd.f32 0.0, %v1732
    %v1734 = vpop.f32.mrb[0].mxu0
    %v1735 = vpop.f32.mrb[0].mxu0
    %1736 = vdwg.mxu0
    %1737 = vmatprep.subr.bf16.mxu0 %v592
    %1738 = vmatpush1.bf16.msra.mxu0 %v591
    %1739 = vmatprep.subr.bf16.mxu0 %v596
    %1740 = vmatpush1.bf16.msra.mxu0 %v595
    %1741 = vmatprep.subr.bf16.mxu0 %v600
    %1742 = vmatpush1.bf16.msra.mxu0 %v599
    %1743 = vmatprep.subr.bf16.mxu0 %v604
    %1744 = vmatpush1.bf16.msra.mxu0 %v603
    %1745 = vmatprep.subr.bf16.mxu0 %v608
    %1746 = vmatpush1.bf16.msra.mxu0 %v607
    %1747 = vmatprep.subr.bf16.mxu0 %v612
    %1748 = vmatpush1.bf16.msra.mxu0 %v611
    %1749 = vmatprep.subr.bf16.mxu0 %v616
    %1750 = vmatpush1.bf16.msra.mxu0 %v615
    %1751 = vmatprep.subr.bf16.mxu0 %v620
    %1752 = vmatpush1.bf16.msra.mxu0 %v619
    %1753 = vmatprep.subr.bf16.mxu0 0
    %1754 = vmatpush1.bf16.msra.mxu0 0
    %1755 = vmatprep.subr.bf16.mxu0 0
    %1756 = vmatpush1.bf16.msra.mxu0 0
    %1757 = vmatprep.subr.bf16.mxu0 0
    %1758 = vmatpush1.bf16.msra.mxu0 0
    %1759 = vmatprep.subr.bf16.mxu0 0
    %1760 = vmatpush1.bf16.msra.mxu0 0
    %1761 = vmatprep.subr.bf16.mxu0 0
    %1762 = vmatpush1.bf16.msra.mxu0 0
    %1763 = vmatprep.subr.bf16.mxu0 0
    %1764 = vmatpush1.bf16.msra.mxu0 0
    %1765 = vmatprep.subr.bf16.mxu0 0
    %1766 = vmatpush1.bf16.msra.mxu0 0
    %1767 = vmatprep.subr.bf16.mxu0 0
    %1768 = vmatpush1.bf16.msra.mxu0 0
    %1769 = vmatprep.mubr.bf16.mxu0 0
    %1770 = vmatmul.mubr.bf16.gmra.mrb[0].mxu0 %v1574
    %v1771 = vpop.f32.mrb[0].mxu0
    %v1772 = vadd.f32 0.0, %v1771
    %v1773 = vpop.f32.mrb[0].mxu0
    %v1774 = vadd.f32 0.0, %v1773
    %v1775 = vpop.f32.mrb[0].mxu0
    %v1776 = vpop.f32.mrb[0].mxu0
    %1777 = vdwg.mxu0
    %v1778 = vadd.f32 %v1692, %v1731
    %v1779 = vadd.f32 %v1693, %v1733
    %v1780 = vadd.f32 %v1694, %v1772
    %v1781 = vadd.f32 %v1695, %v1774
    %v1782 = vxor.u32 %v1778, 2147483648
    %v1783 = vmul.f32 %v1782, 1.442695
    %v1784 = vpow.pop %v1783
    %v1785 = vadd.f32 %v1784, 1.0
    %v1786 = vrcp.pop %v1785
    %v1787 = vmul.f32 1.0, %v1786
    %v1788 = vxor.u32 %v1779, 2147483648
    %v1789 = vmul.f32 %v1788, 1.442695
    %v1790 = vpow.pop %v1789
    %v1791 = vadd.f32 %v1790, 1.0
    %v1792 = vrcp.pop %v1791
    %v1793 = vmul.f32 1.0, %v1792
    %v1794 = vtanh.pop %v1780
    %v1795 = vxor.u32 %v1781, 2147483648
    %v1796 = vmul.f32 %v1795, 1.442695
    %v1797 = vpow.pop %v1796
    %v1798 = vadd.f32 %v1797, 1.0
    %v1799 = vrcp.pop %v1798
    %v1800 = vmul.f32 1.0, %v1799
    %v1801 = vmul.f32 %v1793, %v1573
    %v1802 = vmul.f32 %v1787, %v1794
    %v1803 = vadd.f32 %v1801, %v1802
    %v1804 = vtanh.pop %v1803
    %v1805 = vmul.f32 %v1800, %v1804
    %v1806 = vsel %vm1688, %v1805, %v1572
    %v1807 = vsel %vm1688, %v1803, %v1573
    %v1808 = vpack.c.bf16 %v1806, %v1806
    %v1809 = vpack.c.bf16 %v1686, %v1686
    %1810 = vmatprep.subr.bf16.mxu0 %v960
    %1811 = vmatpush1.bf16.msra.mxu0 %v959
    %1812 = vmatprep.subr.bf16.mxu0 %v964
    %1813 = vmatpush1.bf16.msra.mxu0 %v963
    %1814 = vmatprep.subr.bf16.mxu0 %v968
    %1815 = vmatpush1.bf16.msra.mxu0 %v967
    %1816 = vmatprep.subr.bf16.mxu0 %v972
    %1817 = vmatpush1.bf16.msra.mxu0 %v971
    %1818 = vmatprep.subr.bf16.mxu0 %v976
    %1819 = vmatpush1.bf16.msra.mxu0 %v975
    %1820 = vmatprep.subr.bf16.mxu0 %v980
    %1821 = vmatpush1.bf16.msra.mxu0 %v979
    %1822 = vmatprep.subr.bf16.mxu0 %v984
    %1823 = vmatpush1.bf16.msra.mxu0 %v983
    %1824 = vmatprep.subr.bf16.mxu0 %v988
    %1825 = vmatpush1.bf16.msra.mxu0 %v987
    %1826 = vmatprep.subr.bf16.mxu0 %v992
    %1827 = vmatpush1.bf16.msra.mxu0 %v991
    %1828 = vmatprep.subr.bf16.mxu0 %v996
    %1829 = vmatpush1.bf16.msra.mxu0 %v995
    %1830 = vmatprep.subr.bf16.mxu0 %v1000
    %1831 = vmatpush1.bf16.msra.mxu0 %v999
    %1832 = vmatprep.subr.bf16.mxu0 %v1004
    %1833 = vmatpush1.bf16.msra.mxu0 %v1003
    %1834 = vmatprep.subr.bf16.mxu0 %v1008
    %1835 = vmatpush1.bf16.msra.mxu0 %v1007
    %1836 = vmatprep.subr.bf16.mxu0 %v1012
    %1837 = vmatpush1.bf16.msra.mxu0 %v1011
    %1838 = vmatprep.subr.bf16.mxu0 %v1016
    %1839 = vmatpush1.bf16.msra.mxu0 %v1015
    %1840 = vmatprep.subr.bf16.mxu0 %v1020
    %1841 = vmatpush1.bf16.msra.mxu0 %v1019
    %1842 = vmatprep.mubr.bf16.mxu0 %v1809
    %1843 = vmatmul.mubr.bf16.gmra.mrb[0].mxu0 %v1808
    %v1844 = vpop.f32.mrb[0].mxu0
    %v1845 = vadd.f32 0.0, %v1844
    %v1846 = vpop.f32.mrb[0].mxu0
    %v1847 = vadd.f32 0.0, %v1846
    %v1848 = vpop.f32.mrb[0].mxu0
    %v1849 = vpop.f32.mrb[0].mxu0
    %1850 = vdwg.mxu0
    %1851 = vmatprep.subr.bf16.mxu0 %v962
    %1852 = vmatpush1.bf16.msra.mxu0 %v961
    %1853 = vmatprep.subr.bf16.mxu0 %v966
    %1854 = vmatpush1.bf16.msra.mxu0 %v965
    %1855 = vmatprep.subr.bf16.mxu0 %v970
    %1856 = vmatpush1.bf16.msra.mxu0 %v969
    %1857 = vmatprep.subr.bf16.mxu0 %v974
    %1858 = vmatpush1.bf16.msra.mxu0 %v973
    %1859 = vmatprep.subr.bf16.mxu0 %v978
    %1860 = vmatpush1.bf16.msra.mxu0 %v977
    %1861 = vmatprep.subr.bf16.mxu0 %v982
    %1862 = vmatpush1.bf16.msra.mxu0 %v981
    %1863 = vmatprep.subr.bf16.mxu0 %v986
    %1864 = vmatpush1.bf16.msra.mxu0 %v985
    %1865 = vmatprep.subr.bf16.mxu0 %v990
    %1866 = vmatpush1.bf16.msra.mxu0 %v989
    %1867 = vmatprep.subr.bf16.mxu0 %v994
    %1868 = vmatpush1.bf16.msra.mxu0 %v993
    %1869 = vmatprep.subr.bf16.mxu0 %v998
    %1870 = vmatpush1.bf16.msra.mxu0 %v997
    %1871 = vmatprep.subr.bf16.mxu0 %v1002
    %1872 = vmatpush1.bf16.msra.mxu0 %v1001
    %1873 = vmatprep.subr.bf16.mxu0 %v1006
    %1874 = vmatpush1.bf16.msra.mxu0 %v1005
    %1875 = vmatprep.subr.bf16.mxu0 %v1010
    %1876 = vmatpush1.bf16.msra.mxu0 %v1009
    %1877 = vmatprep.subr.bf16.mxu0 %v1014
    %1878 = vmatpush1.bf16.msra.mxu0 %v1013
    %1879 = vmatprep.subr.bf16.mxu0 %v1018
    %1880 = vmatpush1.bf16.msra.mxu0 %v1017
    %1881 = vmatprep.subr.bf16.mxu0 %v1022
    %1882 = vmatpush1.bf16.msra.mxu0 %v1021
    %1883 = vmatprep.mubr.bf16.mxu0 %v1809
    %1884 = vmatmul.mubr.bf16.gmra.mrb[0].mxu0 %v1808
    %v1885 = vpop.f32.mrb[0].mxu0
    %v1886 = vadd.f32 0.0, %v1885
    %v1887 = vpop.f32.mrb[0].mxu0
    %v1888 = vadd.f32 0.0, %v1887
    %v1889 = vpop.f32.mrb[0].mxu0
    %v1890 = vpop.f32.mrb[0].mxu0
    %1891 = vdwg.mxu0
    %v1892 = vadd.f32 %v1173, %v1845
    %v1893 = vadd.f32 %v1177, %v1847
    %v1894 = vadd.f32 %v1181, %v1886
    %v1895 = vadd.f32 %v1185, %v1888
    %v1896 = vxor.u32 %v1892, 2147483648
    %v1897 = vmul.f32 %v1896, 1.442695
    %v1898 = vpow.pop %v1897
    %v1899 = vadd.f32 %v1898, 1.0
    %v1900 = vrcp.pop %v1899
    %v1901 = vmul.f32 1.0, %v1900
    %v1902 = vxor.u32 %v1893, 2147483648
    %v1903 = vmul.f32 %v1902, 1.442695
    %v1904 = vpow.pop %v1903
    %v1905 = vadd.f32 %v1904, 1.0
    %v1906 = vrcp.pop %v1905
    %v1907 = vmul.f32 1.0, %v1906
    %v1908 = vtanh.pop %v1894
    %v1909 = vxor.u32 %v1895, 2147483648
    %v1910 = vmul.f32 %v1909, 1.442695
    %v1911 = vpow.pop %v1910
    %v1912 = vadd.f32 %v1911, 1.0
    %v1913 = vrcp.pop %v1912
    %v1914 = vmul.f32 1.0, %v1913
    %v1915 = vmul.f32 %v1907, %v1687
    %v1916 = vmul.f32 %v1901, %v1908
    %v1917 = vadd.f32 %v1915, %v1916
    %v1918 = vtanh.pop %v1917
    %v1919 = vmul.f32 %v1914, %v1918
    %v1920 = vsel %vm1688, %v1919, %v1686
    %v1921 = vsel %vm1688, %v1917, %v1687
    %vm1922 = vcmp.gt.s32.totalorder %v195, 4
    %s1923 = smul.u32 4, 4
    %s1924 = smul.addr %s1923, 8
    %s1925 = scalar_lea.vmem [#allocation2], %s1924
    %v1926 = vld [vmem:[%s1925] sm:$0xff]
    %v1927 = vld [vmem:[%s1925 + $0x8] sm:$0xff]
    %v1928 = vld [vmem:[%s1925 + $0x10] sm:$0xff]
    %v1929 = vld [vmem:[%s1925 + $0x18] sm:$0xff]
    %1930 = vmatprep.subr.bf16.mxu0 %v590
    %1931 = vmatpush1.bf16.msra.mxu0 %v589
    %1932 = vmatprep.subr.bf16.mxu0 %v594
    %1933 = vmatpush1.bf16.msra.mxu0 %v593
    %1934 = vmatprep.subr.bf16.mxu0 %v598
    %1935 = vmatpush1.bf16.msra.mxu0 %v597
    %1936 = vmatprep.subr.bf16.mxu0 %v602
    %1937 = vmatpush1.bf16.msra.mxu0 %v601
    %1938 = vmatprep.subr.bf16.mxu0 %v606
    %1939 = vmatpush1.bf16.msra.mxu0 %v605
    %1940 = vmatprep.subr.bf16.mxu0 %v610
    %1941 = vmatpush1.bf16.msra.mxu0 %v609
    %1942 = vmatprep.subr.bf16.mxu0 %v614
    %1943 = vmatpush1.bf16.msra.mxu0 %v613
    %1944 = vmatprep.subr.bf16.mxu0 %v618
    %1945 = vmatpush1.bf16.msra.mxu0 %v617
    %1946 = vmatprep.subr.bf16.mxu0 0
    %1947 = vmatpush1.bf16.msra.mxu0 0
    %1948 = vmatprep.subr.bf16.mxu0 0
    %1949 = vmatpush1.bf16.msra.mxu0 0
    %1950 = vmatprep.subr.bf16.mxu0 0
    %1951 = vmatpush1.bf16.msra.mxu0 0
    %1952 = vmatprep.subr.bf16.mxu0 0
    %1953 = vmatpush1.bf16.msra.mxu0 0
    %1954 = vmatprep.subr.bf16.mxu0 0
    %1955 = vmatpush1.bf16.msra.mxu0 0
    %1956 = vmatprep.subr.bf16.mxu0 0
    %1957 = vmatpush1.bf16.msra.mxu0 0
    %1958 = vmatprep.subr.bf16.mxu0 0
    %1959 = vmatpush1.bf16.msra.mxu0 0
    %1960 = vmatprep.subr.bf16.mxu0 0
    %1961 = vmatpush1.bf16.msra.mxu0 0
    %1962 = vmatprep.mubr.bf16.mxu0 0
    %1963 = vmatmul.mubr.bf16.gmra.mrb[0].mxu0 %v1808
    %v1964 = vpop.f32.mrb[0].mxu0
    %v1965 = vadd.f32 0.0, %v1964
    %v1966 = vpop.f32.mrb[0].mxu0
    %v1967 = vadd.f32 0.0, %v1966
    %v1968 = vpop.f32.mrb[0].mxu0
    %v1969 = vpop.f32.mrb[0].mxu0
    %1970 = vdwg.mxu0
    %1971 = vmatprep.subr.bf16.mxu0 %v592
    %1972 = vmatpush1.bf16.msra.mxu0 %v591
    %1973 = vmatprep.subr.bf16.mxu0 %v596
    %1974 = vmatpush1.bf16.msra.mxu0 %v595
    %1975 = vmatprep.subr.bf16.mxu0 %v600
    %1976 = vmatpush1.bf16.msra.mxu0 %v599
    %1977 = vmatprep.subr.bf16.mxu0 %v604
    %1978 = vmatpush1.bf16.msra.mxu0 %v603
    %1979 = vmatprep.subr.bf16.mxu0 %v608
    %1980 = vmatpush1.bf16.msra.mxu0 %v607
    %1981 = vmatprep.subr.bf16.mxu0 %v612
    %1982 = vmatpush1.bf16.msra.mxu0 %v611
    %1983 = vmatprep.subr.bf16.mxu0 %v616
    %1984 = vmatpush1.bf16.msra.mxu0 %v615
    %1985 = vmatprep.subr.bf16.mxu0 %v620
    %1986 = vmatpush1.bf16.msra.mxu0 %v619
    %1987 = vmatprep.subr.bf16.mxu0 0
    %1988 = vmatpush1.bf16.msra.mxu0 0
    %1989 = vmatprep.subr.bf16.mxu0 0
    %1990 = vmatpush1.bf16.msra.mxu0 0
    %1991 = vmatprep.subr.bf16.mxu0 0
    %1992 = vmatpush1.bf16.msra.mxu0 0
    %1993 = vmatprep.subr.bf16.mxu0 0
    %1994 = vmatpush1.bf16.msra.mxu0 0
    %1995 = vmatprep.subr.bf16.mxu0 0
    %1996 = vmatpush1.bf16.msra.mxu0 0
    %1997 = vmatprep.subr.bf16.mxu0 0
    %1998 = vmatpush1.bf16.msra.mxu0 0
    %1999 = vmatprep.subr.bf16.mxu0 0
    %2000 = vmatpush1.bf16.msra.mxu0 0
    %2001 = vmatprep.subr.bf16.mxu0 0
    %2002 = vmatpush1.bf16.msra.mxu0 0
    %2003 = vmatprep.mubr.bf16.mxu0 0
    %2004 = vmatmul.mubr.bf16.gmra.mrb[0].mxu0 %v1808
    %v2005 = vpop.f32.mrb[0].mxu0
    %v2006 = vadd.f32 0.0, %v2005
    %v2007 = vpop.f32.mrb[0].mxu0
    %v2008 = vadd.f32 0.0, %v2007
    %v2009 = vpop.f32.mrb[0].mxu0
    %v2010 = vpop.f32.mrb[0].mxu0
    %2011 = vdwg.mxu0
    %v2012 = vadd.f32 %v1926, %v1965
    %v2013 = vadd.f32 %v1927, %v1967
    %v2014 = vadd.f32 %v1928, %v2006
    %v2015 = vadd.f32 %v1929, %v2008
    %v2016 = vxor.u32 %v2012, 2147483648
    %v2017 = vmul.f32 %v2016, 1.442695
    %v2018 = vpow.pop %v2017
    %v2019 = vadd.f32 %v2018, 1.0
    %v2020 = vrcp.pop %v2019
    %v2021 = vmul.f32 1.0, %v2020
    %v2022 = vxor.u32 %v2013, 2147483648
    %v2023 = vmul.f32 %v2022, 1.442695
    %v2024 = vpow.pop %v2023
    %v2025 = vadd.f32 %v2024, 1.0
    %v2026 = vrcp.pop %v2025
    %v2027 = vmul.f32 1.0, %v2026
    %v2028 = vtanh.pop %v2014
    %v2029 = vxor.u32 %v2015, 2147483648
    %v2030 = vmul.f32 %v2029, 1.442695
    %v2031 = vpow.pop %v2030
    %v2032 = vadd.f32 %v2031, 1.0
    %v2033 = vrcp.pop %v2032
    %v2034 = vmul.f32 1.0, %v2033
    %v2035 = vmul.f32 %v2027, %v1807
    %v2036 = vmul.f32 %v2021, %v2028
    %v2037 = vadd.f32 %v2035, %v2036
    %v2038 = vtanh.pop %v2037
    %v2039 = vmul.f32 %v2034, %v2038
    %v2040 = vsel %vm1922, %v2039, %v1806
    %v2041 = vsel %vm1922, %v2037, %v1807
    %v2042 = vpack.c.bf16 %v2040, %v2040
    %v2043 = vpack.c.bf16 %v1920, %v1920
    %2044 = vmatprep.subr.bf16.mxu0 %v960
    %2045 = vmatpush1.bf16.msra.mxu0 %v959
    %2046 = vmatprep.subr.bf16.mxu0 %v964
    %2047 = vmatpush1.bf16.msra.mxu0 %v963
    %2048 = vmatprep.subr.bf16.mxu0 %v968
    %2049 = vmatpush1.bf16.msra.mxu0 %v967
    %2050 = vmatprep.subr.bf16.mxu0 %v972
    %2051 = vmatpush1.bf16.msra.mxu0 %v971
    %2052 = vmatprep.subr.bf16.mxu0 %v976
    %2053 = vmatpush1.bf16.msra.mxu0 %v975
    %2054 = vmatprep.subr.bf16.mxu0 %v980
    %2055 = vmatpush1.bf16.msra.mxu0 %v979
    %2056 = vmatprep.subr.bf16.mxu0 %v984
    %2057 = vmatpush1.bf16.msra.mxu0 %v983
    %2058 = vmatprep.subr.bf16.mxu0 %v988
    %2059 = vmatpush1.bf16.msra.mxu0 %v987
    %2060 = vmatprep.subr.bf16.mxu0 %v992
    %2061 = vmatpush1.bf16.msra.mxu0 %v991
    %2062 = vmatprep.subr.bf16.mxu0 %v996
    %2063 = vmatpush1.bf16.msra.mxu0 %v995
    %2064 = vmatprep.subr.bf16.mxu0 %v1000
    %2065 = vmatpush1.bf16.msra.mxu0 %v999
    %2066 = vmatprep.subr.bf16.mxu0 %v1004
    %2067 = vmatpush1.bf16.msra.mxu0 %v1003
    %2068 = vmatprep.subr.bf16.mxu0 %v1008
    %2069 = vmatpush1.bf16.msra.mxu0 %v1007
    %2070 = vmatprep.subr.bf16.mxu0 %v1012
    %2071 = vmatpush1.bf16.msra.mxu0 %v1011
    %2072 = vmatprep.subr.bf16.mxu0 %v1016
    %2073 = vmatpush1.bf16.msra.mxu0 %v1015
    %2074 = vmatprep.subr.bf16.mxu0 %v1020
    %2075 = vmatpush1.bf16.msra.mxu0 %v1019
    %2076 = vmatprep.mubr.bf16.mxu0 %v2043
    %2077 = vmatmul.mubr.bf16.gmra.mrb[0].mxu0 %v2042
    %v2078 = vpop.f32.mrb[0].mxu0
    %v2079 = vadd.f32 0.0, %v2078
    %v2080 = vpop.f32.mrb[0].mxu0
    %v2081 = vadd.f32 0.0, %v2080
    %v2082 = vpop.f32.mrb[0].mxu0
    %v2083 = vpop.f32.mrb[0].mxu0
    %2084 = vdwg.mxu0
    %2085 = vmatprep.subr.bf16.mxu0 %v962
    %2086 = vmatpush1.bf16.msra.mxu0 %v961
    %2087 = vmatprep.subr.bf16.mxu0 %v966
    %2088 = vmatpush1.bf16.msra.mxu0 %v965
    %2089 = vmatprep.subr.bf16.mxu0 %v970
    %2090 = vmatpush1.bf16.msra.mxu0 %v969
    %2091 = vmatprep.subr.bf16.mxu0 %v974
    %2092 = vmatpush1.bf16.msra.mxu0 %v973
    %2093 = vmatprep.subr.bf16.mxu0 %v978
    %2094 = vmatpush1.bf16.msra.mxu0 %v977
    %2095 = vmatprep.subr.bf16.mxu0 %v982
    %2096 = vmatpush1.bf16.msra.mxu0 %v981
    %2097 = vmatprep.subr.bf16.mxu0 %v986
    %2098 = vmatpush1.bf16.msra.mxu0 %v985
    %2099 = vmatprep.subr.bf16.mxu0 %v990
    %2100 = vmatpush1.bf16.msra.mxu0 %v989
    %2101 = vmatprep.subr.bf16.mxu0 %v994
    %2102 = vmatpush1.bf16.msra.mxu0 %v993
    %2103 = vmatprep.subr.bf16.mxu0 %v998
    %2104 = vmatpush1.bf16.msra.mxu0 %v997
    %2105 = vmatprep.subr.bf16.mxu0 %v1002
    %2106 = vmatpush1.bf16.msra.mxu0 %v1001
    %2107 = vmatprep.subr.bf16.mxu0 %v1006
    %2108 = vmatpush1.bf16.msra.mxu0 %v1005
    %2109 = vmatprep.subr.bf16.mxu0 %v1010
    %2110 = vmatpush1.bf16.msra.mxu0 %v1009
    %2111 = vmatprep.subr.bf16.mxu0 %v1014
    %2112 = vmatpush1.bf16.msra.mxu0 %v1013
    %2113 = vmatprep.subr.bf16.mxu0 %v1018
    %2114 = vmatpush1.bf16.msra.mxu0 %v1017
    %2115 = vmatprep.subr.bf16.mxu0 %v1022
    %2116 = vmatpush1.bf16.msra.mxu0 %v1021
    %2117 = vmatprep.mubr.bf16.mxu0 %v2043
    %2118 = vmatmul.mubr.bf16.gmra.mrb[0].mxu0 %v2042
    %v2119 = vpop.f32.mrb[0].mxu0
    %v2120 = vadd.f32 0.0, %v2119
    %v2121 = vpop.f32.mrb[0].mxu0
    %v2122 = vadd.f32 0.0, %v2121
    %v2123 = vpop.f32.mrb[0].mxu0
    %v2124 = vpop.f32.mrb[0].mxu0
    %2125 = vdwg.mxu0
    %v2126 = vadd.f32 %v1173, %v2079
    %v2127 = vadd.f32 %v1177, %v2081
    %v2128 = vadd.f32 %v1181, %v2120
    %v2129 = vadd.f32 %v1185, %v2122
    %v2130 = vxor.u32 %v2126, 2147483648
    %v2131 = vmul.f32 %v2130, 1.442695
    %v2132 = vpow.pop %v2131
    %v2133 = vadd.f32 %v2132, 1.0
    %v2134 = vrcp.pop %v2133
    %v2135 = vmul.f32 1.0, %v2134
    %v2136 = vxor.u32 %v2127, 2147483648
    %v2137 = vmul.f32 %v2136, 1.442695
    %v2138 = vpow.pop %v2137
    %v2139 = vadd.f32 %v2138, 1.0
    %v2140 = vrcp.pop %v2139
    %v2141 = vmul.f32 1.0, %v2140
    %v2142 = vtanh.pop %v2128
    %v2143 = vxor.u32 %v2129, 2147483648
    %v2144 = vmul.f32 %v2143, 1.442695
    %v2145 = vpow.pop %v2144
    %v2146 = vadd.f32 %v2145, 1.0
    %v2147 = vrcp.pop %v2146
    %v2148 = vmul.f32 1.0, %v2147
    %v2149 = vmul.f32 %v2141, %v1921
    %v2150 = vmul.f32 %v2135, %v2142
    %v2151 = vadd.f32 %v2149, %v2150
    %v2152 = vtanh.pop %v2151
    %v2153 = vmul.f32 %v2148, %v2152
    %v2154 = vsel %vm1922, %v2153, %v1920
    %v2155 = vsel %vm1922, %v2151, %v1921
    %vm2156 = vcmp.gt.s32.totalorder %v195, 5
    %s2157 = smul.u32 5, 4
    %s2158 = smul.addr %s2157, 8
    %s2159 = scalar_lea.vmem [#allocation2], %s2158
    %v2160 = vld [vmem:[%s2159] sm:$0xff]
    %v2161 = vld [vmem:[%s2159 + $0x8] sm:$0xff]
    %v2162 = vld [vmem:[%s2159 + $0x10] sm:$0xff]
    %v2163 = vld [vmem:[%s2159 + $0x18] sm:$0xff]
    %2164 = vmatprep.subr.bf16.mxu0 %v590
    %2165 = vmatpush1.bf16.msra.mxu0 %v589
    %2166 = vmatprep.subr.bf16.mxu0 %v594
    %2167 = vmatpush1.bf16.msra.mxu0 %v593
    %2168 = vmatprep.subr.bf16.mxu0 %v598
    %2169 = vmatpush1.bf16.msra.mxu0 %v597
    %2170 = vmatprep.subr.bf16.mxu0 %v602
    %2171 = vmatpush1.bf16.msra.mxu0 %v601
    %2172 = vmatprep.subr.bf16.mxu0 %v606
    %2173 = vmatpush1.bf16.msra.mxu0 %v605
    %2174 = vmatprep.subr.bf16.mxu0 %v610
    %2175 = vmatpush1.bf16.msra.mxu0 %v609
    %2176 = vmatprep.subr.bf16.mxu0 %v614
    %2177 = vmatpush1.bf16.msra.mxu0 %v613
    %2178 = vmatprep.subr.bf16.mxu0 %v618
    %2179 = vmatpush1.bf16.msra.mxu0 %v617
    %2180 = vmatprep.subr.bf16.mxu0 0
    %2181 = vmatpush1.bf16.msra.mxu0 0
    %2182 = vmatprep.subr.bf16.mxu0 0
    %2183 = vmatpush1.bf16.msra.mxu0 0
    %2184 = vmatprep.subr.bf16.mxu0 0
    %2185 = vmatpush1.bf16.msra.mxu0 0
    %2186 = vmatprep.subr.bf16.mxu0 0
    %2187 = vmatpush1.bf16.msra.mxu0 0
    %2188 = vmatprep.subr.bf16.mxu0 0
    %2189 = vmatpush1.bf16.msra.mxu0 0
    %2190 = vmatprep.subr.bf16.mxu0 0
    %2191 = vmatpush1.bf16.msra.mxu0 0
    %2192 = vmatprep.subr.bf16.mxu0 0
    %2193 = vmatpush1.bf16.msra.mxu0 0
    %2194 = vmatprep.subr.bf16.mxu0 0
    %2195 = vmatpush1.bf16.msra.mxu0 0
    %2196 = vmatprep.mubr.bf16.mxu0 0
    %2197 = vmatmul.mubr.bf16.gmra.mrb[0].mxu0 %v2042
    %v2198 = vpop.f32.mrb[0].mxu0
    %v2199 = vadd.f32 0.0, %v2198
    %v2200 = vpop.f32.mrb[0].mxu0
    %v2201 = vadd.f32 0.0, %v2200
    %v2202 = vpop.f32.mrb[0].mxu0
    %v2203 = vpop.f32.mrb[0].mxu0
    %2204 = vdwg.mxu0
    %2205 = vmatprep.subr.bf16.mxu0 %v592
    %2206 = vmatpush1.bf16.msra.mxu0 %v591
    %2207 = vmatprep.subr.bf16.mxu0 %v596
    %2208 = vmatpush1.bf16.msra.mxu0 %v595
    %2209 = vmatprep.subr.bf16.mxu0 %v600
    %2210 = vmatpush1.bf16.msra.mxu0 %v599
    %2211 = vmatprep.subr.bf16.mxu0 %v604
    %2212 = vmatpush1.bf16.msra.mxu0 %v603
    %2213 = vmatprep.subr.bf16.mxu0 %v608
    %2214 = vmatpush1.bf16.msra.mxu0 %v607
    %2215 = vmatprep.subr.bf16.mxu0 %v612
    %2216 = vmatpush1.bf16.msra.mxu0 %v611
    %2217 = vmatprep.subr.bf16.mxu0 %v616
    %2218 = vmatpush1.bf16.msra.mxu0 %v615
    %2219 = vmatprep.subr.bf16.mxu0 %v620
    %2220 = vmatpush1.bf16.msra.mxu0 %v619
    %2221 = vmatprep.subr.bf16.mxu0 0
    %2222 = vmatpush1.bf16.msra.mxu0 0
    %2223 = vmatprep.subr.bf16.mxu0 0
    %2224 = vmatpush1.bf16.msra.mxu0 0
    %2225 = vmatprep.subr.bf16.mxu0 0
    %2226 = vmatpush1.bf16.msra.mxu0 0
    %2227 = vmatprep.subr.bf16.mxu0 0
    %2228 = vmatpush1.bf16.msra.mxu0 0
    %2229 = vmatprep.subr.bf16.mxu0 0
    %2230 = vmatpush1.bf16.msra.mxu0 0
    %2231 = vmatprep.subr.bf16.mxu0 0
    %2232 = vmatpush1.bf16.msra.mxu0 0
    %2233 = vmatprep.subr.bf16.mxu0 0
    %2234 = vmatpush1.bf16.msra.mxu0 0
    %2235 = vmatprep.subr.bf16.mxu0 0
    %2236 = vmatpush1.bf16.msra.mxu0 0
    %2237 = vmatprep.mubr.bf16.mxu0 0
    %2238 = vmatmul.mubr.bf16.gmra.mrb[0].mxu0 %v2042
    %v2239 = vpop.f32.mrb[0].mxu0
    %v2240 = vadd.f32 0.0, %v2239
    %v2241 = vpop.f32.mrb[0].mxu0
    %v2242 = vadd.f32 0.0, %v2241
    %v2243 = vpop.f32.mrb[0].mxu0
    %v2244 = vpop.f32.mrb[0].mxu0
    %2245 = vdwg.mxu0
    %v2246 = vadd.f32 %v2160, %v2199
    %v2247 = vadd.f32 %v2161, %v2201
    %v2248 = vadd.f32 %v2162, %v2240
    %v2249 = vadd.f32 %v2163, %v2242
    %v2250 = vxor.u32 %v2246, 2147483648
    %v2251 = vmul.f32 %v2250, 1.442695
    %v2252 = vpow.pop %v2251
    %v2253 = vadd.f32 %v2252, 1.0
    %v2254 = vrcp.pop %v2253
    %v2255 = vmul.f32 1.0, %v2254
    %v2256 = vxor.u32 %v2247, 2147483648
    %v2257 = vmul.f32 %v2256, 1.442695
    %v2258 = vpow.pop %v2257
    %v2259 = vadd.f32 %v2258, 1.0
    %v2260 = vrcp.pop %v2259
    %v2261 = vmul.f32 1.0, %v2260
    %v2262 = vtanh.pop %v2248
    %v2263 = vxor.u32 %v2249, 2147483648
    %v2264 = vmul.f32 %v2263, 1.442695
    %v2265 = vpow.pop %v2264
    %v2266 = vadd.f32 %v2265, 1.0
    %v2267 = vrcp.pop %v2266
    %v2268 = vmul.f32 1.0, %v2267
    %v2269 = vmul.f32 %v2261, %v2041
    %v2270 = vmul.f32 %v2255, %v2262
    %v2271 = vadd.f32 %v2269, %v2270
    %v2272 = vtanh.pop %v2271
    %v2273 = vmul.f32 %v2268, %v2272
    %v2274 = vsel %vm2156, %v2273, %v2040
    %v2275 = vsel %vm2156, %v2271, %v2041
    %v2276 = vpack.c.bf16 %v2274, %v2274
    %v2277 = vpack.c.bf16 %v2154, %v2154
    %2278 = vmatprep.subr.bf16.mxu0 %v960
    %2279 = vmatpush1.bf16.msra.mxu0 %v959
    %2280 = vmatprep.subr.bf16.mxu0 %v964
    %2281 = vmatpush1.bf16.msra.mxu0 %v963
    %2282 = vmatprep.subr.bf16.mxu0 %v968
    %2283 = vmatpush1.bf16.msra.mxu0 %v967
    %2284 = vmatprep.subr.bf16.mxu0 %v972
    %2285 = vmatpush1.bf16.msra.mxu0 %v971
    %2286 = vmatprep.subr.bf16.mxu0 %v976
    %2287 = vmatpush1.bf16.msra.mxu0 %v975
    %2288 = vmatprep.subr.bf16.mxu0 %v980
    %2289 = vmatpush1.bf16.msra.mxu0 %v979
    %2290 = vmatprep.subr.bf16.mxu0 %v984
    %2291 = vmatpush1.bf16.msra.mxu0 %v983
    %2292 = vmatprep.subr.bf16.mxu0 %v988
    %2293 = vmatpush1.bf16.msra.mxu0 %v987
    %2294 = vmatprep.subr.bf16.mxu0 %v992
    %2295 = vmatpush1.bf16.msra.mxu0 %v991
    %2296 = vmatprep.subr.bf16.mxu0 %v996
    %2297 = vmatpush1.bf16.msra.mxu0 %v995
    %2298 = vmatprep.subr.bf16.mxu0 %v1000
    %2299 = vmatpush1.bf16.msra.mxu0 %v999
    %2300 = vmatprep.subr.bf16.mxu0 %v1004
    %2301 = vmatpush1.bf16.msra.mxu0 %v1003
    %2302 = vmatprep.subr.bf16.mxu0 %v1008
    %2303 = vmatpush1.bf16.msra.mxu0 %v1007
    %2304 = vmatprep.subr.bf16.mxu0 %v1012
    %2305 = vmatpush1.bf16.msra.mxu0 %v1011
    %2306 = vmatprep.subr.bf16.mxu0 %v1016
    %2307 = vmatpush1.bf16.msra.mxu0 %v1015
    %2308 = vmatprep.subr.bf16.mxu0 %v1020
    %2309 = vmatpush1.bf16.msra.mxu0 %v1019
    %2310 = vmatprep.mubr.bf16.mxu0 %v2277
    %2311 = vmatmul.mubr.bf16.gmra.mrb[0].mxu0 %v2276
    %v2312 = vpop.f32.mrb[0].mxu0
    %v2313 = vadd.f32 0.0, %v2312
    %v2314 = vpop.f32.mrb[0].mxu0
    %v2315 = vadd.f32 0.0, %v2314
    %v2316 = vpop.f32.mrb[0].mxu0
    %v2317 = vpop.f32.mrb[0].mxu0
    %2318 = vdwg.mxu0
    %2319 = vmatprep.subr.bf16.mxu0 %v962
    %2320 = vmatpush1.bf16.msra.mxu0 %v961
    %2321 = vmatprep.subr.bf16.mxu0 %v966
    %2322 = vmatpush1.bf16.msra.mxu0 %v965
    %2323 = vmatprep.subr.bf16.mxu0 %v970
    %2324 = vmatpush1.bf16.msra.mxu0 %v969
    %2325 = vmatprep.subr.bf16.mxu0 %v974
    %2326 = vmatpush1.bf16.msra.mxu0 %v973
    %2327 = vmatprep.subr.bf16.mxu0 %v978
    %2328 = vmatpush1.bf16.msra.mxu0 %v977
    %2329 = vmatprep.subr.bf16.mxu0 %v982
    %2330 = vmatpush1.bf16.msra.mxu0 %v981
    %2331 = vmatprep.subr.bf16.mxu0 %v986
    %2332 = vmatpush1.bf16.msra.mxu0 %v985
    %2333 = vmatprep.subr.bf16.mxu0 %v990
    %2334 = vmatpush1.bf16.msra.mxu0 %v989
    %2335 = vmatprep.subr.bf16.mxu0 %v994
    %2336 = vmatpush1.bf16.msra.mxu0 %v993
    %2337 = vmatprep.subr.bf16.mxu0 %v998
    %2338 = vmatpush1.bf16.msra.mxu0 %v997
    %2339 = vmatprep.subr.bf16.mxu0 %v1002
    %2340 = vmatpush1.bf16.msra.mxu0 %v1001
    %2341 = vmatprep.subr.bf16.mxu0 %v1006
    %2342 = vmatpush1.bf16.msra.mxu0 %v1005
    %2343 = vmatprep.subr.bf16.mxu0 %v1010
    %2344 = vmatpush1.bf16.msra.mxu0 %v1009
    %2345 = vmatprep.subr.bf16.mxu0 %v1014
    %2346 = vmatpush1.bf16.msra.mxu0 %v1013
    %2347 = vmatprep.subr.bf16.mxu0 %v1018
    %2348 = vmatpush1.bf16.msra.mxu0 %v1017
    %2349 = vmatprep.subr.bf16.mxu0 %v1022
    %2350 = vmatpush1.bf16.msra.mxu0 %v1021
    %2351 = vmatprep.mubr.bf16.mxu0 %v2277
    %2352 = vmatmul.mubr.bf16.gmra.mrb[0].mxu0 %v2276
    %v2353 = vpop.f32.mrb[0].mxu0
    %v2354 = vadd.f32 0.0, %v2353
    %v2355 = vpop.f32.mrb[0].mxu0
    %v2356 = vadd.f32 0.0, %v2355
    %v2357 = vpop.f32.mrb[0].mxu0
    %v2358 = vpop.f32.mrb[0].mxu0
    %2359 = vdwg.mxu0
    %v2360 = vadd.f32 %v1173, %v2313
    %v2361 = vadd.f32 %v1177, %v2315
    %v2362 = vadd.f32 %v1181, %v2354
    %v2363 = vadd.f32 %v1185, %v2356
    %v2364 = vxor.u32 %v2360, 2147483648
    %v2365 = vmul.f32 %v2364, 1.442695
    %v2366 = vpow.pop %v2365
    %v2367 = vadd.f32 %v2366, 1.0
    %v2368 = vrcp.pop %v2367
    %v2369 = vmul.f32 1.0, %v2368
    %v2370 = vxor.u32 %v2361, 2147483648
    %v2371 = vmul.f32 %v2370, 1.442695
    %v2372 = vpow.pop %v2371
    %v2373 = vadd.f32 %v2372, 1.0
    %v2374 = vrcp.pop %v2373
    %v2375 = vmul.f32 1.0, %v2374
    %v2376 = vtanh.pop %v2362
    %v2377 = vxor.u32 %v2363, 2147483648
    %v2378 = vmul.f32 %v2377, 1.442695
    %v2379 = vpow.pop %v2378
    %v2380 = vadd.f32 %v2379, 1.0
    %v2381 = vrcp.pop %v2380
    %v2382 = vmul.f32 1.0, %v2381
    %v2383 = vmul.f32 %v2375, %v2155
    %v2384 = vmul.f32 %v2369, %v2376
    %v2385 = vadd.f32 %v2383, %v2384
    %v2386 = vtanh.pop %v2385
    %v2387 = vmul.f32 %v2382, %v2386
    %v2388 = vsel %vm2156, %v2387, %v2154
    %v2389 = vsel %vm2156, %v2385, %v2155
    %vm2390 = vcmp.gt.s32.totalorder %v195, 6
    %s2391 = smul.u32 6, 4
    %s2392 = smul.addr %s2391, 8
    %s2393 = scalar_lea.vmem [#allocation2], %s2392
    %v2394 = vld [vmem:[%s2393] sm:$0xff]
    %v2395 = vld [vmem:[%s2393 + $0x8] sm:$0xff]
    %v2396 = vld [vmem:[%s2393 + $0x10] sm:$0xff]
    %v2397 = vld [vmem:[%s2393 + $0x18] sm:$0xff]
    %2398 = vmatprep.subr.bf16.mxu0 %v590
    %2399 = vmatpush1.bf16.msra.mxu0 %v589
    %2400 = vmatprep.subr.bf16.mxu0 %v594
    %2401 = vmatpush1.bf16.msra.mxu0 %v593
    %2402 = vmatprep.subr.bf16.mxu0 %v598
    %2403 = vmatpush1.bf16.msra.mxu0 %v597
    %2404 = vmatprep.subr.bf16.mxu0 %v602
    %2405 = vmatpush1.bf16.msra.mxu0 %v601
    %2406 = vmatprep.subr.bf16.mxu0 %v606
    %2407 = vmatpush1.bf16.msra.mxu0 %v605
    %2408 = vmatprep.subr.bf16.mxu0 %v610
    %2409 = vmatpush1.bf16.msra.mxu0 %v609
    %2410 = vmatprep.subr.bf16.mxu0 %v614
    %2411 = vmatpush1.bf16.msra.mxu0 %v613
    %2412 = vmatprep.subr.bf16.mxu0 %v618
    %2413 = vmatpush1.bf16.msra.mxu0 %v617
    %2414 = vmatprep.subr.bf16.mxu0 0
    %2415 = vmatpush1.bf16.msra.mxu0 0
    %2416 = vmatprep.subr.bf16.mxu0 0
    %2417 = vmatpush1.bf16.msra.mxu0 0
    %2418 = vmatprep.subr.bf16.mxu0 0
    %2419 = vmatpush1.bf16.msra.mxu0 0
    %2420 = vmatprep.subr.bf16.mxu0 0
    %2421 = vmatpush1.bf16.msra.mxu0 0
    %2422 = vmatprep.subr.bf16.mxu0 0
    %2423 = vmatpush1.bf16.msra.mxu0 0
    %2424 = vmatprep.subr.bf16.mxu0 0
    %2425 = vmatpush1.bf16.msra.mxu0 0
    %2426 = vmatprep.subr.bf16.mxu0 0
    %2427 = vmatpush1.bf16.msra.mxu0 0
    %2428 = vmatprep.subr.bf16.mxu0 0
    %2429 = vmatpush1.bf16.msra.mxu0 0
    %2430 = vmatprep.mubr.bf16.mxu0 0
    %2431 = vmatmul.mubr.bf16.gmra.mrb[0].mxu0 %v2276
    %v2432 = vpop.f32.mrb[0].mxu0
    %v2433 = vadd.f32 0.0, %v2432
    %v2434 = vpop.f32.mrb[0].mxu0
    %v2435 = vadd.f32 0.0, %v2434
    %v2436 = vpop.f32.mrb[0].mxu0
    %v2437 = vpop.f32.mrb[0].mxu0
    %2438 = vdwg.mxu0
    %2439 = vmatprep.subr.bf16.mxu0 %v592
    %2440 = vmatpush1.bf16.msra.mxu0 %v591
    %2441 = vmatprep.subr.bf16.mxu0 %v596
    %2442 = vmatpush1.bf16.msra.mxu0 %v595
    %2443 = vmatprep.subr.bf16.mxu0 %v600
    %2444 = vmatpush1.bf16.msra.mxu0 %v599
    %2445 = vmatprep.subr.bf16.mxu0 %v604
    %2446 = vmatpush1.bf16.msra.mxu0 %v603
    %2447 = vmatprep.subr.bf16.mxu0 %v608
    %2448 = vmatpush1.bf16.msra.mxu0 %v607
    %2449 = vmatprep.subr.bf16.mxu0 %v612
    %2450 = vmatpush1.bf16.msra.mxu0 %v611
    %2451 = vmatprep.subr.bf16.mxu0 %v616
    %2452 = vmatpush1.bf16.msra.mxu0 %v615
    %2453 = vmatprep.subr.bf16.mxu0 %v620
    %2454 = vmatpush1.bf16.msra.mxu0 %v619
    %2455 = vmatprep.subr.bf16.mxu0 0
    %2456 = vmatpush1.bf16.msra.mxu0 0
    %2457 = vmatprep.subr.bf16.mxu0 0
    %2458 = vmatpush1.bf16.msra.mxu0 0
    %2459 = vmatprep.subr.bf16.mxu0 0
    %2460 = vmatpush1.bf16.msra.mxu0 0
    %2461 = vmatprep.subr.bf16.mxu0 0
    %2462 = vmatpush1.bf16.msra.mxu0 0
    %2463 = vmatprep.subr.bf16.mxu0 0
    %2464 = vmatpush1.bf16.msra.mxu0 0
    %2465 = vmatprep.subr.bf16.mxu0 0
    %2466 = vmatpush1.bf16.msra.mxu0 0
    %2467 = vmatprep.subr.bf16.mxu0 0
    %2468 = vmatpush1.bf16.msra.mxu0 0
    %2469 = vmatprep.subr.bf16.mxu0 0
    %2470 = vmatpush1.bf16.msra.mxu0 0
    %2471 = vmatprep.mubr.bf16.mxu0 0
    %2472 = vmatmul.mubr.bf16.gmra.mrb[0].mxu0 %v2276
    %v2473 = vpop.f32.mrb[0].mxu0
    %v2474 = vadd.f32 0.0, %v2473
    %v2475 = vpop.f32.mrb[0].mxu0
    %v2476 = vadd.f32 0.0, %v2475
    %v2477 = vpop.f32.mrb[0].mxu0
    %v2478 = vpop.f32.mrb[0].mxu0
    %2479 = vdwg.mxu0
    %v2480 = vadd.f32 %v2394, %v2433
    %v2481 = vadd.f32 %v2395, %v2435
    %v2482 = vadd.f32 %v2396, %v2474
    %v2483 = vadd.f32 %v2397, %v2476
    %v2484 = vxor.u32 %v2480, 2147483648
    %v2485 = vmul.f32 %v2484, 1.442695
    %v2486 = vpow.pop %v2485
    %v2487 = vadd.f32 %v2486, 1.0
    %v2488 = vrcp.pop %v2487
    %v2489 = vmul.f32 1.0, %v2488
    %v2490 = vxor.u32 %v2481, 2147483648
    %v2491 = vmul.f32 %v2490, 1.442695
    %v2492 = vpow.pop %v2491
    %v2493 = vadd.f32 %v2492, 1.0
    %v2494 = vrcp.pop %v2493
    %v2495 = vmul.f32 1.0, %v2494
    %v2496 = vtanh.pop %v2482
    %v2497 = vxor.u32 %v2483, 2147483648
    %v2498 = vmul.f32 %v2497, 1.442695
    %v2499 = vpow.pop %v2498
    %v2500 = vadd.f32 %v2499, 1.0
    %v2501 = vrcp.pop %v2500
    %v2502 = vmul.f32 1.0, %v2501
    %v2503 = vmul.f32 %v2495, %v2275
    %v2504 = vmul.f32 %v2489, %v2496
    %v2505 = vadd.f32 %v2503, %v2504
    %v2506 = vtanh.pop %v2505
    %v2507 = vmul.f32 %v2502, %v2506
    %v2508 = vsel %vm2390, %v2507, %v2274
    %v2509 = vsel %vm2390, %v2505, %v2275
    %v2510 = vpack.c.bf16 %v2508, %v2508
    %v2511 = vpack.c.bf16 %v2388, %v2388
    %2512 = vmatprep.subr.bf16.mxu0 %v960
    %2513 = vmatpush1.bf16.msra.mxu0 %v959
    %2514 = vmatprep.subr.bf16.mxu0 %v964
    %2515 = vmatpush1.bf16.msra.mxu0 %v963
    %2516 = vmatprep.subr.bf16.mxu0 %v968
    %2517 = vmatpush1.bf16.msra.mxu0 %v967
    %2518 = vmatprep.subr.bf16.mxu0 %v972
    %2519 = vmatpush1.bf16.msra.mxu0 %v971
    %2520 = vmatprep.subr.bf16.mxu0 %v976
    %2521 = vmatpush1.bf16.msra.mxu0 %v975
    %2522 = vmatprep.subr.bf16.mxu0 %v980
    %2523 = vmatpush1.bf16.msra.mxu0 %v979
    %2524 = vmatprep.subr.bf16.mxu0 %v984
    %2525 = vmatpush1.bf16.msra.mxu0 %v983
    %2526 = vmatprep.subr.bf16.mxu0 %v988
    %2527 = vmatpush1.bf16.msra.mxu0 %v987
    %2528 = vmatprep.subr.bf16.mxu0 %v992
    %2529 = vmatpush1.bf16.msra.mxu0 %v991
    %2530 = vmatprep.subr.bf16.mxu0 %v996
    %2531 = vmatpush1.bf16.msra.mxu0 %v995
    %2532 = vmatprep.subr.bf16.mxu0 %v1000
    %2533 = vmatpush1.bf16.msra.mxu0 %v999
    %2534 = vmatprep.subr.bf16.mxu0 %v1004
    %2535 = vmatpush1.bf16.msra.mxu0 %v1003
    %2536 = vmatprep.subr.bf16.mxu0 %v1008
    %2537 = vmatpush1.bf16.msra.mxu0 %v1007
    %2538 = vmatprep.subr.bf16.mxu0 %v1012
    %2539 = vmatpush1.bf16.msra.mxu0 %v1011
    %2540 = vmatprep.subr.bf16.mxu0 %v1016
    %2541 = vmatpush1.bf16.msra.mxu0 %v1015
    %2542 = vmatprep.subr.bf16.mxu0 %v1020
    %2543 = vmatpush1.bf16.msra.mxu0 %v1019
    %2544 = vmatprep.mubr.bf16.mxu0 %v2511
    %2545 = vmatmul.mubr.bf16.gmra.mrb[0].mxu0 %v2510
    %v2546 = vpop.f32.mrb[0].mxu0
    %v2547 = vadd.f32 0.0, %v2546
    %v2548 = vpop.f32.mrb[0].mxu0
    %v2549 = vadd.f32 0.0, %v2548
    %v2550 = vpop.f32.mrb[0].mxu0
    %v2551 = vpop.f32.mrb[0].mxu0
    %2552 = vdwg.mxu0
    %2553 = vmatprep.subr.bf16.mxu0 %v962
    %2554 = vmatpush1.bf16.msra.mxu0 %v961
    %2555 = vmatprep.subr.bf16.mxu0 %v966
    %2556 = vmatpush1.bf16.msra.mxu0 %v965
    %2557 = vmatprep.subr.bf16.mxu0 %v970
    %2558 = vmatpush1.bf16.msra.mxu0 %v969
    %2559 = vmatprep.subr.bf16.mxu0 %v974
    %2560 = vmatpush1.bf16.msra.mxu0 %v973
    %2561 = vmatprep.subr.bf16.mxu0 %v978
    %2562 = vmatpush1.bf16.msra.mxu0 %v977
    %2563 = vmatprep.subr.bf16.mxu0 %v982
    %2564 = vmatpush1.bf16.msra.mxu0 %v981
    %2565 = vmatprep.subr.bf16.mxu0 %v986
    %2566 = vmatpush1.bf16.msra.mxu0 %v985
    %2567 = vmatprep.subr.bf16.mxu0 %v990
    %2568 = vmatpush1.bf16.msra.mxu0 %v989
    %2569 = vmatprep.subr.bf16.mxu0 %v994
    %2570 = vmatpush1.bf16.msra.mxu0 %v993
    %2571 = vmatprep.subr.bf16.mxu0 %v998
    %2572 = vmatpush1.bf16.msra.mxu0 %v997
    %2573 = vmatprep.subr.bf16.mxu0 %v1002
    %2574 = vmatpush1.bf16.msra.mxu0 %v1001
    %2575 = vmatprep.subr.bf16.mxu0 %v1006
    %2576 = vmatpush1.bf16.msra.mxu0 %v1005
    %2577 = vmatprep.subr.bf16.mxu0 %v1010
    %2578 = vmatpush1.bf16.msra.mxu0 %v1009
    %2579 = vmatprep.subr.bf16.mxu0 %v1014
    %2580 = vmatpush1.bf16.msra.mxu0 %v1013
    %2581 = vmatprep.subr.bf16.mxu0 %v1018
    %2582 = vmatpush1.bf16.msra.mxu0 %v1017
    %2583 = vmatprep.subr.bf16.mxu0 %v1022
    %2584 = vmatpush1.bf16.msra.mxu0 %v1021
    %2585 = vmatprep.mubr.bf16.mxu0 %v2511
    %2586 = vmatmul.mubr.bf16.gmra.mrb[0].mxu0 %v2510
    %v2587 = vpop.f32.mrb[0].mxu0
    %v2588 = vadd.f32 0.0, %v2587
    %v2589 = vpop.f32.mrb[0].mxu0
    %v2590 = vadd.f32 0.0, %v2589
    %v2591 = vpop.f32.mrb[0].mxu0
    %v2592 = vpop.f32.mrb[0].mxu0
    %2593 = vdwg.mxu0
    %v2594 = vadd.f32 %v1173, %v2547
    %v2595 = vadd.f32 %v1177, %v2549
    %v2596 = vadd.f32 %v1181, %v2588
    %v2597 = vadd.f32 %v1185, %v2590
    %v2598 = vxor.u32 %v2594, 2147483648
    %v2599 = vmul.f32 %v2598, 1.442695
    %v2600 = vpow.pop %v2599
    %v2601 = vadd.f32 %v2600, 1.0
    %v2602 = vrcp.pop %v2601
    %v2603 = vmul.f32 1.0, %v2602
    %v2604 = vxor.u32 %v2595, 2147483648
    %v2605 = vmul.f32 %v2604, 1.442695
    %v2606 = vpow.pop %v2605
    %v2607 = vadd.f32 %v2606, 1.0
    %v2608 = vrcp.pop %v2607
    %v2609 = vmul.f32 1.0, %v2608
    %v2610 = vtanh.pop %v2596
    %v2611 = vxor.u32 %v2597, 2147483648
    %v2612 = vmul.f32 %v2611, 1.442695
    %v2613 = vpow.pop %v2612
    %v2614 = vadd.f32 %v2613, 1.0
    %v2615 = vrcp.pop %v2614
    %v2616 = vmul.f32 1.0, %v2615
    %v2617 = vmul.f32 %v2609, %v2389
    %v2618 = vmul.f32 %v2603, %v2610
    %v2619 = vadd.f32 %v2617, %v2618
    %v2620 = vtanh.pop %v2619
    %v2621 = vmul.f32 %v2616, %v2620
    %v2622 = vsel %vm2390, %v2621, %v2388
    %v2623 = vsel %vm2390, %v2619, %v2389
    %vm2624 = vcmp.gt.s32.totalorder %v195, 7
    %s2625 = smul.u32 7, 4
    %s2626 = smul.addr %s2625, 8
    %s2627 = scalar_lea.vmem [#allocation2], %s2626
    %v2628 = vld [vmem:[%s2627] sm:$0xff]
    %v2629 = vld [vmem:[%s2627 + $0x8] sm:$0xff]
    %v2630 = vld [vmem:[%s2627 + $0x10] sm:$0xff]
    %v2631 = vld [vmem:[%s2627 + $0x18] sm:$0xff]
    %2632 = vmatprep.subr.bf16.mxu0 %v590
    %2633 = vmatpush1.bf16.msra.mxu0 %v589
    %2634 = vmatprep.subr.bf16.mxu0 %v594
    %2635 = vmatpush1.bf16.msra.mxu0 %v593
    %2636 = vmatprep.subr.bf16.mxu0 %v598
    %2637 = vmatpush1.bf16.msra.mxu0 %v597
    %2638 = vmatprep.subr.bf16.mxu0 %v602
    %2639 = vmatpush1.bf16.msra.mxu0 %v601
    %2640 = vmatprep.subr.bf16.mxu0 %v606
    %2641 = vmatpush1.bf16.msra.mxu0 %v605
    %2642 = vmatprep.subr.bf16.mxu0 %v610
    %2643 = vmatpush1.bf16.msra.mxu0 %v609
    %2644 = vmatprep.subr.bf16.mxu0 %v614
    %2645 = vmatpush1.bf16.msra.mxu0 %v613
    %2646 = vmatprep.subr.bf16.mxu0 %v618
    %2647 = vmatpush1.bf16.msra.mxu0 %v617
    %2648 = vmatprep.subr.bf16.mxu0 0
    %2649 = vmatpush1.bf16.msra.mxu0 0
    %2650 = vmatprep.subr.bf16.mxu0 0
    %2651 = vmatpush1.bf16.msra.mxu0 0
    %2652 = vmatprep.subr.bf16.mxu0 0
    %2653 = vmatpush1.bf16.msra.mxu0 0
    %2654 = vmatprep.subr.bf16.mxu0 0
    %2655 = vmatpush1.bf16.msra.mxu0 0
    %2656 = vmatprep.subr.bf16.mxu0 0
    %2657 = vmatpush1.bf16.msra.mxu0 0
    %2658 = vmatprep.subr.bf16.mxu0 0
    %2659 = vmatpush1.bf16.msra.mxu0 0
    %2660 = vmatprep.subr.bf16.mxu0 0
    %2661 = vmatpush1.bf16.msra.mxu0 0
    %2662 = vmatprep.subr.bf16.mxu0 0
    %2663 = vmatpush1.bf16.msra.mxu0 0
    %2664 = vmatprep.mubr.bf16.mxu0 0
    %2665 = vmatmul.mubr.bf16.gmra.mrb[0].mxu0 %v2510
    %v2666 = vpop.f32.mrb[0].mxu0
    %v2667 = vadd.f32 0.0, %v2666
    %v2668 = vpop.f32.mrb[0].mxu0
    %v2669 = vadd.f32 0.0, %v2668
    %v2670 = vpop.f32.mrb[0].mxu0
    %v2671 = vpop.f32.mrb[0].mxu0
    %2672 = vdwg.mxu0
    %2673 = vmatprep.subr.bf16.mxu0 %v592
    %2674 = vmatpush1.bf16.msra.mxu0 %v591
    %2675 = vmatprep.subr.bf16.mxu0 %v596
    %2676 = vmatpush1.bf16.msra.mxu0 %v595
    %2677 = vmatprep.subr.bf16.mxu0 %v600
    %2678 = vmatpush1.bf16.msra.mxu0 %v599
    %2679 = vmatprep.subr.bf16.mxu0 %v604
    %2680 = vmatpush1.bf16.msra.mxu0 %v603
    %2681 = vmatprep.subr.bf16.mxu0 %v608
    %2682 = vmatpush1.bf16.msra.mxu0 %v607
    %2683 = vmatprep.subr.bf16.mxu0 %v612
    %2684 = vmatpush1.bf16.msra.mxu0 %v611
    %2685 = vmatprep.subr.bf16.mxu0 %v616
    %2686 = vmatpush1.bf16.msra.mxu0 %v615
    %2687 = vmatprep.subr.bf16.mxu0 %v620
    %2688 = vmatpush1.bf16.msra.mxu0 %v619
    %2689 = vmatprep.subr.bf16.mxu0 0
    %2690 = vmatpush1.bf16.msra.mxu0 0
    %2691 = vmatprep.subr.bf16.mxu0 0
    %2692 = vmatpush1.bf16.msra.mxu0 0
    %2693 = vmatprep.subr.bf16.mxu0 0
    %2694 = vmatpush1.bf16.msra.mxu0 0
    %2695 = vmatprep.subr.bf16.mxu0 0
    %2696 = vmatpush1.bf16.msra.mxu0 0
    %2697 = vmatprep.subr.bf16.mxu0 0
    %2698 = vmatpush1.bf16.msra.mxu0 0
    %2699 = vmatprep.subr.bf16.mxu0 0
    %2700 = vmatpush1.bf16.msra.mxu0 0
    %2701 = vmatprep.subr.bf16.mxu0 0
    %2702 = vmatpush1.bf16.msra.mxu0 0
    %2703 = vmatprep.subr.bf16.mxu0 0
    %2704 = vmatpush1.bf16.msra.mxu0 0
    %2705 = vmatprep.mubr.bf16.mxu0 0
    %2706 = vmatmul.mubr.bf16.gmra.mrb[0].mxu0 %v2510
    %v2707 = vpop.f32.mrb[0].mxu0
    %v2708 = vadd.f32 0.0, %v2707
    %v2709 = vpop.f32.mrb[0].mxu0
    %v2710 = vadd.f32 0.0, %v2709
    %v2711 = vpop.f32.mrb[0].mxu0
    %v2712 = vpop.f32.mrb[0].mxu0
    %2713 = vdwg.mxu0
    %v2714 = vadd.f32 %v2628, %v2667
    %v2715 = vadd.f32 %v2629, %v2669
    %v2716 = vadd.f32 %v2630, %v2708
    %v2717 = vadd.f32 %v2631, %v2710
    %v2718 = vxor.u32 %v2714, 2147483648
    %v2719 = vmul.f32 %v2718, 1.442695
    %v2720 = vpow.pop %v2719
    %v2721 = vadd.f32 %v2720, 1.0
    %v2722 = vrcp.pop %v2721
    %v2723 = vmul.f32 1.0, %v2722
    %v2724 = vxor.u32 %v2715, 2147483648
    %v2725 = vmul.f32 %v2724, 1.442695
    %v2726 = vpow.pop %v2725
    %v2727 = vadd.f32 %v2726, 1.0
    %v2728 = vrcp.pop %v2727
    %v2729 = vmul.f32 1.0, %v2728
    %v2730 = vtanh.pop %v2716
    %v2731 = vxor.u32 %v2717, 2147483648
    %v2732 = vmul.f32 %v2731, 1.442695
    %v2733 = vpow.pop %v2732
    %v2734 = vadd.f32 %v2733, 1.0
    %v2735 = vrcp.pop %v2734
    %v2736 = vmul.f32 1.0, %v2735
    %v2737 = vmul.f32 %v2729, %v2509
    %v2738 = vmul.f32 %v2723, %v2730
    %v2739 = vadd.f32 %v2737, %v2738
    %v2740 = vtanh.pop %v2739
    %v2741 = vmul.f32 %v2736, %v2740
    %v2742 = vsel %vm2624, %v2741, %v2508
    %v2743 = vpack.c.bf16 %v2742, %v2742
    %v2744 = vpack.c.bf16 %v2622, %v2622
    %2745 = vmatprep.subr.bf16.mxu0 %v960
    %2746 = vmatpush1.bf16.msra.mxu0 %v959
    %2747 = vmatprep.subr.bf16.mxu0 %v964
    %2748 = vmatpush1.bf16.msra.mxu0 %v963
    %2749 = vmatprep.subr.bf16.mxu0 %v968
    %2750 = vmatpush1.bf16.msra.mxu0 %v967
    %2751 = vmatprep.subr.bf16.mxu0 %v972
    %2752 = vmatpush1.bf16.msra.mxu0 %v971
    %2753 = vmatprep.subr.bf16.mxu0 %v976
    %2754 = vmatpush1.bf16.msra.mxu0 %v975
    %2755 = vmatprep.subr.bf16.mxu0 %v980
    %2756 = vmatpush1.bf16.msra.mxu0 %v979
    %2757 = vmatprep.subr.bf16.mxu0 %v984
    %2758 = vmatpush1.bf16.msra.mxu0 %v983
    %2759 = vmatprep.subr.bf16.mxu0 %v988
    %2760 = vmatpush1.bf16.msra.mxu0 %v987
    %2761 = vmatprep.subr.bf16.mxu0 %v992
    %2762 = vmatpush1.bf16.msra.mxu0 %v991
    %2763 = vmatprep.subr.bf16.mxu0 %v996
    %2764 = vmatpush1.bf16.msra.mxu0 %v995
    %2765 = vmatprep.subr.bf16.mxu0 %v1000
    %2766 = vmatpush1.bf16.msra.mxu0 %v999
    %2767 = vmatprep.subr.bf16.mxu0 %v1004
    %2768 = vmatpush1.bf16.msra.mxu0 %v1003
    %2769 = vmatprep.subr.bf16.mxu0 %v1008
    %2770 = vmatpush1.bf16.msra.mxu0 %v1007
    %2771 = vmatprep.subr.bf16.mxu0 %v1012
    %2772 = vmatpush1.bf16.msra.mxu0 %v1011
    %2773 = vmatprep.subr.bf16.mxu0 %v1016
    %2774 = vmatpush1.bf16.msra.mxu0 %v1015
    %2775 = vmatprep.subr.bf16.mxu0 %v1020
    %2776 = vmatpush1.bf16.msra.mxu0 %v1019
    %2777 = vmatprep.mubr.bf16.mxu0 %v2744
    %2778 = vmatmul.mubr.bf16.gmra.mrb[0].mxu0 %v2743
    %v2779 = vpop.f32.mrb[0].mxu0
    %v2780 = vadd.f32 0.0, %v2779
    %v2781 = vpop.f32.mrb[0].mxu0
    %v2782 = vadd.f32 0.0, %v2781
    %v2783 = vpop.f32.mrb[0].mxu0
    %v2784 = vpop.f32.mrb[0].mxu0
    %2785 = vdwg.mxu0
    %2786 = vmatprep.subr.bf16.mxu0 %v962
    %2787 = vmatpush1.bf16.msra.mxu0 %v961
    %2788 = vmatprep.subr.bf16.mxu0 %v966
    %2789 = vmatpush1.bf16.msra.mxu0 %v965
    %2790 = vmatprep.subr.bf16.mxu0 %v970
    %2791 = vmatpush1.bf16.msra.mxu0 %v969
    %2792 = vmatprep.subr.bf16.mxu0 %v974
    %2793 = vmatpush1.bf16.msra.mxu0 %v973
    %2794 = vmatprep.subr.bf16.mxu0 %v978
    %2795 = vmatpush1.bf16.msra.mxu0 %v977
    %2796 = vmatprep.subr.bf16.mxu0 %v982
    %2797 = vmatpush1.bf16.msra.mxu0 %v981
    %2798 = vmatprep.subr.bf16.mxu0 %v986
    %2799 = vmatpush1.bf16.msra.mxu0 %v985
    %2800 = vmatprep.subr.bf16.mxu0 %v990
    %2801 = vmatpush1.bf16.msra.mxu0 %v989
    %2802 = vmatprep.subr.bf16.mxu0 %v994
    %2803 = vmatpush1.bf16.msra.mxu0 %v993
    %2804 = vmatprep.subr.bf16.mxu0 %v998
    %2805 = vmatpush1.bf16.msra.mxu0 %v997
    %2806 = vmatprep.subr.bf16.mxu0 %v1002
    %2807 = vmatpush1.bf16.msra.mxu0 %v1001
    %2808 = vmatprep.subr.bf16.mxu0 %v1006
    %2809 = vmatpush1.bf16.msra.mxu0 %v1005
    %2810 = vmatprep.subr.bf16.mxu0 %v1010
    %2811 = vmatpush1.bf16.msra.mxu0 %v1009
    %2812 = vmatprep.subr.bf16.mxu0 %v1014
    %2813 = vmatpush1.bf16.msra.mxu0 %v1013
    %2814 = vmatprep.subr.bf16.mxu0 %v1018
    %2815 = vmatpush1.bf16.msra.mxu0 %v1017
    %2816 = vmatprep.subr.bf16.mxu0 %v1022
    %2817 = vmatpush1.bf16.msra.mxu0 %v1021
    %2818 = vmatprep.mubr.bf16.mxu0 %v2744
    %2819 = vmatmul.mubr.bf16.gmra.mrb[0].mxu0 %v2743
    %v2820 = vpop.f32.mrb[0].mxu0
    %v2821 = vadd.f32 0.0, %v2820
    %v2822 = vpop.f32.mrb[0].mxu0
    %v2823 = vadd.f32 0.0, %v2822
    %v2824 = vpop.f32.mrb[0].mxu0
    %v2825 = vpop.f32.mrb[0].mxu0
    %2826 = vdwg.mxu0
    %v2827 = vadd.f32 %v1173, %v2780
    %v2828 = vadd.f32 %v1177, %v2782
    %v2829 = vadd.f32 %v1181, %v2821
    %v2830 = vadd.f32 %v1185, %v2823
    %v2831 = vxor.u32 %v2827, 2147483648
    %v2832 = vmul.f32 %v2831, 1.442695
    %v2833 = vpow.pop %v2832
    %v2834 = vadd.f32 %v2833, 1.0
    %v2835 = vrcp.pop %v2834
    %v2836 = vmul.f32 1.0, %v2835
    %v2837 = vxor.u32 %v2828, 2147483648
    %v2838 = vmul.f32 %v2837, 1.442695
    %v2839 = vpow.pop %v2838
    %v2840 = vadd.f32 %v2839, 1.0
    %v2841 = vrcp.pop %v2840
    %v2842 = vmul.f32 1.0, %v2841
    %v2843 = vtanh.pop %v2829
    %v2844 = vxor.u32 %v2830, 2147483648
    %v2845 = vmul.f32 %v2844, 1.442695
    %v2846 = vpow.pop %v2845
    %v2847 = vadd.f32 %v2846, 1.0
    %v2848 = vrcp.pop %v2847
    %v2849 = vmul.f32 1.0, %v2848
    %v2850 = vmul.f32 %v2842, %v2623
    %v2851 = vmul.f32 %v2836, %v2843
    %v2852 = vadd.f32 %v2850, %v2851
    %v2853 = vtanh.pop %v2852
    %v2854 = vmul.f32 %v2849, %v2853
    %v2855 = vsel %vm2624, %v2854, %v2622
    %v2856 = vpack.c.bf16 %v2855, %v2855
    %v2857 = vld [vmem:[%s7] sm:$0xf]
    %v2858 = vld [vmem:[%s7 + $0x4] sm:$0xf]
    %v2859 = vld [vmem:[%s7 + $0x8] sm:$0xf]
    %v2860 = vld [vmem:[%s7 + $0xc] sm:$0xf]
    %v2861 = vld [vmem:[%s7 + $0x10] sm:$0xf]
    %v2862 = vld [vmem:[%s7 + $0x14] sm:$0xf]
    %v2863 = vld [vmem:[%s7 + $0x18] sm:$0xf]
    %v2864 = vld [vmem:[%s7 + $0x1c] sm:$0xf]
    %v2865 = vld [vmem:[%s7 + $0x20] sm:$0xf]
    %v2866 = vld [vmem:[%s7 + $0x24] sm:$0xf]
    %v2867 = vld [vmem:[%s7 + $0x28] sm:$0xf]
    %v2868 = vld [vmem:[%s7 + $0x2c] sm:$0xf]
    %v2869 = vld [vmem:[%s7 + $0x30] sm:$0xf]
    %v2870 = vld [vmem:[%s7 + $0x34] sm:$0xf]
    %v2871 = vld [vmem:[%s7 + $0x38] sm:$0xf]
    %v2872 = vld [vmem:[%s7 + $0x3c] sm:$0xf]
    %v2873 = vld [vmem:[%s8] sm:$0x1]
    %v2875 = vlaneseq
    %v2876 = vshrl.u32 %v2875, 7
    %v2877 = vsub.s32 0, %v2876
    %v2878 = vrot.slane %v2873, %v2877
    %v2896 = vunpack.c.l.b16 %v2857
    %v2897 = vunpack.c.l.b16 %v2858
    %v2898 = vunpack.c.l.b16 %v2859
    %v2899 = vunpack.c.l.b16 %v2860
    %v2900 = vunpack.c.l.b16 %v2861
    %v2901 = vunpack.c.l.b16 %v2862
    %v2902 = vunpack.c.l.b16 %v2863
    %v2903 = vunpack.c.l.b16 %v2864
    %v2904 = vunpack.c.l.b16 %v2865
    %v2905 = vunpack.c.l.b16 %v2866
    %v2906 = vunpack.c.l.b16 %v2867
    %v2907 = vunpack.c.l.b16 %v2868
    %v2908 = vunpack.c.l.b16 %v2869
    %v2909 = vunpack.c.l.b16 %v2870
    %v2910 = vunpack.c.l.b16 %v2871
    %v2911 = vunpack.c.l.b16 %v2872
    %v2912 = vpack.c.b16 %v2897, %v2896
    %v2913 = vpack.c.b16 %v2899, %v2898
    %v2914 = vpack.c.b16 %v2901, %v2900
    %v2915 = vpack.c.b16 %v2903, %v2902
    %v2916 = vpack.c.b16 %v2905, %v2904
    %v2917 = vpack.c.b16 %v2907, %v2906
    %v2918 = vpack.c.b16 %v2909, %v2908
    %v2919 = vpack.c.b16 %v2911, %v2910
    %2928 = vmatprep.subr.bf16.mxu0 0
    %2929 = vmatpush1.bf16.msra.mxu0 %v2912
    %2930 = vmatprep.subr.bf16.mxu0 0
    %2931 = vmatpush1.bf16.msra.mxu0 %v2913
    %2932 = vmatprep.subr.bf16.mxu0 0
    %2933 = vmatpush1.bf16.msra.mxu0 %v2914
    %2934 = vmatprep.subr.bf16.mxu0 0
    %2935 = vmatpush1.bf16.msra.mxu0 %v2915
    %2936 = vmatprep.subr.bf16.mxu0 0
    %2937 = vmatpush1.bf16.msra.mxu0 %v2916
    %2938 = vmatprep.subr.bf16.mxu0 0
    %2939 = vmatpush1.bf16.msra.mxu0 %v2917
    %2940 = vmatprep.subr.bf16.mxu0 0
    %2941 = vmatpush1.bf16.msra.mxu0 %v2918
    %2942 = vmatprep.subr.bf16.mxu0 0
    %2943 = vmatpush1.bf16.msra.mxu0 %v2919
    %2944 = vmatprep.subr.bf16.mxu0 0
    %2945 = vmatpush1.bf16.msra.mxu0 0
    %2946 = vmatprep.subr.bf16.mxu0 0
    %2947 = vmatpush1.bf16.msra.mxu0 0
    %2948 = vmatprep.subr.bf16.mxu0 0
    %2949 = vmatpush1.bf16.msra.mxu0 0
    %2950 = vmatprep.subr.bf16.mxu0 0
    %2951 = vmatpush1.bf16.msra.mxu0 0
    %2952 = vmatprep.subr.bf16.mxu0 0
    %2953 = vmatpush1.bf16.msra.mxu0 0
    %2954 = vmatprep.subr.bf16.mxu0 0
    %2955 = vmatpush1.bf16.msra.mxu0 0
    %2956 = vmatprep.subr.bf16.mxu0 0
    %2957 = vmatpush1.bf16.msra.mxu0 0
    %2958 = vmatprep.subr.bf16.mxu0 0
    %2959 = vmatpush1.bf16.msra.mxu0 0
    %2960 = vmatprep.mubr.bf16.mxu0 0
    %2961 = vmatmul.mubr.bf16.gmra.mrb[0].mxu0 %v2856
    %v2962 = vpop.f32.mrb[0].mxu0
    %v2963 = vadd.f32 %v2878, %v2962
    %v2964 = vpop.f32.mrb[0].mxu0
    %v2965 = vpop.f32.mrb[0].mxu0
    %v2966 = vpop.f32.mrb[0].mxu0
    %2967 = vdwg.mxu0
    %2968 = vst [vmem:[#allocation12] sm:$0xff] %v2963
    // Predicated region
    $region58: #{tpu_custom_call.1} parent=1 // pred_check
      _
    $region59: #{tpu_custom_call.1} parent=1 // pred_check_branch
      %2970 = sbr.rel (0) target = $region61
    $region60: #{tpu_custom_call.1} parent=1 // pred_region
      %s2972 = ssub.s32 128, 128
      %2973 = vsyncadd [#allocation5], %s2972
      %s2975 = sshll.u32 [#allocation12], 4
      %s2976 = int_to_ptr.vmem [resolvable:$true] %s2975
      %2978 = dma.vmem_to_hbm [thread:$0]  %s2976, 128, %s9, [#allocation5]
    $region61: #{tpu_custom_call.1} parent=1 // pred_fallthru
      _
    // Predicated region
    $region62: #{tpu_custom_call.1} parent=1 // pred_check
      _
    $region63: #{tpu_custom_call.1} parent=1 // pred_check_branch
      %2980 = sbr.rel (0) target = $region65
    $region64: #{tpu_custom_call.1} parent=1 // pred_region
      %2981 = dma.done [#allocation5], 128
    $region65: #{tpu_custom_call.1} parent=1 // pred_fallthru
      _
    %2982 = vsyncpa [#allocation4], 1
    %2983 = vsyncpa [#allocation7], 1
    %2984 = vsyncpa [#allocation10], 1
    %2985 = vsyncpa [#allocation5], 1

</llo_original>
